<compile_context>
chip_gen: v7x
topology: tpu7x:2x2x1
jax: 0.10.0
libtpu: 0.0.40
codegen_flags: <defaults>
</compile_context>

<pallas_src>
import functools
import math

import jax
import jax.numpy as jnp
from jax.experimental import pallas as pl
from jax.experimental.pallas import tpu as pltpu

# ----------------------------- model config ---------------------------------
D_MODEL = 32
NHEAD = 4
DIM_FF = 64
NUM_LAYERS = 2
LN_EPS = 1e-5

# Row layout of the packed bias/LayerNorm vector slab (per layer, 9 rows each):
#   [bq, bk, bv, bo, g1, beta1, b2, g2, beta2], then 2 trailing rows [gf, bf].
_VEC_ROWS_PER_LAYER = 9


def _layernorm(x, g, b, eps=LN_EPS):
    mu = jnp.mean(x, axis=-1, keepdims=True)
    var = jnp.mean(jnp.square(x - mu), axis=-1, keepdims=True)
    return (x - mu) * jax.lax.rsqrt(var + eps) * g + b


# --------------------------- fused Pallas kernel ------------------------------
def _encoder_stack_kernel(nhead, num_layers, seq_len, apply_final_norm,
                          x_ref, pos_ref, posv_ref,
                          w_attn_ref, w1_ref, w2_ref, vec_ref, b1_ref,
                          out_ref):
    x = x_ref[...]                        # (R, D): R = B*S (gridless) or S (per-batch grid)
    p = pos_ref[...]
    rows_total, d = x.shape
    batch = rows_total // seq_len
    hd = d // nhead

    for l in range(num_layers):           # static unroll (fine at L=2; see TODO for scale-up)
        base = l * _VEC_ROWS_PER_LAYER
        bq  = vec_ref[base + 0:base + 1, :]     # (1, D) rows of the packed vector slab
        bk  = vec_ref[base + 1:base + 2, :]
        bv  = vec_ref[base + 2:base + 3, :]
        bo  = vec_ref[base + 3:base + 4, :]
        g1  = vec_ref[base + 4:base + 5, :]
        be1 = vec_ref[base + 5:base + 6, :]
        b2  = vec_ref[base + 6:base + 7, :]
        g2  = vec_ref[base + 7:base + 8, :]
        be2 = vec_ref[base + 8:base + 9, :]

        w_attn = w_attn_ref[l]                  # (D, 4D) = [wq | wk | wv | wo]
        wqkv = w_attn[:, :3 * d]                # (D, 3D)
        wo = w_attn[:, 3 * d:]                  # (D, D)

        # --- fused Q/K/V projection: one MXU sequence instead of three ---
        qk_in = x + p
        qkv = jnp.dot(qk_in, wqkv, preferred_element_type=jnp.float32)   # (R, 3D)
        # wq/bq were pre-scaled by 1/sqrt(hd) at trace time -> no (S,S) scale mul.
        q = qkv[:, :d] + bq
        k = qkv[:, d:2 * d] + bk
        # value must come from x (not x+pos): subtract the precomputed pos @ wv.
        v = qkv[:, 2 * d:] + bv - posv_ref[l]

        # --- attention: never mixes batch rows -> static (batch, head) loops ---
        batch_ctx = []
        for b in range(batch):
            r = slice(b * seq_len, (b + 1) * seq_len)
            head_ctx = []
            for h in range(nhead):
                c = slice(h * hd, (h + 1) * hd)
                qh = q[r, c]                    # (S, hd)
                kh = k[r, c]
                vh = v[r, c]
                # q @ k^T contracting the last dims (no explicit transpose).
                s = jax.lax.dot_general(
                    qh, kh, (((1,), (1,)), ((), ())),
                    preferred_element_type=jnp.float32)      # (S, S)
                s = s - jnp.max(s, axis=-1, keepdims=True)
                e = jnp.exp(s)
                # exact EUP reciprocal: off the VALU critical path, tight numerics.
                a = e * pl.reciprocal(jnp.sum(e, axis=-1, keepdims=True))
                head_ctx.append(jnp.dot(a, vh, preferred_element_type=jnp.float32))
            # Assemble the (S, D) context in vregs (cheap lane concat, 4*hd lanes).
            batch_ctx.append(jnp.concatenate(head_ctx, axis=-1))
        ctx = batch_ctx[0] if batch == 1 else jnp.concatenate(batch_ctx, axis=0)

        attn = jnp.dot(ctx, wo, preferred_element_type=jnp.float32) + bo

        # --- residual + norm1 ---
        x1 = _layernorm(x + attn, g1, be1)

        # --- FFN ---
        h1 = jnp.maximum(
            jnp.dot(x1, w1_ref[l], preferred_element_type=jnp.float32) + b1_ref[l],
            0.0)
        ff = jnp.dot(h1, w2_ref[l], preferred_element_type=jnp.float32) + b2

        # --- residual + norm2 ---
        x = _layernorm(x1 + ff, g2, be2)

    if apply_final_norm:                  # static flag
        gf = vec_ref[num_layers * _VEC_ROWS_PER_LAYER:
                     num_layers * _VEC_ROWS_PER_LAYER + 1, :]
        bf = vec_ref[num_layers * _VEC_ROWS_PER_LAYER + 1:
                     num_layers * _VEC_ROWS_PER_LAYER + 2, :]
        x = _layernorm(x, gf, bf)
    out_ref[...] = x.astype(out_ref.dtype)


# ----------------------------- wrapper ---------------------------------------
def transformer_encoder_pallas(src_sbd, pos_sbd, layer_params, final_norm=None,
                               nhead=NHEAD, force_batch_grid=None):
    """src_sbd, pos_sbd: (S, B, D) like the PyTorch module.  Returns (S, B, D)."""
    S, B, D = src_sbd.shape
    L = len(layer_params)
    hd = D // nhead
    scale = 1.0 / math.sqrt(hd)

    # (S, B, D) -> (B, S, D) -> (B*S, D): one flat row-slab for the whole batch.
    x = jnp.transpose(src_sbd, (1, 0, 2)).reshape(B * S, D)
    pos = jnp.transpose(pos_sbd, (1, 0, 2)).reshape(B * S, D)

    stack = lambda name: jnp.stack([lp[name] for lp in layer_params], axis=0)

    # Fold 1/sqrt(hd) into the q projection; fuse [wq|wk|wv|wo] into one slab.
    wq, bq = stack("wq") * scale, stack("bq") * scale          # (L, D, D), (L, 1, D)
    wk, bk = stack("wk"), stack("bk")
    wv, bv = stack("wv"), stack("bv")
    wo, bo = stack("wo"), stack("bo")
    w_attn = jnp.concatenate([wq, wk, wv, wo], axis=-1)        # (L, D, 4D)
    # Precompute pos @ wv so the kernel can derive v from the fused (x+pos) qkv.
    posv = jnp.einsum("rd,lde->lre", pos, wv)                  # (L, B*S, D)

    w1 = stack("w1")                                           # (L, D, FF)
    b1 = stack("b1")                                           # (L, 1, FF)
    w2 = stack("w2")                                           # (L, FF, D)

    # Pack every D-wide bias / LayerNorm vector into one (L*9+2, D) slab.
    vec = jnp.concatenate([bq, bk, bv, bo, stack("g1"), stack("beta1"),
                           stack("b2"), stack("g2"), stack("beta2")], axis=1)
    vec = vec.reshape(L * _VEC_ROWS_PER_LAYER, D)
    apply_final = final_norm is not None
    if apply_final:
        gf, bf = final_norm
    else:  # placeholders; never read inside the kernel when apply_final is False
        gf = jnp.ones((1, D), x.dtype)
        bf = jnp.zeros((1, D), x.dtype)
    vec = jnp.concatenate([vec, gf.reshape(1, D), bf.reshape(1, D)], axis=0)

    kernel = functools.partial(_encoder_stack_kernel, nhead, L, S, apply_final)
    args = (x, pos, posv, w_attn, w1, w2, vec, b1)
    out_shape = jax.ShapeDtypeStruct((B * S, D), src_sbd.dtype)

    # v7x has 2 TensorCores: shard the batch across them via a parallel grid.
    # At toy sizes the ~0.35us/step grid tax outweighs the win, so gate on size.
    if force_batch_grid is None:
        use_grid = (B > 1) and (S >= 64)
    else:
        use_grid = force_batch_grid

    if not use_grid:
        # Gridless: whole activation/weight set (~tens of KB) staged once in VMEM.
        out = pl.pallas_call(kernel, out_shape=out_shape)(*args)
    else:
        full = lambda a: pl.BlockSpec(a.shape, lambda b: (0,) * a.ndim)
        out = pl.pallas_call(
            kernel,
            out_shape=out_shape,
            grid=(B,),
            in_specs=[
                pl.BlockSpec((S, D), lambda b: (b, 0)),          # x rows of batch b
                pl.BlockSpec((S, D), lambda b: (b, 0)),          # pos rows of batch b
                pl.BlockSpec((L, S, D), lambda b: (0, b, 0)),    # pos@wv rows of batch b
                full(w_attn), full(w1), full(w2), full(vec), full(b1),
            ],
            out_specs=pl.BlockSpec((S, D), lambda b: (b, 0)),
            compiler_params=pltpu.CompilerParams(
                dimension_semantics=("parallel",)),
        )(*args)

    return jnp.transpose(out.reshape(B, S, D), (1, 0, 2))       # back to (S, B, D)


# --------------------------- reference (pure JAX) -----------------------------
def ref_forward(src_sbd, pos_sbd, layer_params, final_norm, nhead):
    def ln(x, g, b):
        mu = x.mean(-1, keepdims=True)
        var = jnp.square(x - mu).mean(-1, keepdims=True)
        return (x - mu) / jnp.sqrt(var + LN_EPS) * g + b

    x = jnp.transpose(src_sbd, (1, 0, 2))
    pos = jnp.transpose(pos_sbd, (1, 0, 2))
    B, S, D = x.shape
    hd = D // nhead
    for lp in layer_params:
        qk_in = x + pos
        q = qk_in @ lp["wq"] + lp["bq"]
        k = qk_in @ lp["wk"] + lp["bk"]
        v = x @ lp["wv"] + lp["bv"]
        q = q.reshape(B, S, nhead, hd).transpose(0, 2, 1, 3)
        k = k.reshape(B, S, nhead, hd).transpose(0, 2, 1, 3)
        v = v.reshape(B, S, nhead, hd).transpose(0, 2, 1, 3)
        s = jnp.einsum("bhqd,bhkd->bhqk", q, k) / math.sqrt(hd)
        a = jax.nn.softmax(s, axis=-1)
        ctx = jnp.einsum("bhqk,bhkd->bhqd", a, v).transpose(0, 2, 1, 3).reshape(B, S, D)
        attn_out = ctx @ lp["wo"] + lp["bo"]
        x1 = ln(x + attn_out, lp["g1"], lp["beta1"])
        ff = jnp.maximum(x1 @ lp["w1"] + lp["b1"], 0.0) @ lp["w2"] + lp["b2"]
        x = ln(x1 + ff, lp["g2"], lp["beta2"])
    if final_norm is not None:
        x = ln(x, final_norm[0], final_norm[1])
    return jnp.transpose(x, (1, 0, 2))


# ------------------------------ param init ------------------------------------
def init_layer_params(key, d_model, dim_ff):
    ks = jax.random.split(key, 6)
    f32 = jnp.float32
    return {
        "wq": jax.random.normal(ks[0], (d_model, d_model), f32) * 0.05,
        "bq": jnp.zeros((1, d_model), f32),
        "wk": jax.random.normal(ks[1], (d_model, d_model), f32) * 0.05,
        "bk": jnp.zeros((1, d_model), f32),
        "wv": jax.random.normal(ks[2], (d_model, d_model), f32) * 0.05,
        "bv": jnp.zeros((1, d_model), f32),
        "wo": jax.random.normal(ks[3], (d_model, d_model), f32) * 0.05,
        "bo": jnp.zeros((1, d_model), f32),
        "g1": jnp.ones((1, d_model), f32),
        "beta1": jnp.zeros((1, d_model), f32),
        "w1": jax.random.normal(ks[4], (d_model, dim_ff), f32) * 0.05,
        "b1": jnp.zeros((1, dim_ff), f32),
        "w2": jax.random.normal(ks[5], (dim_ff, d_model), f32) * 0.05,
        "b2": jnp.zeros((1, d_model), f32),
        "g2": jnp.ones((1, d_model), f32),
        "beta2": jnp.zeros((1, d_model), f32),
    }


if __name__ == "__main__":
    S, B, D = 16, 2, D_MODEL
    key = jax.random.PRNGKey(0)
    k_src, k_pos, k_par = jax.random.split(key, 3)

    src = jax.random.normal(k_src, (S, B, D), jnp.float32)   # (seq, batch, d_model)
    pos = jax.random.normal(k_pos, (S, B, D), jnp.float32)

    layer_keys = jax.random.split(k_par, NUM_LAYERS)
    layer_params = [init_layer_params(k, D, DIM_FF) for k in layer_keys]
    final_norm = (jnp.ones((1, D), jnp.float32), jnp.zeros((1, D), jnp.float32))

    ref = ref_forward(src, pos, layer_params, final_norm, NHEAD)

    # Default (gridless, single TC) path.
    out = transformer_encoder_pallas(src, pos, layer_params, final_norm, NHEAD)
    out = jax.block_until_ready(out)
    assert out.shape == (S, B, D)
    assert jnp.allclose(out, ref, atol=1e-3, rtol=1e-3), "gridless mismatch vs. reference"

    # Batch-parallel grid path (the v7x two-TensorCore layout), forced here to
    # verify correctness even at the toy problem size.
    out_grid = transformer_encoder_pallas(src, pos, layer_params, final_norm, NHEAD,
                                          force_batch_grid=True)
    out_grid = jax.block_until_ready(out_grid)
    assert jnp.allclose(out_grid, ref, atol=1e-3, rtol=1e-3), "gridded mismatch vs. reference"

    print("KERNEL_OK")
</pallas_src>

<mosaic_0001>
module attributes {stable_mosaic.version = 11 : i64} {
  func.func @_encoder_stack_kernel(%arg0: memref<32x32xf32, #tpu.memory_space<vmem>>, %arg1: memref<32x32xf32, #tpu.memory_space<vmem>>, %arg2: memref<2x32x32xf32, #tpu.memory_space<vmem>>, %arg3: memref<2x32x128xf32, #tpu.memory_space<vmem>>, %arg4: memref<2x32x64xf32, #tpu.memory_space<vmem>>, %arg5: memref<2x64x32xf32, #tpu.memory_space<vmem>>, %arg6: memref<20x32xf32, #tpu.memory_space<vmem>>, %arg7: memref<2x1x64xf32, #tpu.memory_space<vmem>>, %arg8: memref<32x32xf32, #tpu.memory_space<vmem>>) attributes {dimension_semantics = [], scalar_prefetch = 0 : i64, scratch_operands = 0 : i64, tpu.core_type = #tpu.core_type<tc>} {
    %c0 = arith.constant 0 : index
    %c0_0 = arith.constant 0 : index
    %0 = vector.load %arg0[%c0, %c0_0] : memref<32x32xf32, #tpu.memory_space<vmem>>, vector<32x32xf32>
    %c0_1 = arith.constant 0 : index
    %c0_2 = arith.constant 0 : index
    %1 = vector.load %arg1[%c0_1, %c0_2] : memref<32x32xf32, #tpu.memory_space<vmem>>, vector<32x32xf32>
    %c0_3 = arith.constant 0 : index
    %c0_4 = arith.constant 0 : index
    %2 = vector.load %arg6[%c0_3, %c0_4] : memref<20x32xf32, #tpu.memory_space<vmem>>, vector<1x32xf32>
    %c1 = arith.constant 1 : index
    %c0_5 = arith.constant 0 : index
    %3 = vector.load %arg6[%c1, %c0_5] : memref<20x32xf32, #tpu.memory_space<vmem>>, vector<1x32xf32>
    %c2 = arith.constant 2 : index
    %c0_6 = arith.constant 0 : index
    %4 = vector.load %arg6[%c2, %c0_6] : memref<20x32xf32, #tpu.memory_space<vmem>>, vector<1x32xf32>
    %c3 = arith.constant 3 : index
    %c0_7 = arith.constant 0 : index
    %5 = vector.load %arg6[%c3, %c0_7] : memref<20x32xf32, #tpu.memory_space<vmem>>, vector<1x32xf32>
    %c4 = arith.constant 4 : index
    %c0_8 = arith.constant 0 : index
    %6 = vector.load %arg6[%c4, %c0_8] : memref<20x32xf32, #tpu.memory_space<vmem>>, vector<1x32xf32>
    %c5 = arith.constant 5 : index
    %c0_9 = arith.constant 0 : index
    %7 = vector.load %arg6[%c5, %c0_9] : memref<20x32xf32, #tpu.memory_space<vmem>>, vector<1x32xf32>
    %c6 = arith.constant 6 : index
    %c0_10 = arith.constant 0 : index
    %8 = vector.load %arg6[%c6, %c0_10] : memref<20x32xf32, #tpu.memory_space<vmem>>, vector<1x32xf32>
    %c7 = arith.constant 7 : index
    %c0_11 = arith.constant 0 : index
    %9 = vector.load %arg6[%c7, %c0_11] : memref<20x32xf32, #tpu.memory_space<vmem>>, vector<1x32xf32>
    %c8 = arith.constant 8 : index
    %c0_12 = arith.constant 0 : index
    %10 = vector.load %arg6[%c8, %c0_12] : memref<20x32xf32, #tpu.memory_space<vmem>>, vector<1x32xf32>
    %c0_13 = arith.constant 0 : index
    %c0_14 = arith.constant 0 : index
    %c0_15 = arith.constant 0 : index
    %11 = vector.load %arg3[%c0_13, %c0_14, %c0_15] : memref<2x32x128xf32, #tpu.memory_space<vmem>>, vector<1x32x128xf32>
    %12 = vector.shape_cast %11 : vector<1x32x128xf32> to vector<32x128xf32>
    %13 = vector.extract_strided_slice %12 {offsets = [0, 0], sizes = [32, 96], strides = [1, 1]} : vector<32x128xf32> to vector<32x96xf32>
    %14 = vector.extract_strided_slice %12 {offsets = [0, 96], sizes = [32, 32], strides = [1, 1]} : vector<32x128xf32> to vector<32x32xf32>
    %15 = arith.addf %0, %1 : vector<32x32xf32>
    %cst = arith.constant dense<0.000000e+00> : vector<32x96xf32>
    %16 = tpu.matmul %15, %13, %cst {dimension_numbers = #tpu.dot_dimension_numbers<[1], [0], [0], [1], [0, 0, 1, 1], [], []>} : vector<32x32xf32>, vector<32x96xf32>, vector<32x96xf32> -> vector<32x96xf32>
    %17 = vector.extract_strided_slice %16 {offsets = [0, 0], sizes = [32, 32], strides = [1, 1]} : vector<32x96xf32> to vector<32x32xf32>
    %18 = vector.broadcast %2 : vector<1x32xf32> to vector<32x32xf32>
    %19 = arith.addf %17, %18 : vector<32x32xf32>
    %20 = vector.extract_strided_slice %16 {offsets = [0, 32], sizes = [32, 32], strides = [1, 1]} : vector<32x96xf32> to vector<32x32xf32>
    %21 = vector.broadcast %3 : vector<1x32xf32> to vector<32x32xf32>
    %22 = arith.addf %20, %21 : vector<32x32xf32>
    %23 = vector.extract_strided_slice %16 {offsets = [0, 64], sizes = [32, 32], strides = [1, 1]} : vector<32x96xf32> to vector<32x32xf32>
    %24 = vector.broadcast %4 : vector<1x32xf32> to vector<32x32xf32>
    %25 = arith.addf %23, %24 : vector<32x32xf32>
    %c0_16 = arith.constant 0 : index
    %c0_17 = arith.constant 0 : index
    %c0_18 = arith.constant 0 : index
    %26 = vector.load %arg2[%c0_16, %c0_17, %c0_18] : memref<2x32x32xf32, #tpu.memory_space<vmem>>, vector<1x32x32xf32>
    %27 = vector.shape_cast %26 : vector<1x32x32xf32> to vector<32x32xf32>
    %28 = arith.subf %25, %27 : vector<32x32xf32>
    %29 = vector.extract_strided_slice %19 {offsets = [0, 0], sizes = [16, 8], strides = [1, 1]} : vector<32x32xf32> to vector<16x8xf32>
    %30 = vector.extract_strided_slice %22 {offsets = [0, 0], sizes = [16, 8], strides = [1, 1]} : vector<32x32xf32> to vector<16x8xf32>
    %31 = vector.extract_strided_slice %28 {offsets = [0, 0], sizes = [16, 8], strides = [1, 1]} : vector<32x32xf32> to vector<16x8xf32>
    %cst_19 = arith.constant dense<0.000000e+00> : vector<16x16xf32>
    %32 = tpu.matmul %29, %30, %cst_19 {dimension_numbers = #tpu.dot_dimension_numbers<[1], [1], [0], [0], [0, 0, 1, 0], [], []>} : vector<16x8xf32>, vector<16x8xf32>, vector<16x16xf32> -> vector<16x16xf32>
    %cst_20 = arith.constant dense<0xFF800000> : vector<16xf32>
    %33 = vector.multi_reduction <maximumf>, %32, %cst_20 [1] : vector<16x16xf32> to vector<16xf32>
    %34 = vector.shape_cast %33 : vector<16xf32> to vector<16x1xf32>
    %35 = vector.broadcast %34 : vector<16x1xf32> to vector<16x16xf32>
    %36 = arith.subf %32, %35 : vector<16x16xf32>
    %37 = math.exp %36 : vector<16x16xf32>
    %cst_21 = arith.constant dense<0.000000e+00> : vector<16xf32>
    %38 = vector.multi_reduction <add>, %37, %cst_21 [1] : vector<16x16xf32> to vector<16xf32>
    %39 = vector.shape_cast %38 : vector<16xf32> to vector<16x1xf32>
    %40 = tpu.reciprocal %39 : vector<16x1xf32> -> vector<16x1xf32>
    %41 = vector.broadcast %40 : vector<16x1xf32> to vector<16x16xf32>
    %42 = arith.mulf %37, %41 : vector<16x16xf32>
    %cst_22 = arith.constant dense<0.000000e+00> : vector<16x8xf32>
    %43 = tpu.matmul %42, %31, %cst_22 {dimension_numbers = #tpu.dot_dimension_numbers<[1], [0], [0], [1], [0, 0, 1, 1], [], []>} : vector<16x16xf32>, vector<16x8xf32>, vector<16x8xf32> -> vector<16x8xf32>
    %44 = vector.extract_strided_slice %19 {offsets = [0, 8], sizes = [16, 8], strides = [1, 1]} : vector<32x32xf32> to vector<16x8xf32>
    %45 = vector.extract_strided_slice %22 {offsets = [0, 8], sizes = [16, 8], strides = [1, 1]} : vector<32x32xf32> to vector<16x8xf32>
    %46 = vector.extract_strided_slice %28 {offsets = [0, 8], sizes = [16, 8], strides = [1, 1]} : vector<32x32xf32> to vector<16x8xf32>
    %cst_23 = arith.constant dense<0.000000e+00> : vector<16x16xf32>
    %47 = tpu.matmul %44, %45, %cst_23 {dimension_numbers = #tpu.dot_dimension_numbers<[1], [1], [0], [0], [0, 0, 1, 0], [], []>} : vector<16x8xf32>, vector<16x8xf32>, vector<16x16xf32> -> vector<16x16xf32>
    %cst_24 = arith.constant dense<0xFF800000> : vector<16xf32>
    %48 = vector.multi_reduction <maximumf>, %47, %cst_24 [1] : vector<16x16xf32> to vector<16xf32>
    %49 = vector.shape_cast %48 : vector<16xf32> to vector<16x1xf32>
    %50 = vector.broadcast %49 : vector<16x1xf32> to vector<16x16xf32>
    %51 = arith.subf %47, %50 : vector<16x16xf32>
    %52 = math.exp %51 : vector<16x16xf32>
    %cst_25 = arith.constant dense<0.000000e+00> : vector<16xf32>
    %53 = vector.multi_reduction <add>, %52, %cst_25 [1] : vector<16x16xf32> to vector<16xf32>
    %54 = vector.shape_cast %53 : vector<16xf32> to vector<16x1xf32>
    %55 = tpu.reciprocal %54 : vector<16x1xf32> -> vector<16x1xf32>
    %56 = vector.broadcast %55 : vector<16x1xf32> to vector<16x16xf32>
    %57 = arith.mulf %52, %56 : vector<16x16xf32>
    %cst_26 = arith.constant dense<0.000000e+00> : vector<16x8xf32>
    %58 = tpu.matmul %57, %46, %cst_26 {dimension_numbers = #tpu.dot_dimension_numbers<[1], [0], [0], [1], [0, 0, 1, 1], [], []>} : vector<16x16xf32>, vector<16x8xf32>, vector<16x8xf32> -> vector<16x8xf32>
    %59 = vector.extract_strided_slice %19 {offsets = [0, 16], sizes = [16, 8], strides = [1, 1]} : vector<32x32xf32> to vector<16x8xf32>
    %60 = vector.extract_strided_slice %22 {offsets = [0, 16], sizes = [16, 8], strides = [1, 1]} : vector<32x32xf32> to vector<16x8xf32>
    %61 = vector.extract_strided_slice %28 {offsets = [0, 16], sizes = [16, 8], strides = [1, 1]} : vector<32x32xf32> to vector<16x8xf32>
    %cst_27 = arith.constant dense<0.000000e+00> : vector<16x16xf32>
    %62 = tpu.matmul %59, %60, %cst_27 {dimension_numbers = #tpu.dot_dimension_numbers<[1], [1], [0], [0], [0, 0, 1, 0], [], []>} : vector<16x8xf32>, vector<16x8xf32>, vector<16x16xf32> -> vector<16x16xf32>
    %cst_28 = arith.constant dense<0xFF800000> : vector<16xf32>
    %63 = vector.multi_reduction <maximumf>, %62, %cst_28 [1] : vector<16x16xf32> to vector<16xf32>
    %64 = vector.shape_cast %63 : vector<16xf32> to vector<16x1xf32>
    %65 = vector.broadcast %64 : vector<16x1xf32> to vector<16x16xf32>
    %66 = arith.subf %62, %65 : vector<16x16xf32>
    %67 = math.exp %66 : vector<16x16xf32>
    %cst_29 = arith.constant dense<0.000000e+00> : vector<16xf32>
    %68 = vector.multi_reduction <add>, %67, %cst_29 [1] : vector<16x16xf32> to vector<16xf32>
    %69 = vector.shape_cast %68 : vector<16xf32> to vector<16x1xf32>
    %70 = tpu.reciprocal %69 : vector<16x1xf32> -> vector<16x1xf32>
    %71 = vector.broadcast %70 : vector<16x1xf32> to vector<16x16xf32>
    %72 = arith.mulf %67, %71 : vector<16x16xf32>
    %cst_30 = arith.constant dense<0.000000e+00> : vector<16x8xf32>
    %73 = tpu.matmul %72, %61, %cst_30 {dimension_numbers = #tpu.dot_dimension_numbers<[1], [0], [0], [1], [0, 0, 1, 1], [], []>} : vector<16x16xf32>, vector<16x8xf32>, vector<16x8xf32> -> vector<16x8xf32>
    %74 = vector.extract_strided_slice %19 {offsets = [0, 24], sizes = [16, 8], strides = [1, 1]} : vector<32x32xf32> to vector<16x8xf32>
    %75 = vector.extract_strided_slice %22 {offsets = [0, 24], sizes = [16, 8], strides = [1, 1]} : vector<32x32xf32> to vector<16x8xf32>
    %76 = vector.extract_strided_slice %28 {offsets = [0, 24], sizes = [16, 8], strides = [1, 1]} : vector<32x32xf32> to vector<16x8xf32>
    %cst_31 = arith.constant dense<0.000000e+00> : vector<16x16xf32>
    %77 = tpu.matmul %74, %75, %cst_31 {dimension_numbers = #tpu.dot_dimension_numbers<[1], [1], [0], [0], [0, 0, 1, 0], [], []>} : vector<16x8xf32>, vector<16x8xf32>, vector<16x16xf32> -> vector<16x16xf32>
    %cst_32 = arith.constant dense<0xFF800000> : vector<16xf32>
    %78 = vector.multi_reduction <maximumf>, %77, %cst_32 [1] : vector<16x16xf32> to vector<16xf32>
    %79 = vector.shape_cast %78 : vector<16xf32> to vector<16x1xf32>
    %80 = vector.broadcast %79 : vector<16x1xf32> to vector<16x16xf32>
    %81 = arith.subf %77, %80 : vector<16x16xf32>
    %82 = math.exp %81 : vector<16x16xf32>
    %cst_33 = arith.constant dense<0.000000e+00> : vector<16xf32>
    %83 = vector.multi_reduction <add>, %82, %cst_33 [1] : vector<16x16xf32> to vector<16xf32>
    %84 = vector.shape_cast %83 : vector<16xf32> to vector<16x1xf32>
    %85 = tpu.reciprocal %84 : vector<16x1xf32> -> vector<16x1xf32>
    %86 = vector.broadcast %85 : vector<16x1xf32> to vector<16x16xf32>
    %87 = arith.mulf %82, %86 : vector<16x16xf32>
    %cst_34 = arith.constant dense<0.000000e+00> : vector<16x8xf32>
    %88 = tpu.matmul %87, %76, %cst_34 {dimension_numbers = #tpu.dot_dimension_numbers<[1], [0], [0], [1], [0, 0, 1, 1], [], []>} : vector<16x16xf32>, vector<16x8xf32>, vector<16x8xf32> -> vector<16x8xf32>
    %89 = tpu.concatenate %43, %58, %73, %88 in 1 : vector<16x8xf32>, vector<16x8xf32>, vector<16x8xf32>, vector<16x8xf32> -> vector<16x32xf32>
    %90 = vector.extract_strided_slice %19 {offsets = [16, 0], sizes = [16, 8], strides = [1, 1]} : vector<32x32xf32> to vector<16x8xf32>
    %91 = vector.extract_strided_slice %22 {offsets = [16, 0], sizes = [16, 8], strides = [1, 1]} : vector<32x32xf32> to vector<16x8xf32>
    %92 = vector.extract_strided_slice %28 {offsets = [16, 0], sizes = [16, 8], strides = [1, 1]} : vector<32x32xf32> to vector<16x8xf32>
    %cst_35 = arith.constant dense<0.000000e+00> : vector<16x16xf32>
    %93 = tpu.matmul %90, %91, %cst_35 {dimension_numbers = #tpu.dot_dimension_numbers<[1], [1], [0], [0], [0, 0, 1, 0], [], []>} : vector<16x8xf32>, vector<16x8xf32>, vector<16x16xf32> -> vector<16x16xf32>
    %cst_36 = arith.constant dense<0xFF800000> : vector<16xf32>
    %94 = vector.multi_reduction <maximumf>, %93, %cst_36 [1] : vector<16x16xf32> to vector<16xf32>
    %95 = vector.shape_cast %94 : vector<16xf32> to vector<16x1xf32>
    %96 = vector.broadcast %95 : vector<16x1xf32> to vector<16x16xf32>
    %97 = arith.subf %93, %96 : vector<16x16xf32>
    %98 = math.exp %97 : vector<16x16xf32>
    %cst_37 = arith.constant dense<0.000000e+00> : vector<16xf32>
    %99 = vector.multi_reduction <add>, %98, %cst_37 [1] : vector<16x16xf32> to vector<16xf32>
    %100 = vector.shape_cast %99 : vector<16xf32> to vector<16x1xf32>
    %101 = tpu.reciprocal %100 : vector<16x1xf32> -> vector<16x1xf32>
    %102 = vector.broadcast %101 : vector<16x1xf32> to vector<16x16xf32>
    %103 = arith.mulf %98, %102 : vector<16x16xf32>
    %cst_38 = arith.constant dense<0.000000e+00> : vector<16x8xf32>
    %104 = tpu.matmul %103, %92, %cst_38 {dimension_numbers = #tpu.dot_dimension_numbers<[1], [0], [0], [1], [0, 0, 1, 1], [], []>} : vector<16x16xf32>, vector<16x8xf32>, vector<16x8xf32> -> vector<16x8xf32>
    %105 = vector.extract_strided_slice %19 {offsets = [16, 8], sizes = [16, 8], strides = [1, 1]} : vector<32x32xf32> to vector<16x8xf32>
    %106 = vector.extract_strided_slice %22 {offsets = [16, 8], sizes = [16, 8], strides = [1, 1]} : vector<32x32xf32> to vector<16x8xf32>
    %107 = vector.extract_strided_slice %28 {offsets = [16, 8], sizes = [16, 8], strides = [1, 1]} : vector<32x32xf32> to vector<16x8xf32>
    %cst_39 = arith.constant dense<0.000000e+00> : vector<16x16xf32>
    %108 = tpu.matmul %105, %106, %cst_39 {dimension_numbers = #tpu.dot_dimension_numbers<[1], [1], [0], [0], [0, 0, 1, 0], [], []>} : vector<16x8xf32>, vector<16x8xf32>, vector<16x16xf32> -> vector<16x16xf32>
    %cst_40 = arith.constant dense<0xFF800000> : vector<16xf32>
    %109 = vector.multi_reduction <maximumf>, %108, %cst_40 [1] : vector<16x16xf32> to vector<16xf32>
    %110 = vector.shape_cast %109 : vector<16xf32> to vector<16x1xf32>
    %111 = vector.broadcast %110 : vector<16x1xf32> to vector<16x16xf32>
    %112 = arith.subf %108, %111 : vector<16x16xf32>
    %113 = math.exp %112 : vector<16x16xf32>
    %cst_41 = arith.constant dense<0.000000e+00> : vector<16xf32>
    %114 = vector.multi_reduction <add>, %113, %cst_41 [1] : vector<16x16xf32> to vector<16xf32>
    %115 = vector.shape_cast %114 : vector<16xf32> to vector<16x1xf32>
    %116 = tpu.reciprocal %115 : vector<16x1xf32> -> vector<16x1xf32>
    %117 = vector.broadcast %116 : vector<16x1xf32> to vector<16x16xf32>
    %118 = arith.mulf %113, %117 : vector<16x16xf32>
    %cst_42 = arith.constant dense<0.000000e+00> : vector<16x8xf32>
    %119 = tpu.matmul %118, %107, %cst_42 {dimension_numbers = #tpu.dot_dimension_numbers<[1], [0], [0], [1], [0, 0, 1, 1], [], []>} : vector<16x16xf32>, vector<16x8xf32>, vector<16x8xf32> -> vector<16x8xf32>
    %120 = vector.extract_strided_slice %19 {offsets = [16, 16], sizes = [16, 8], strides = [1, 1]} : vector<32x32xf32> to vector<16x8xf32>
    %121 = vector.extract_strided_slice %22 {offsets = [16, 16], sizes = [16, 8], strides = [1, 1]} : vector<32x32xf32> to vector<16x8xf32>
    %122 = vector.extract_strided_slice %28 {offsets = [16, 16], sizes = [16, 8], strides = [1, 1]} : vector<32x32xf32> to vector<16x8xf32>
    %cst_43 = arith.constant dense<0.000000e+00> : vector<16x16xf32>
    %123 = tpu.matmul %120, %121, %cst_43 {dimension_numbers = #tpu.dot_dimension_numbers<[1], [1], [0], [0], [0, 0, 1, 0], [], []>} : vector<16x8xf32>, vector<16x8xf32>, vector<16x16xf32> -> vector<16x16xf32>
    %cst_44 = arith.constant dense<0xFF800000> : vector<16xf32>
    %124 = vector.multi_reduction <maximumf>, %123, %cst_44 [1] : vector<16x16xf32> to vector<16xf32>
    %125 = vector.shape_cast %124 : vector<16xf32> to vector<16x1xf32>
    %126 = vector.broadcast %125 : vector<16x1xf32> to vector<16x16xf32>
    %127 = arith.subf %123, %126 : vector<16x16xf32>
    %128 = math.exp %127 : vector<16x16xf32>
    %cst_45 = arith.constant dense<0.000000e+00> : vector<16xf32>
    %129 = vector.multi_reduction <add>, %128, %cst_45 [1] : vector<16x16xf32> to vector<16xf32>
    %130 = vector.shape_cast %129 : vector<16xf32> to vector<16x1xf32>
    %131 = tpu.reciprocal %130 : vector<16x1xf32> -> vector<16x1xf32>
    %132 = vector.broadcast %131 : vector<16x1xf32> to vector<16x16xf32>
    %133 = arith.mulf %128, %132 : vector<16x16xf32>
    %cst_46 = arith.constant dense<0.000000e+00> : vector<16x8xf32>
    %134 = tpu.matmul %133, %122, %cst_46 {dimension_numbers = #tpu.dot_dimension_numbers<[1], [0], [0], [1], [0, 0, 1, 1], [], []>} : vector<16x16xf32>, vector<16x8xf32>, vector<16x8xf32> -> vector<16x8xf32>
    %135 = vector.extract_strided_slice %19 {offsets = [16, 24], sizes = [16, 8], strides = [1, 1]} : vector<32x32xf32> to vector<16x8xf32>
    %136 = vector.extract_strided_slice %22 {offsets = [16, 24], sizes = [16, 8], strides = [1, 1]} : vector<32x32xf32> to vector<16x8xf32>
    %137 = vector.extract_strided_slice %28 {offsets = [16, 24], sizes = [16, 8], strides = [1, 1]} : vector<32x32xf32> to vector<16x8xf32>
    %cst_47 = arith.constant dense<0.000000e+00> : vector<16x16xf32>
    %138 = tpu.matmul %135, %136, %cst_47 {dimension_numbers = #tpu.dot_dimension_numbers<[1], [1], [0], [0], [0, 0, 1, 0], [], []>} : vector<16x8xf32>, vector<16x8xf32>, vector<16x16xf32> -> vector<16x16xf32>
    %cst_48 = arith.constant dense<0xFF800000> : vector<16xf32>
    %139 = vector.multi_reduction <maximumf>, %138, %cst_48 [1] : vector<16x16xf32> to vector<16xf32>
    %140 = vector.shape_cast %139 : vector<16xf32> to vector<16x1xf32>
    %141 = vector.broadcast %140 : vector<16x1xf32> to vector<16x16xf32>
    %142 = arith.subf %138, %141 : vector<16x16xf32>
    %143 = math.exp %142 : vector<16x16xf32>
    %cst_49 = arith.constant dense<0.000000e+00> : vector<16xf32>
    %144 = vector.multi_reduction <add>, %143, %cst_49 [1] : vector<16x16xf32> to vector<16xf32>
    %145 = vector.shape_cast %144 : vector<16xf32> to vector<16x1xf32>
    %146 = tpu.reciprocal %145 : vector<16x1xf32> -> vector<16x1xf32>
    %147 = vector.broadcast %146 : vector<16x1xf32> to vector<16x16xf32>
    %148 = arith.mulf %143, %147 : vector<16x16xf32>
    %cst_50 = arith.constant dense<0.000000e+00> : vector<16x8xf32>
    %149 = tpu.matmul %148, %137, %cst_50 {dimension_numbers = #tpu.dot_dimension_numbers<[1], [0], [0], [1], [0, 0, 1, 1], [], []>} : vector<16x16xf32>, vector<16x8xf32>, vector<16x8xf32> -> vector<16x8xf32>
    %150 = tpu.concatenate %104, %119, %134, %149 in 1 : vector<16x8xf32>, vector<16x8xf32>, vector<16x8xf32>, vector<16x8xf32> -> vector<16x32xf32>
    %151 = tpu.concatenate %89, %150 in 0 : vector<16x32xf32>, vector<16x32xf32> -> vector<32x32xf32>
    %cst_51 = arith.constant dense<0.000000e+00> : vector<32x32xf32>
    %152 = tpu.matmul %151, %14, %cst_51 {dimension_numbers = #tpu.dot_dimension_numbers<[1], [0], [0], [1], [0, 0, 1, 1], [], []>} : vector<32x32xf32>, vector<32x32xf32>, vector<32x32xf32> -> vector<32x32xf32>
    %153 = vector.broadcast %5 : vector<1x32xf32> to vector<32x32xf32>
    %154 = arith.addf %152, %153 : vector<32x32xf32>
    %155 = arith.addf %0, %154 : vector<32x32xf32>
    %cst_52 = arith.constant dense<0.000000e+00> : vector<32xf32>
    %156 = vector.multi_reduction <add>, %155, %cst_52 [1] : vector<32x32xf32> to vector<32xf32>
    %157 = vector.shape_cast %156 : vector<32xf32> to vector<32x1xf32>
    %cst_53 = arith.constant 3.200000e+01 : f32
    %158 = vector.broadcast %cst_53 : f32 to vector<32x1xf32>
    %159 = arith.divf %157, %158 : vector<32x1xf32>
    %160 = vector.broadcast %159 : vector<32x1xf32> to vector<32x32xf32>
    %161 = arith.subf %155, %160 : vector<32x32xf32>
    %162 = arith.mulf %161, %161 : vector<32x32xf32>
    %cst_54 = arith.constant dense<0.000000e+00> : vector<32xf32>
    %163 = vector.multi_reduction <add>, %162, %cst_54 [1] : vector<32x32xf32> to vector<32xf32>
    %164 = vector.shape_cast %163 : vector<32xf32> to vector<32x1xf32>
    %cst_55 = arith.constant 3.200000e+01 : f32
    %165 = vector.broadcast %cst_55 : f32 to vector<32x1xf32>
    %166 = arith.divf %164, %165 : vector<32x1xf32>
    %167 = vector.broadcast %159 : vector<32x1xf32> to vector<32x32xf32>
    %168 = arith.subf %155, %167 : vector<32x32xf32>
    %cst_56 = arith.constant 9.99999974E-6 : f32
    %169 = vector.broadcast %cst_56 : f32 to vector<32x1xf32>
    %170 = arith.addf %166, %169 : vector<32x1xf32>
    %171 = math.rsqrt %170 : vector<32x1xf32>
    %172 = vector.broadcast %171 : vector<32x1xf32> to vector<32x32xf32>
    %173 = arith.mulf %168, %172 : vector<32x32xf32>
    %174 = vector.broadcast %6 : vector<1x32xf32> to vector<32x32xf32>
    %175 = arith.mulf %173, %174 : vector<32x32xf32>
    %176 = vector.broadcast %7 : vector<1x32xf32> to vector<32x32xf32>
    %177 = arith.addf %175, %176 : vector<32x32xf32>
    %c0_57 = arith.constant 0 : index
    %c0_58 = arith.constant 0 : index
    %c0_59 = arith.constant 0 : index
    %178 = vector.load %arg4[%c0_57, %c0_58, %c0_59] : memref<2x32x64xf32, #tpu.memory_space<vmem>>, vector<1x32x64xf32>
    %179 = vector.shape_cast %178 : vector<1x32x64xf32> to vector<32x64xf32>
    %cst_60 = arith.constant dense<0.000000e+00> : vector<32x64xf32>
    %180 = tpu.matmul %177, %179, %cst_60 {dimension_numbers = #tpu.dot_dimension_numbers<[1], [0], [0], [1], [0, 0, 1, 1], [], []>} : vector<32x32xf32>, vector<32x64xf32>, vector<32x64xf32> -> vector<32x64xf32>
    %c0_61 = arith.constant 0 : index
    %c0_62 = arith.constant 0 : index
    %c0_63 = arith.constant 0 : index
    %181 = vector.load %arg7[%c0_61, %c0_62, %c0_63] : memref<2x1x64xf32, #tpu.memory_space<vmem>>, vector<1x1x64xf32>
    %182 = vector.shape_cast %181 : vector<1x1x64xf32> to vector<1x64xf32>
    %183 = vector.broadcast %182 : vector<1x64xf32> to vector<32x64xf32>
    %184 = arith.addf %180, %183 : vector<32x64xf32>
    %cst_64 = arith.constant 0.000000e+00 : f32
    %185 = vector.broadcast %cst_64 : f32 to vector<32x64xf32>
    %186 = arith.maximumf %184, %185 : vector<32x64xf32>
    %c0_65 = arith.constant 0 : index
    %c0_66 = arith.constant 0 : index
    %c0_67 = arith.constant 0 : index
    %187 = vector.load %arg5[%c0_65, %c0_66, %c0_67] : memref<2x64x32xf32, #tpu.memory_space<vmem>>, vector<1x64x32xf32>
    %188 = vector.shape_cast %187 : vector<1x64x32xf32> to vector<64x32xf32>
    %cst_68 = arith.constant dense<0.000000e+00> : vector<32x32xf32>
    %189 = tpu.matmul %186, %188, %cst_68 {dimension_numbers = #tpu.dot_dimension_numbers<[1], [0], [0], [1], [0, 0, 1, 1], [], []>} : vector<32x64xf32>, vector<64x32xf32>, vector<32x32xf32> -> vector<32x32xf32>
    %190 = vector.broadcast %8 : vector<1x32xf32> to vector<32x32xf32>
    %191 = arith.addf %189, %190 : vector<32x32xf32>
    %192 = arith.addf %177, %191 : vector<32x32xf32>
    %cst_69 = arith.constant dense<0.000000e+00> : vector<32xf32>
    %193 = vector.multi_reduction <add>, %192, %cst_69 [1] : vector<32x32xf32> to vector<32xf32>
    %194 = vector.shape_cast %193 : vector<32xf32> to vector<32x1xf32>
    %cst_70 = arith.constant 3.200000e+01 : f32
    %195 = vector.broadcast %cst_70 : f32 to vector<32x1xf32>
    %196 = arith.divf %194, %195 : vector<32x1xf32>
    %197 = vector.broadcast %196 : vector<32x1xf32> to vector<32x32xf32>
    %198 = arith.subf %192, %197 : vector<32x32xf32>
    %199 = arith.mulf %198, %198 : vector<32x32xf32>
    %cst_71 = arith.constant dense<0.000000e+00> : vector<32xf32>
    %200 = vector.multi_reduction <add>, %199, %cst_71 [1] : vector<32x32xf32> to vector<32xf32>
    %201 = vector.shape_cast %200 : vector<32xf32> to vector<32x1xf32>
    %cst_72 = arith.constant 3.200000e+01 : f32
    %202 = vector.broadcast %cst_72 : f32 to vector<32x1xf32>
    %203 = arith.divf %201, %202 : vector<32x1xf32>
    %204 = vector.broadcast %196 : vector<32x1xf32> to vector<32x32xf32>
    %205 = arith.subf %192, %204 : vector<32x32xf32>
    %cst_73 = arith.constant 9.99999974E-6 : f32
    %206 = vector.broadcast %cst_73 : f32 to vector<32x1xf32>
    %207 = arith.addf %203, %206 : vector<32x1xf32>
    %208 = math.rsqrt %207 : vector<32x1xf32>
    %209 = vector.broadcast %208 : vector<32x1xf32> to vector<32x32xf32>
    %210 = arith.mulf %205, %209 : vector<32x32xf32>
    %211 = vector.broadcast %9 : vector<1x32xf32> to vector<32x32xf32>
    %212 = arith.mulf %210, %211 : vector<32x32xf32>
    %213 = vector.broadcast %10 : vector<1x32xf32> to vector<32x32xf32>
    %214 = arith.addf %212, %213 : vector<32x32xf32>
    %c9 = arith.constant 9 : index
    %c0_74 = arith.constant 0 : index
    %215 = vector.load %arg6[%c9, %c0_74] : memref<20x32xf32, #tpu.memory_space<vmem>>, vector<1x32xf32>
    %c10 = arith.constant 10 : index
    %c0_75 = arith.constant 0 : index
    %216 = vector.load %arg6[%c10, %c0_75] : memref<20x32xf32, #tpu.memory_space<vmem>>, vector<1x32xf32>
    %c11 = arith.constant 11 : index
    %c0_76 = arith.constant 0 : index
    %217 = vector.load %arg6[%c11, %c0_76] : memref<20x32xf32, #tpu.memory_space<vmem>>, vector<1x32xf32>
    %c12 = arith.constant 12 : index
    %c0_77 = arith.constant 0 : index
    %218 = vector.load %arg6[%c12, %c0_77] : memref<20x32xf32, #tpu.memory_space<vmem>>, vector<1x32xf32>
    %c13 = arith.constant 13 : index
    %c0_78 = arith.constant 0 : index
    %219 = vector.load %arg6[%c13, %c0_78] : memref<20x32xf32, #tpu.memory_space<vmem>>, vector<1x32xf32>
    %c14 = arith.constant 14 : index
    %c0_79 = arith.constant 0 : index
    %220 = vector.load %arg6[%c14, %c0_79] : memref<20x32xf32, #tpu.memory_space<vmem>>, vector<1x32xf32>
    %c15 = arith.constant 15 : index
    %c0_80 = arith.constant 0 : index
    %221 = vector.load %arg6[%c15, %c0_80] : memref<20x32xf32, #tpu.memory_space<vmem>>, vector<1x32xf32>
    %c16 = arith.constant 16 : index
    %c0_81 = arith.constant 0 : index
    %222 = vector.load %arg6[%c16, %c0_81] : memref<20x32xf32, #tpu.memory_space<vmem>>, vector<1x32xf32>
    %c17 = arith.constant 17 : index
    %c0_82 = arith.constant 0 : index
    %223 = vector.load %arg6[%c17, %c0_82] : memref<20x32xf32, #tpu.memory_space<vmem>>, vector<1x32xf32>
    %c1_83 = arith.constant 1 : index
    %c0_84 = arith.constant 0 : index
    %c0_85 = arith.constant 0 : index
    %224 = vector.load %arg3[%c1_83, %c0_84, %c0_85] : memref<2x32x128xf32, #tpu.memory_space<vmem>>, vector<1x32x128xf32>
    %225 = vector.shape_cast %224 : vector<1x32x128xf32> to vector<32x128xf32>
    %226 = vector.extract_strided_slice %225 {offsets = [0, 0], sizes = [32, 96], strides = [1, 1]} : vector<32x128xf32> to vector<32x96xf32>
    %227 = vector.extract_strided_slice %225 {offsets = [0, 96], sizes = [32, 32], strides = [1, 1]} : vector<32x128xf32> to vector<32x32xf32>
    %228 = arith.addf %214, %1 : vector<32x32xf32>
    %cst_86 = arith.constant dense<0.000000e+00> : vector<32x96xf32>
    %229 = tpu.matmul %228, %226, %cst_86 {dimension_numbers = #tpu.dot_dimension_numbers<[1], [0], [0], [1], [0, 0, 1, 1], [], []>} : vector<32x32xf32>, vector<32x96xf32>, vector<32x96xf32> -> vector<32x96xf32>
    %230 = vector.extract_strided_slice %229 {offsets = [0, 0], sizes = [32, 32], strides = [1, 1]} : vector<32x96xf32> to vector<32x32xf32>
    %231 = vector.broadcast %215 : vector<1x32xf32> to vector<32x32xf32>
    %232 = arith.addf %230, %231 : vector<32x32xf32>
    %233 = vector.extract_strided_slice %229 {offsets = [0, 32], sizes = [32, 32], strides = [1, 1]} : vector<32x96xf32> to vector<32x32xf32>
    %234 = vector.broadcast %216 : vector<1x32xf32> to vector<32x32xf32>
    %235 = arith.addf %233, %234 : vector<32x32xf32>
    %236 = vector.extract_strided_slice %229 {offsets = [0, 64], sizes = [32, 32], strides = [1, 1]} : vector<32x96xf32> to vector<32x32xf32>
    %237 = vector.broadcast %217 : vector<1x32xf32> to vector<32x32xf32>
    %238 = arith.addf %236, %237 : vector<32x32xf32>
    %c1_87 = arith.constant 1 : index
    %c0_88 = arith.constant 0 : index
    %c0_89 = arith.constant 0 : index
    %239 = vector.load %arg2[%c1_87, %c0_88, %c0_89] : memref<2x32x32xf32, #tpu.memory_space<vmem>>, vector<1x32x32xf32>
    %240 = vector.shape_cast %239 : vector<1x32x32xf32> to vector<32x32xf32>
    %241 = arith.subf %238, %240 : vector<32x32xf32>
    %242 = vector.extract_strided_slice %232 {offsets = [0, 0], sizes = [16, 8], strides = [1, 1]} : vector<32x32xf32> to vector<16x8xf32>
    %243 = vector.extract_strided_slice %235 {offsets = [0, 0], sizes = [16, 8], strides = [1, 1]} : vector<32x32xf32> to vector<16x8xf32>
    %244 = vector.extract_strided_slice %241 {offsets = [0, 0], sizes = [16, 8], strides = [1, 1]} : vector<32x32xf32> to vector<16x8xf32>
    %cst_90 = arith.constant dense<0.000000e+00> : vector<16x16xf32>
    %245 = tpu.matmul %242, %243, %cst_90 {dimension_numbers = #tpu.dot_dimension_numbers<[1], [1], [0], [0], [0, 0, 1, 0], [], []>} : vector<16x8xf32>, vector<16x8xf32>, vector<16x16xf32> -> vector<16x16xf32>
    %cst_91 = arith.constant dense<0xFF800000> : vector<16xf32>
    %246 = vector.multi_reduction <maximumf>, %245, %cst_91 [1] : vector<16x16xf32> to vector<16xf32>
    %247 = vector.shape_cast %246 : vector<16xf32> to vector<16x1xf32>
    %248 = vector.broadcast %247 : vector<16x1xf32> to vector<16x16xf32>
    %249 = arith.subf %245, %248 : vector<16x16xf32>
    %250 = math.exp %249 : vector<16x16xf32>
    %cst_92 = arith.constant dense<0.000000e+00> : vector<16xf32>
    %251 = vector.multi_reduction <add>, %250, %cst_92 [1] : vector<16x16xf32> to vector<16xf32>
    %252 = vector.shape_cast %251 : vector<16xf32> to vector<16x1xf32>
    %253 = tpu.reciprocal %252 : vector<16x1xf32> -> vector<16x1xf32>
    %254 = vector.broadcast %253 : vector<16x1xf32> to vector<16x16xf32>
    %255 = arith.mulf %250, %254 : vector<16x16xf32>
    %cst_93 = arith.constant dense<0.000000e+00> : vector<16x8xf32>
    %256 = tpu.matmul %255, %244, %cst_93 {dimension_numbers = #tpu.dot_dimension_numbers<[1], [0], [0], [1], [0, 0, 1, 1], [], []>} : vector<16x16xf32>, vector<16x8xf32>, vector<16x8xf32> -> vector<16x8xf32>
    %257 = vector.extract_strided_slice %232 {offsets = [0, 8], sizes = [16, 8], strides = [1, 1]} : vector<32x32xf32> to vector<16x8xf32>
    %258 = vector.extract_strided_slice %235 {offsets = [0, 8], sizes = [16, 8], strides = [1, 1]} : vector<32x32xf32> to vector<16x8xf32>
    %259 = vector.extract_strided_slice %241 {offsets = [0, 8], sizes = [16, 8], strides = [1, 1]} : vector<32x32xf32> to vector<16x8xf32>
    %cst_94 = arith.constant dense<0.000000e+00> : vector<16x16xf32>
    %260 = tpu.matmul %257, %258, %cst_94 {dimension_numbers = #tpu.dot_dimension_numbers<[1], [1], [0], [0], [0, 0, 1, 0], [], []>} : vector<16x8xf32>, vector<16x8xf32>, vector<16x16xf32> -> vector<16x16xf32>
    %cst_95 = arith.constant dense<0xFF800000> : vector<16xf32>
    %261 = vector.multi_reduction <maximumf>, %260, %cst_95 [1] : vector<16x16xf32> to vector<16xf32>
    %262 = vector.shape_cast %261 : vector<16xf32> to vector<16x1xf32>
    %263 = vector.broadcast %262 : vector<16x1xf32> to vector<16x16xf32>
    %264 = arith.subf %260, %263 : vector<16x16xf32>
    %265 = math.exp %264 : vector<16x16xf32>
    %cst_96 = arith.constant dense<0.000000e+00> : vector<16xf32>
    %266 = vector.multi_reduction <add>, %265, %cst_96 [1] : vector<16x16xf32> to vector<16xf32>
    %267 = vector.shape_cast %266 : vector<16xf32> to vector<16x1xf32>
    %268 = tpu.reciprocal %267 : vector<16x1xf32> -> vector<16x1xf32>
    %269 = vector.broadcast %268 : vector<16x1xf32> to vector<16x16xf32>
    %270 = arith.mulf %265, %269 : vector<16x16xf32>
    %cst_97 = arith.constant dense<0.000000e+00> : vector<16x8xf32>
    %271 = tpu.matmul %270, %259, %cst_97 {dimension_numbers = #tpu.dot_dimension_numbers<[1], [0], [0], [1], [0, 0, 1, 1], [], []>} : vector<16x16xf32>, vector<16x8xf32>, vector<16x8xf32> -> vector<16x8xf32>
    %272 = vector.extract_strided_slice %232 {offsets = [0, 16], sizes = [16, 8], strides = [1, 1]} : vector<32x32xf32> to vector<16x8xf32>
    %273 = vector.extract_strided_slice %235 {offsets = [0, 16], sizes = [16, 8], strides = [1, 1]} : vector<32x32xf32> to vector<16x8xf32>
    %274 = vector.extract_strided_slice %241 {offsets = [0, 16], sizes = [16, 8], strides = [1, 1]} : vector<32x32xf32> to vector<16x8xf32>
    %cst_98 = arith.constant dense<0.000000e+00> : vector<16x16xf32>
    %275 = tpu.matmul %272, %273, %cst_98 {dimension_numbers = #tpu.dot_dimension_numbers<[1], [1], [0], [0], [0, 0, 1, 0], [], []>} : vector<16x8xf32>, vector<16x8xf32>, vector<16x16xf32> -> vector<16x16xf32>
    %cst_99 = arith.constant dense<0xFF800000> : vector<16xf32>
    %276 = vector.multi_reduction <maximumf>, %275, %cst_99 [1] : vector<16x16xf32> to vector<16xf32>
    %277 = vector.shape_cast %276 : vector<16xf32> to vector<16x1xf32>
    %278 = vector.broadcast %277 : vector<16x1xf32> to vector<16x16xf32>
    %279 = arith.subf %275, %278 : vector<16x16xf32>
    %280 = math.exp %279 : vector<16x16xf32>
    %cst_100 = arith.constant dense<0.000000e+00> : vector<16xf32>
    %281 = vector.multi_reduction <add>, %280, %cst_100 [1] : vector<16x16xf32> to vector<16xf32>
    %282 = vector.shape_cast %281 : vector<16xf32> to vector<16x1xf32>
    %283 = tpu.reciprocal %282 : vector<16x1xf32> -> vector<16x1xf32>
    %284 = vector.broadcast %283 : vector<16x1xf32> to vector<16x16xf32>
    %285 = arith.mulf %280, %284 : vector<16x16xf32>
    %cst_101 = arith.constant dense<0.000000e+00> : vector<16x8xf32>
    %286 = tpu.matmul %285, %274, %cst_101 {dimension_numbers = #tpu.dot_dimension_numbers<[1], [0], [0], [1], [0, 0, 1, 1], [], []>} : vector<16x16xf32>, vector<16x8xf32>, vector<16x8xf32> -> vector<16x8xf32>
    %287 = vector.extract_strided_slice %232 {offsets = [0, 24], sizes = [16, 8], strides = [1, 1]} : vector<32x32xf32> to vector<16x8xf32>
    %288 = vector.extract_strided_slice %235 {offsets = [0, 24], sizes = [16, 8], strides = [1, 1]} : vector<32x32xf32> to vector<16x8xf32>
    %289 = vector.extract_strided_slice %241 {offsets = [0, 24], sizes = [16, 8], strides = [1, 1]} : vector<32x32xf32> to vector<16x8xf32>
    %cst_102 = arith.constant dense<0.000000e+00> : vector<16x16xf32>
    %290 = tpu.matmul %287, %288, %cst_102 {dimension_numbers = #tpu.dot_dimension_numbers<[1], [1], [0], [0], [0, 0, 1, 0], [], []>} : vector<16x8xf32>, vector<16x8xf32>, vector<16x16xf32> -> vector<16x16xf32>
    %cst_103 = arith.constant dense<0xFF800000> : vector<16xf32>
    %291 = vector.multi_reduction <maximumf>, %290, %cst_103 [1] : vector<16x16xf32> to vector<16xf32>
    %292 = vector.shape_cast %291 : vector<16xf32> to vector<16x1xf32>
    %293 = vector.broadcast %292 : vector<16x1xf32> to vector<16x16xf32>
    %294 = arith.subf %290, %293 : vector<16x16xf32>
    %295 = math.exp %294 : vector<16x16xf32>
    %cst_104 = arith.constant dense<0.000000e+00> : vector<16xf32>
    %296 = vector.multi_reduction <add>, %295, %cst_104 [1] : vector<16x16xf32> to vector<16xf32>
    %297 = vector.shape_cast %296 : vector<16xf32> to vector<16x1xf32>
    %298 = tpu.reciprocal %297 : vector<16x1xf32> -> vector<16x1xf32>
    %299 = vector.broadcast %298 : vector<16x1xf32> to vector<16x16xf32>
    %300 = arith.mulf %295, %299 : vector<16x16xf32>
    %cst_105 = arith.constant dense<0.000000e+00> : vector<16x8xf32>
    %301 = tpu.matmul %300, %289, %cst_105 {dimension_numbers = #tpu.dot_dimension_numbers<[1], [0], [0], [1], [0, 0, 1, 1], [], []>} : vector<16x16xf32>, vector<16x8xf32>, vector<16x8xf32> -> vector<16x8xf32>
    %302 = tpu.concatenate %256, %271, %286, %301 in 1 : vector<16x8xf32>, vector<16x8xf32>, vector<16x8xf32>, vector<16x8xf32> -> vector<16x32xf32>
    %303 = vector.extract_strided_slice %232 {offsets = [16, 0], sizes = [16, 8], strides = [1, 1]} : vector<32x32xf32> to vector<16x8xf32>
    %304 = vector.extract_strided_slice %235 {offsets = [16, 0], sizes = [16, 8], strides = [1, 1]} : vector<32x32xf32> to vector<16x8xf32>
    %305 = vector.extract_strided_slice %241 {offsets = [16, 0], sizes = [16, 8], strides = [1, 1]} : vector<32x32xf32> to vector<16x8xf32>
    %cst_106 = arith.constant dense<0.000000e+00> : vector<16x16xf32>
    %306 = tpu.matmul %303, %304, %cst_106 {dimension_numbers = #tpu.dot_dimension_numbers<[1], [1], [0], [0], [0, 0, 1, 0], [], []>} : vector<16x8xf32>, vector<16x8xf32>, vector<16x16xf32> -> vector<16x16xf32>
    %cst_107 = arith.constant dense<0xFF800000> : vector<16xf32>
    %307 = vector.multi_reduction <maximumf>, %306, %cst_107 [1] : vector<16x16xf32> to vector<16xf32>
    %308 = vector.shape_cast %307 : vector<16xf32> to vector<16x1xf32>
    %309 = vector.broadcast %308 : vector<16x1xf32> to vector<16x16xf32>
    %310 = arith.subf %306, %309 : vector<16x16xf32>
    %311 = math.exp %310 : vector<16x16xf32>
    %cst_108 = arith.constant dense<0.000000e+00> : vector<16xf32>
    %312 = vector.multi_reduction <add>, %311, %cst_108 [1] : vector<16x16xf32> to vector<16xf32>
    %313 = vector.shape_cast %312 : vector<16xf32> to vector<16x1xf32>
    %314 = tpu.reciprocal %313 : vector<16x1xf32> -> vector<16x1xf32>
    %315 = vector.broadcast %314 : vector<16x1xf32> to vector<16x16xf32>
    %316 = arith.mulf %311, %315 : vector<16x16xf32>
    %cst_109 = arith.constant dense<0.000000e+00> : vector<16x8xf32>
    %317 = tpu.matmul %316, %305, %cst_109 {dimension_numbers = #tpu.dot_dimension_numbers<[1], [0], [0], [1], [0, 0, 1, 1], [], []>} : vector<16x16xf32>, vector<16x8xf32>, vector<16x8xf32> -> vector<16x8xf32>
    %318 = vector.extract_strided_slice %232 {offsets = [16, 8], sizes = [16, 8], strides = [1, 1]} : vector<32x32xf32> to vector<16x8xf32>
    %319 = vector.extract_strided_slice %235 {offsets = [16, 8], sizes = [16, 8], strides = [1, 1]} : vector<32x32xf32> to vector<16x8xf32>
    %320 = vector.extract_strided_slice %241 {offsets = [16, 8], sizes = [16, 8], strides = [1, 1]} : vector<32x32xf32> to vector<16x8xf32>
    %cst_110 = arith.constant dense<0.000000e+00> : vector<16x16xf32>
    %321 = tpu.matmul %318, %319, %cst_110 {dimension_numbers = #tpu.dot_dimension_numbers<[1], [1], [0], [0], [0, 0, 1, 0], [], []>} : vector<16x8xf32>, vector<16x8xf32>, vector<16x16xf32> -> vector<16x16xf32>
    %cst_111 = arith.constant dense<0xFF800000> : vector<16xf32>
    %322 = vector.multi_reduction <maximumf>, %321, %cst_111 [1] : vector<16x16xf32> to vector<16xf32>
    %323 = vector.shape_cast %322 : vector<16xf32> to vector<16x1xf32>
    %324 = vector.broadcast %323 : vector<16x1xf32> to vector<16x16xf32>
    %325 = arith.subf %321, %324 : vector<16x16xf32>
    %326 = math.exp %325 : vector<16x16xf32>
    %cst_112 = arith.constant dense<0.000000e+00> : vector<16xf32>
    %327 = vector.multi_reduction <add>, %326, %cst_112 [1] : vector<16x16xf32> to vector<16xf32>
    %328 = vector.shape_cast %327 : vector<16xf32> to vector<16x1xf32>
    %329 = tpu.reciprocal %328 : vector<16x1xf32> -> vector<16x1xf32>
    %330 = vector.broadcast %329 : vector<16x1xf32> to vector<16x16xf32>
    %331 = arith.mulf %326, %330 : vector<16x16xf32>
    %cst_113 = arith.constant dense<0.000000e+00> : vector<16x8xf32>
    %332 = tpu.matmul %331, %320, %cst_113 {dimension_numbers = #tpu.dot_dimension_numbers<[1], [0], [0], [1], [0, 0, 1, 1], [], []>} : vector<16x16xf32>, vector<16x8xf32>, vector<16x8xf32> -> vector<16x8xf32>
    %333 = vector.extract_strided_slice %232 {offsets = [16, 16], sizes = [16, 8], strides = [1, 1]} : vector<32x32xf32> to vector<16x8xf32>
    %334 = vector.extract_strided_slice %235 {offsets = [16, 16], sizes = [16, 8], strides = [1, 1]} : vector<32x32xf32> to vector<16x8xf32>
    %335 = vector.extract_strided_slice %241 {offsets = [16, 16], sizes = [16, 8], strides = [1, 1]} : vector<32x32xf32> to vector<16x8xf32>
    %cst_114 = arith.constant dense<0.000000e+00> : vector<16x16xf32>
    %336 = tpu.matmul %333, %334, %cst_114 {dimension_numbers = #tpu.dot_dimension_numbers<[1], [1], [0], [0], [0, 0, 1, 0], [], []>} : vector<16x8xf32>, vector<16x8xf32>, vector<16x16xf32> -> vector<16x16xf32>
    %cst_115 = arith.constant dense<0xFF800000> : vector<16xf32>
    %337 = vector.multi_reduction <maximumf>, %336, %cst_115 [1] : vector<16x16xf32> to vector<16xf32>
    %338 = vector.shape_cast %337 : vector<16xf32> to vector<16x1xf32>
    %339 = vector.broadcast %338 : vector<16x1xf32> to vector<16x16xf32>
    %340 = arith.subf %336, %339 : vector<16x16xf32>
    %341 = math.exp %340 : vector<16x16xf32>
    %cst_116 = arith.constant dense<0.000000e+00> : vector<16xf32>
    %342 = vector.multi_reduction <add>, %341, %cst_116 [1] : vector<16x16xf32> to vector<16xf32>
    %343 = vector.shape_cast %342 : vector<16xf32> to vector<16x1xf32>
    %344 = tpu.reciprocal %343 : vector<16x1xf32> -> vector<16x1xf32>
    %345 = vector.broadcast %344 : vector<16x1xf32> to vector<16x16xf32>
    %346 = arith.mulf %341, %345 : vector<16x16xf32>
    %cst_117 = arith.constant dense<0.000000e+00> : vector<16x8xf32>
    %347 = tpu.matmul %346, %335, %cst_117 {dimension_numbers = #tpu.dot_dimension_numbers<[1], [0], [0], [1], [0, 0, 1, 1], [], []>} : vector<16x16xf32>, vector<16x8xf32>, vector<16x8xf32> -> vector<16x8xf32>
    %348 = vector.extract_strided_slice %232 {offsets = [16, 24], sizes = [16, 8], strides = [1, 1]} : vector<32x32xf32> to vector<16x8xf32>
    %349 = vector.extract_strided_slice %235 {offsets = [16, 24], sizes = [16, 8], strides = [1, 1]} : vector<32x32xf32> to vector<16x8xf32>
    %350 = vector.extract_strided_slice %241 {offsets = [16, 24], sizes = [16, 8], strides = [1, 1]} : vector<32x32xf32> to vector<16x8xf32>
    %cst_118 = arith.constant dense<0.000000e+00> : vector<16x16xf32>
    %351 = tpu.matmul %348, %349, %cst_118 {dimension_numbers = #tpu.dot_dimension_numbers<[1], [1], [0], [0], [0, 0, 1, 0], [], []>} : vector<16x8xf32>, vector<16x8xf32>, vector<16x16xf32> -> vector<16x16xf32>
    %cst_119 = arith.constant dense<0xFF800000> : vector<16xf32>
    %352 = vector.multi_reduction <maximumf>, %351, %cst_119 [1] : vector<16x16xf32> to vector<16xf32>
    %353 = vector.shape_cast %352 : vector<16xf32> to vector<16x1xf32>
    %354 = vector.broadcast %353 : vector<16x1xf32> to vector<16x16xf32>
    %355 = arith.subf %351, %354 : vector<16x16xf32>
    %356 = math.exp %355 : vector<16x16xf32>
    %cst_120 = arith.constant dense<0.000000e+00> : vector<16xf32>
    %357 = vector.multi_reduction <add>, %356, %cst_120 [1] : vector<16x16xf32> to vector<16xf32>
    %358 = vector.shape_cast %357 : vector<16xf32> to vector<16x1xf32>
    %359 = tpu.reciprocal %358 : vector<16x1xf32> -> vector<16x1xf32>
    %360 = vector.broadcast %359 : vector<16x1xf32> to vector<16x16xf32>
    %361 = arith.mulf %356, %360 : vector<16x16xf32>
    %cst_121 = arith.constant dense<0.000000e+00> : vector<16x8xf32>
    %362 = tpu.matmul %361, %350, %cst_121 {dimension_numbers = #tpu.dot_dimension_numbers<[1], [0], [0], [1], [0, 0, 1, 1], [], []>} : vector<16x16xf32>, vector<16x8xf32>, vector<16x8xf32> -> vector<16x8xf32>
    %363 = tpu.concatenate %317, %332, %347, %362 in 1 : vector<16x8xf32>, vector<16x8xf32>, vector<16x8xf32>, vector<16x8xf32> -> vector<16x32xf32>
    %364 = tpu.concatenate %302, %363 in 0 : vector<16x32xf32>, vector<16x32xf32> -> vector<32x32xf32>
    %cst_122 = arith.constant dense<0.000000e+00> : vector<32x32xf32>
    %365 = tpu.matmul %364, %227, %cst_122 {dimension_numbers = #tpu.dot_dimension_numbers<[1], [0], [0], [1], [0, 0, 1, 1], [], []>} : vector<32x32xf32>, vector<32x32xf32>, vector<32x32xf32> -> vector<32x32xf32>
    %366 = vector.broadcast %218 : vector<1x32xf32> to vector<32x32xf32>
    %367 = arith.addf %365, %366 : vector<32x32xf32>
    %368 = arith.addf %214, %367 : vector<32x32xf32>
    %cst_123 = arith.constant dense<0.000000e+00> : vector<32xf32>
    %369 = vector.multi_reduction <add>, %368, %cst_123 [1] : vector<32x32xf32> to vector<32xf32>
    %370 = vector.shape_cast %369 : vector<32xf32> to vector<32x1xf32>
    %cst_124 = arith.constant 3.200000e+01 : f32
    %371 = vector.broadcast %cst_124 : f32 to vector<32x1xf32>
    %372 = arith.divf %370, %371 : vector<32x1xf32>
    %373 = vector.broadcast %372 : vector<32x1xf32> to vector<32x32xf32>
    %374 = arith.subf %368, %373 : vector<32x32xf32>
    %375 = arith.mulf %374, %374 : vector<32x32xf32>
    %cst_125 = arith.constant dense<0.000000e+00> : vector<32xf32>
    %376 = vector.multi_reduction <add>, %375, %cst_125 [1] : vector<32x32xf32> to vector<32xf32>
    %377 = vector.shape_cast %376 : vector<32xf32> to vector<32x1xf32>
    %cst_126 = arith.constant 3.200000e+01 : f32
    %378 = vector.broadcast %cst_126 : f32 to vector<32x1xf32>
    %379 = arith.divf %377, %378 : vector<32x1xf32>
    %380 = vector.broadcast %372 : vector<32x1xf32> to vector<32x32xf32>
    %381 = arith.subf %368, %380 : vector<32x32xf32>
    %cst_127 = arith.constant 9.99999974E-6 : f32
    %382 = vector.broadcast %cst_127 : f32 to vector<32x1xf32>
    %383 = arith.addf %379, %382 : vector<32x1xf32>
    %384 = math.rsqrt %383 : vector<32x1xf32>
    %385 = vector.broadcast %384 : vector<32x1xf32> to vector<32x32xf32>
    %386 = arith.mulf %381, %385 : vector<32x32xf32>
    %387 = vector.broadcast %219 : vector<1x32xf32> to vector<32x32xf32>
    %388 = arith.mulf %386, %387 : vector<32x32xf32>
    %389 = vector.broadcast %220 : vector<1x32xf32> to vector<32x32xf32>
    %390 = arith.addf %388, %389 : vector<32x32xf32>
    %c1_128 = arith.constant 1 : index
    %c0_129 = arith.constant 0 : index
    %c0_130 = arith.constant 0 : index
    %391 = vector.load %arg4[%c1_128, %c0_129, %c0_130] : memref<2x32x64xf32, #tpu.memory_space<vmem>>, vector<1x32x64xf32>
    %392 = vector.shape_cast %391 : vector<1x32x64xf32> to vector<32x64xf32>
    %cst_131 = arith.constant dense<0.000000e+00> : vector<32x64xf32>
    %393 = tpu.matmul %390, %392, %cst_131 {dimension_numbers = #tpu.dot_dimension_numbers<[1], [0], [0], [1], [0, 0, 1, 1], [], []>} : vector<32x32xf32>, vector<32x64xf32>, vector<32x64xf32> -> vector<32x64xf32>
    %c1_132 = arith.constant 1 : index
    %c0_133 = arith.constant 0 : index
    %c0_134 = arith.constant 0 : index
    %394 = vector.load %arg7[%c1_132, %c0_133, %c0_134] : memref<2x1x64xf32, #tpu.memory_space<vmem>>, vector<1x1x64xf32>
    %395 = vector.shape_cast %394 : vector<1x1x64xf32> to vector<1x64xf32>
    %396 = vector.broadcast %395 : vector<1x64xf32> to vector<32x64xf32>
    %397 = arith.addf %393, %396 : vector<32x64xf32>
    %cst_135 = arith.constant 0.000000e+00 : f32
    %398 = vector.broadcast %cst_135 : f32 to vector<32x64xf32>
    %399 = arith.maximumf %397, %398 : vector<32x64xf32>
    %c1_136 = arith.constant 1 : index
    %c0_137 = arith.constant 0 : index
    %c0_138 = arith.constant 0 : index
    %400 = vector.load %arg5[%c1_136, %c0_137, %c0_138] : memref<2x64x32xf32, #tpu.memory_space<vmem>>, vector<1x64x32xf32>
    %401 = vector.shape_cast %400 : vector<1x64x32xf32> to vector<64x32xf32>
    %cst_139 = arith.constant dense<0.000000e+00> : vector<32x32xf32>
    %402 = tpu.matmul %399, %401, %cst_139 {dimension_numbers = #tpu.dot_dimension_numbers<[1], [0], [0], [1], [0, 0, 1, 1], [], []>} : vector<32x64xf32>, vector<64x32xf32>, vector<32x32xf32> -> vector<32x32xf32>
    %403 = vector.broadcast %221 : vector<1x32xf32> to vector<32x32xf32>
    %404 = arith.addf %402, %403 : vector<32x32xf32>
    %405 = arith.addf %390, %404 : vector<32x32xf32>
    %cst_140 = arith.constant dense<0.000000e+00> : vector<32xf32>
    %406 = vector.multi_reduction <add>, %405, %cst_140 [1] : vector<32x32xf32> to vector<32xf32>
    %407 = vector.shape_cast %406 : vector<32xf32> to vector<32x1xf32>
    %cst_141 = arith.constant 3.200000e+01 : f32
    %408 = vector.broadcast %cst_141 : f32 to vector<32x1xf32>
    %409 = arith.divf %407, %408 : vector<32x1xf32>
    %410 = vector.broadcast %409 : vector<32x1xf32> to vector<32x32xf32>
    %411 = arith.subf %405, %410 : vector<32x32xf32>
    %412 = arith.mulf %411, %411 : vector<32x32xf32>
    %cst_142 = arith.constant dense<0.000000e+00> : vector<32xf32>
    %413 = vector.multi_reduction <add>, %412, %cst_142 [1] : vector<32x32xf32> to vector<32xf32>
    %414 = vector.shape_cast %413 : vector<32xf32> to vector<32x1xf32>
    %cst_143 = arith.constant 3.200000e+01 : f32
    %415 = vector.broadcast %cst_143 : f32 to vector<32x1xf32>
    %416 = arith.divf %414, %415 : vector<32x1xf32>
    %417 = vector.broadcast %409 : vector<32x1xf32> to vector<32x32xf32>
    %418 = arith.subf %405, %417 : vector<32x32xf32>
    %cst_144 = arith.constant 9.99999974E-6 : f32
    %419 = vector.broadcast %cst_144 : f32 to vector<32x1xf32>
    %420 = arith.addf %416, %419 : vector<32x1xf32>
    %421 = math.rsqrt %420 : vector<32x1xf32>
    %422 = vector.broadcast %421 : vector<32x1xf32> to vector<32x32xf32>
    %423 = arith.mulf %418, %422 : vector<32x32xf32>
    %424 = vector.broadcast %222 : vector<1x32xf32> to vector<32x32xf32>
    %425 = arith.mulf %423, %424 : vector<32x32xf32>
    %426 = vector.broadcast %223 : vector<1x32xf32> to vector<32x32xf32>
    %427 = arith.addf %425, %426 : vector<32x32xf32>
    %c18 = arith.constant 18 : index
    %c0_145 = arith.constant 0 : index
    %428 = vector.load %arg6[%c18, %c0_145] : memref<20x32xf32, #tpu.memory_space<vmem>>, vector<1x32xf32>
    %c19 = arith.constant 19 : index
    %c0_146 = arith.constant 0 : index
    %429 = vector.load %arg6[%c19, %c0_146] : memref<20x32xf32, #tpu.memory_space<vmem>>, vector<1x32xf32>
    %cst_147 = arith.constant dense<0.000000e+00> : vector<32xf32>
    %430 = vector.multi_reduction <add>, %427, %cst_147 [1] : vector<32x32xf32> to vector<32xf32>
    %431 = vector.shape_cast %430 : vector<32xf32> to vector<32x1xf32>
    %cst_148 = arith.constant 3.200000e+01 : f32
    %432 = vector.broadcast %cst_148 : f32 to vector<32x1xf32>
    %433 = arith.divf %431, %432 : vector<32x1xf32>
    %434 = vector.broadcast %433 : vector<32x1xf32> to vector<32x32xf32>
    %435 = arith.subf %427, %434 : vector<32x32xf32>
    %436 = arith.mulf %435, %435 : vector<32x32xf32>
    %cst_149 = arith.constant dense<0.000000e+00> : vector<32xf32>
    %437 = vector.multi_reduction <add>, %436, %cst_149 [1] : vector<32x32xf32> to vector<32xf32>
    %438 = vector.shape_cast %437 : vector<32xf32> to vector<32x1xf32>
    %cst_150 = arith.constant 3.200000e+01 : f32
    %439 = vector.broadcast %cst_150 : f32 to vector<32x1xf32>
    %440 = arith.divf %438, %439 : vector<32x1xf32>
    %441 = vector.broadcast %433 : vector<32x1xf32> to vector<32x32xf32>
    %442 = arith.subf %427, %441 : vector<32x32xf32>
    %cst_151 = arith.constant 9.99999974E-6 : f32
    %443 = vector.broadcast %cst_151 : f32 to vector<32x1xf32>
    %444 = arith.addf %440, %443 : vector<32x1xf32>
    %445 = math.rsqrt %444 : vector<32x1xf32>
    %446 = vector.broadcast %445 : vector<32x1xf32> to vector<32x32xf32>
    %447 = arith.mulf %442, %446 : vector<32x32xf32>
    %448 = vector.broadcast %428 : vector<1x32xf32> to vector<32x32xf32>
    %449 = arith.mulf %447, %448 : vector<32x32xf32>
    %450 = vector.broadcast %429 : vector<1x32xf32> to vector<32x32xf32>
    %451 = arith.addf %449, %450 : vector<32x32xf32>
    %c0_152 = arith.constant 0 : index
    %c0_153 = arith.constant 0 : index
    %452 = vector.load %arg8[%c0_152, %c0_153] : memref<32x32xf32, #tpu.memory_space<vmem>>, vector<32x32xf32>
    tpu.vector_store %arg8[%c0_152, %c0_153], %451 {strides = array<i32>} : memref<32x32xf32, #tpu.memory_space<vmem>>, vector<32x32xf32>,
    return
  }
}

</mosaic_0001>

<llo_original>
// kernel: tpu_custom_call.1
$region0: #{tpu_custom_call.1}
  #allocation0 [shape = 'u32[]', space=smem, size = 0x4, offset = 0x4, fixed_abs, tag = 'smem constant byte address 0x4 - core index']
  #allocation1 [shape = 'u32[144,128]{1,0:T(1,128)}', space=vmem, size = 0x12000, scoped, tag = 'internal scratch']
  %s0 = inlined_call_operand.hbm [shape: f32[32,32], index: 0, kind: input, shape index: {}]
  %s1 = inlined_call_operand.hbm [shape: f32[32,32], index: 1, kind: input, shape index: {}]
  %s2 = inlined_call_operand.vmem [shape: f32[2,32,32], index: 2, kind: input, shape index: {}]
  %s3 = inlined_call_operand.vmem [shape: f32[2,32,128], index: 3, kind: input, shape index: {}]
  %s4 = inlined_call_operand.vmem [shape: f32[2,32,64], index: 4, kind: input, shape index: {}]
  %s5 = inlined_call_operand.vmem [shape: f32[2,64,32], index: 5, kind: input, shape index: {}]
  %s6 = inlined_call_operand.hbm [shape: f32[20,32], index: 6, kind: input, shape index: {}]
  %s7 = inlined_call_operand.vmem [shape: f32[2,1,64], index: 7, kind: input, shape index: {}]
  %s8 = inlined_call_operand.hbm [shape: f32[32,32], index: 8, kind: output, shape index: {}]
  %s9 = sld [smem:[#allocation0]]
  $region54: #{tpu_custom_call.1} parent=0
    _
  %s11 = ssub.s32 1, %s9
  %s12 = scalar_select 0, %s11, %s9
  $region1: #{tpu_custom_call.1} parent=0
    #allocation2 [shape = 'u8[16384]{0}', space=vmem, size = 0x4000, scoped, tag = 'input window, operand 0, single buffered']
    #allocation3 [shape = 's32[1]{0}', space=sflag, size = 0x4, scoped, tag = 'scoped memory for tpu_custom_call.1']
    #allocation4 [shape = 's32[1]{0}', space=sflag, size = 0x4, scoped, tag = 'scoped memory for tpu_custom_call.1']
    #allocation5 [shape = 'u8[16384]{0}', space=vmem, size = 0x4000, scoped, tag = 'input window, operand 1, single buffered']
    #allocation6 [shape = 's32[1]{0}', space=sflag, size = 0x4, scoped, tag = 'scoped memory for tpu_custom_call.1']
    #allocation7 [shape = 'u8[12288]{0}', space=vmem, size = 0x3000, scoped, tag = 'input window, operand 6, single buffered']
    #allocation8 [shape = 'u8[16384]{0}', space=vmem, size = 0x4000, scoped, tag = 'output window, operand 0, single buffered']
    %13 = vsyncpa [#allocation3], 0
    %14 = vsyncpa [#allocation6], 0
    %15 = vsyncpa [#allocation4], 0
    // Predicated region
    $region2: #{tpu_custom_call.1} parent=1 // pred_check
      _
    $region3: #{tpu_custom_call.1} parent=1 // pred_check_branch
      %17 = sbr.rel (0) target = $region5
    $region4: #{tpu_custom_call.1} parent=1 // pred_region
      %s19 = ssub.s32 512, 512
      %20 = vsyncadd [#allocation3], %s19
      %s21 = sshll.u32 [#allocation2], 4
      %s22 = int_to_ptr.vmem [resolvable:$true] %s21
      %27 = dma.hbm_to_vmem [thread:$0]  %s0, 512, %s22, [#allocation3], 128, 128, 8
    $region5: #{tpu_custom_call.1} parent=1 // pred_fallthru
      _
    // Predicated region
    $region6: #{tpu_custom_call.1} parent=1 // pred_check
      _
    $region7: #{tpu_custom_call.1} parent=1 // pred_check_branch
      %29 = sbr.rel (0) target = $region9
    $region8: #{tpu_custom_call.1} parent=1 // pred_region
      %s31 = ssub.s32 512, 512
      %32 = vsyncadd [#allocation6], %s31
      %s33 = sshll.u32 [#allocation5], 4
      %s34 = int_to_ptr.vmem [resolvable:$true] %s33
      %39 = dma.hbm_to_vmem [thread:$0]  %s1, 512, %s34, [#allocation6], 128, 128, 8
    $region9: #{tpu_custom_call.1} parent=1 // pred_fallthru
      _
    // Predicated region
    $region10: #{tpu_custom_call.1} parent=1 // pred_check
      _
    $region11: #{tpu_custom_call.1} parent=1 // pred_check_branch
      %41 = sbr.rel (0) target = $region13
    $region12: #{tpu_custom_call.1} parent=1 // pred_region
      _
    $region13: #{tpu_custom_call.1} parent=1 // pred_fallthru
      _
    // Predicated region
    $region14: #{tpu_custom_call.1} parent=1 // pred_check
      _
    $region15: #{tpu_custom_call.1} parent=1 // pred_check_branch
      %43 = sbr.rel (0) target = $region17
    $region16: #{tpu_custom_call.1} parent=1 // pred_region
      _
    $region17: #{tpu_custom_call.1} parent=1 // pred_fallthru
      _
    // Predicated region
    $region18: #{tpu_custom_call.1} parent=1 // pred_check
      _
    $region19: #{tpu_custom_call.1} parent=1 // pred_check_branch
      %45 = sbr.rel (0) target = $region21
    $region20: #{tpu_custom_call.1} parent=1 // pred_region
      _
    $region21: #{tpu_custom_call.1} parent=1 // pred_fallthru
      _
    // Predicated region
    $region22: #{tpu_custom_call.1} parent=1 // pred_check
      _
    $region23: #{tpu_custom_call.1} parent=1 // pred_check_branch
      %47 = sbr.rel (0) target = $region25
    $region24: #{tpu_custom_call.1} parent=1 // pred_region
      _
    $region25: #{tpu_custom_call.1} parent=1 // pred_fallthru
      _
    // Predicated region
    $region26: #{tpu_custom_call.1} parent=1 // pred_check
      _
    $region27: #{tpu_custom_call.1} parent=1 // pred_check_branch
      %49 = sbr.rel (0) target = $region29
    $region28: #{tpu_custom_call.1} parent=1 // pred_region
      %s51 = ssub.s32 384, 384
      %52 = vsyncadd [#allocation6], %s51
      %s53 = sshll.u32 [#allocation7], 4
      %s54 = int_to_ptr.vmem [resolvable:$true] %s53
      %59 = dma.hbm_to_vmem [thread:$0]  %s6, 384, %s54, [#allocation6], 128, 128, 8
    $region29: #{tpu_custom_call.1} parent=1 // pred_fallthru
      _
    // Predicated region
    $region30: #{tpu_custom_call.1} parent=1 // pred_check
      _
    $region31: #{tpu_custom_call.1} parent=1 // pred_check_branch
      %61 = sbr.rel (0) target = $region33
    $region32: #{tpu_custom_call.1} parent=1 // pred_region
      _
    $region33: #{tpu_custom_call.1} parent=1 // pred_fallthru
      _
    // Predicated region
    $region34: #{tpu_custom_call.1} parent=1 // pred_check
      _
    $region35: #{tpu_custom_call.1} parent=1 // pred_check_branch
      %63 = sbr.rel (0) target = $region37
    $region36: #{tpu_custom_call.1} parent=1 // pred_region
      %64 = dma.done [#allocation3], 512
    $region37: #{tpu_custom_call.1} parent=1 // pred_fallthru
      _
    // Predicated region
    $region38: #{tpu_custom_call.1} parent=1 // pred_check
      _
    $region39: #{tpu_custom_call.1} parent=1 // pred_check_branch
      %66 = sbr.rel (0) target = $region41
    $region40: #{tpu_custom_call.1} parent=1 // pred_region
      %67 = dma.done [#allocation6], 512
    $region41: #{tpu_custom_call.1} parent=1 // pred_fallthru
      _
    // Predicated region
    $region42: #{tpu_custom_call.1} parent=1 // pred_check
      _
    $region43: #{tpu_custom_call.1} parent=1 // pred_check_branch
      %69 = sbr.rel (0) target = $region45
    $region44: #{tpu_custom_call.1} parent=1 // pred_region
      %70 = dma.done [#allocation6], 384
    $region45: #{tpu_custom_call.1} parent=1 // pred_fallthru
      _
    %v71 = vld [vmem:[#allocation2] sm:$0xff]
    %v72 = vld [vmem:[#allocation2 + $0x8] sm:$0xff]
    %v73 = vld [vmem:[#allocation2 + $0x10] sm:$0xff]
    %v74 = vld [vmem:[#allocation2 + $0x18] sm:$0xff]
    %v75 = vld [vmem:[#allocation5] sm:$0xff]
    %v76 = vld [vmem:[#allocation5 + $0x8] sm:$0xff]
    %v77 = vld [vmem:[#allocation5 + $0x10] sm:$0xff]
    %v78 = vld [vmem:[#allocation5 + $0x18] sm:$0xff]
    %v79 = vld [vmem:[#allocation7] sm:$0x1]
    %v80 = vld [vmem:[#allocation7 + $0x1] sm:$0x1]
    %v81 = vld [vmem:[#allocation7 + $0x2] sm:$0x1]
    %v82 = vld [vmem:[#allocation7 + $0x3] sm:$0x1]
    %v83 = vld [vmem:[#allocation7 + $0x4] sm:$0x1]
    %v84 = vld [vmem:[#allocation7 + $0x5] sm:$0x1]
    %v85 = vld [vmem:[#allocation7 + $0x6] sm:$0x1]
    %v86 = vld [vmem:[#allocation7 + $0x7] sm:$0x1]
    %v87 = vld [vmem:[#allocation7 + $0x8] sm:$0x1]
    %v88 = vld [vmem:[%s3] sm:$0xff]
    %v89 = vld [vmem:[%s3 + $0x8] sm:$0xff]
    %v90 = vld [vmem:[%s3 + $0x10] sm:$0xff]
    %v91 = vld [vmem:[%s3 + $0x18] sm:$0xff]
    %v92 = vadd.f32 %v71, %v75
    %v93 = vadd.f32 %v72, %v76
    %v94 = vadd.f32 %v73, %v77
    %v95 = vadd.f32 %v74, %v78
    %vm96 = vcmask 261120
    %v98 = vsel %vm96, %v92, 0
    %v101 = vsel %vm96, %v93, 0
    %v104 = vsel %vm96, %v94, 0
    %v107 = vsel %vm96, %v95, 0
    %109 = vmatprep.subr.mxu0 0.0
    %110 = vmatpush1.msra.mxu0 %v88
    %111 = vmatprep.subr.mxu0 0.0
    %112 = vmatpush1.msra.mxu0 %v89
    %113 = vmatprep.subr.mxu0 0.0
    %114 = vmatpush1.msra.mxu0 %v90
    %115 = vmatprep.subr.mxu0 0.0
    %116 = vmatpush1.msra.mxu0 %v91
    %117 = vmatprep.subr.mxu0 0.0
    %118 = vmatpush1.msra.mxu0 0.0
    %119 = vmatprep.subr.mxu0 0.0
    %120 = vmatpush1.msra.mxu0 0.0
    %121 = vmatprep.subr.mxu0 0.0
    %122 = vmatpush1.msra.mxu0 0.0
    %123 = vmatprep.subr.mxu0 0.0
    %124 = vmatpush1.msra.mxu0 0.0
    %125 = vmatprep.subr.mxu0 0.0
    %126 = vmatpush1.msra.mxu0 0.0
    %127 = vmatprep.subr.mxu0 0.0
    %128 = vmatpush1.msra.mxu0 0.0
    %129 = vmatprep.subr.mxu0 0.0
    %130 = vmatpush1.msra.mxu0 0.0
    %131 = vmatprep.subr.mxu0 0.0
    %132 = vmatpush1.msra.mxu0 0.0
    %133 = vmatprep.subr.mxu0 0.0
    %134 = vmatpush1.msra.mxu0 0.0
    %135 = vmatprep.subr.mxu0 0.0
    %136 = vmatpush1.msra.mxu0 0.0
    %137 = vmatprep.subr.mxu0 0.0
    %138 = vmatpush1.msra.mxu0 0.0
    %139 = vmatprep.subr.mxu0 0.0
    %140 = vmatpush1.msra.mxu0 0.0
    %141 = vmatprep.subr.mxu0 0.0
    %142 = vmatpush1.msra.mxu0 0.0
    %143 = vmatprep.subr.mxu0 0.0
    %144 = vmatpush1.msra.mxu0 0.0
    %145 = vmatprep.subr.mxu0 0.0
    %146 = vmatpush1.msra.mxu0 0.0
    %147 = vmatprep.subr.mxu0 0.0
    %148 = vmatpush1.msra.mxu0 0.0
    %149 = vmatprep.subr.mxu0 0.0
    %150 = vmatpush1.msra.mxu0 0.0
    %151 = vmatprep.subr.mxu0 0.0
    %152 = vmatpush1.msra.mxu0 0.0
    %153 = vmatprep.subr.mxu0 0.0
    %154 = vmatpush1.msra.mxu0 0.0
    %155 = vmatprep.subr.mxu0 0.0
    %156 = vmatpush1.msra.mxu0 0.0
    %157 = vmatprep.subr.mxu0 0.0
    %158 = vmatpush1.msra.mxu0 0.0
    %159 = vmatprep.subr.mxu0 0.0
    %160 = vmatpush1.msra.mxu0 0.0
    %161 = vmatprep.subr.mxu0 0.0
    %162 = vmatpush1.msra.mxu0 0.0
    %163 = vmatprep.subr.mxu0 0.0
    %164 = vmatpush1.msra.mxu0 0.0
    %165 = vmatprep.subr.mxu0 0.0
    %166 = vmatpush1.msra.mxu0 0.0
    %167 = vmatprep.subr.mxu0 0.0
    %168 = vmatpush1.msra.mxu0 0.0
    %169 = vmatprep.subr.mxu0 0.0
    %170 = vmatpush1.msra.mxu0 0.0
    %171 = vmatprep.subr.mxu0 0.0
    %172 = vmatpush1.msra.mxu0 0.0
    %173 = vmatprep.mubr.f32.mxu0 0.0
    %174 = vmatmul.mubr.f32.gmra.mrb[0].mxu0 %v98
    %v175 = vpop.f32.mrb[0].mxu0
    %v176 = vadd.f32 0.0, %v175
    %v177 = vpop.f32.mrb[0].mxu0
    %178 = vmatprep.mubr.f32.mxu0 0.0
    %179 = vmatmul.mubr.f32.gmra.mrb[0].mxu0 %v101
    %v180 = vpop.f32.mrb[0].mxu0
    %v181 = vadd.f32 0.0, %v180
    %v182 = vpop.f32.mrb[0].mxu0
    %183 = vmatprep.mubr.f32.mxu0 0.0
    %184 = vmatmul.mubr.f32.gmra.mrb[0].mxu0 %v104
    %v185 = vpop.f32.mrb[0].mxu0
    %v186 = vadd.f32 0.0, %v185
    %v187 = vpop.f32.mrb[0].mxu0
    %188 = vmatprep.mubr.f32.mxu0 0.0
    %189 = vmatmul.mubr.f32.gmra.mrb[0].mxu0 %v107
    %v190 = vpop.f32.mrb[0].mxu0
    %v191 = vadd.f32 0.0, %v190
    %v192 = vpop.f32.mrb[0].mxu0
    %193 = vdwg.mxu0
    %v194 = vlaneseq
    %v195 = vshrl.u32 %v194, 7
    %v196 = vsub.s32 0, %v195
    %v197 = vrot.slane %v79, %v196
    %v198 = vadd.f32 %v176, %v197
    %v199 = vadd.f32 %v181, %v197
    %v200 = vadd.f32 %v186, %v197
    %v201 = vadd.f32 %v191, %v197
    %v202 = vlaneseq
    %v203 = vshrl.u32 %v202, 7
    %v204 = vsub.s32 0, %v203
    %v205 = vrot.slane %v80, %v204
    %207 = vrot.lane.b32.xlu0 %v205, 32
    %v208 = vpop.permute.xlu0 %207
    %v210 = vadd.f32 %v176, %v208
    %v211 = vadd.f32 %v181, %v208
    %v212 = vadd.f32 %v186, %v208
    %v213 = vadd.f32 %v191, %v208
    %v214 = vlaneseq
    %v215 = vshrl.u32 %v214, 7
    %v216 = vsub.s32 0, %v215
    %v217 = vrot.slane %v81, %v216
    %219 = vrot.lane.b32.xlu0 %v217, 64
    %v220 = vpop.permute.xlu0 %219
    %v222 = vadd.f32 %v176, %v220
    %v223 = vadd.f32 %v181, %v220
    %v224 = vadd.f32 %v186, %v220
    %v225 = vadd.f32 %v191, %v220
    %v226 = vld [vmem:[%s2] sm:$0xff]
    %v227 = vld [vmem:[%s2 + $0x8] sm:$0xff]
    %v228 = vld [vmem:[%s2 + $0x10] sm:$0xff]
    %v229 = vld [vmem:[%s2 + $0x18] sm:$0xff]
    %234 = vrot.lane.b32.xlu0 %v226, 64
    %v235 = vpop.permute.xlu0 %234
    %236 = vrot.lane.b32.xlu0 %v227, 64
    %v237 = vpop.permute.xlu0 %236
    %238 = vrot.lane.b32.xlu0 %v228, 64
    %v239 = vpop.permute.xlu0 %238
    %240 = vrot.lane.b32.xlu0 %v229, 64
    %v241 = vpop.permute.xlu0 %240
    %v246 = vsub.f32 %v222, %v235
    %v247 = vsub.f32 %v223, %v237
    %v248 = vsub.f32 %v224, %v239
    %v249 = vsub.f32 %v225, %v241
    %252 = vrot.lane.b32.xlu0 %v210, 96
    %v253 = vpop.permute.xlu0 %252
    %254 = vrot.lane.b32.xlu0 %v211, 96
    %v255 = vpop.permute.xlu0 %254
    %vm256 = vcmask 64512
    %v258 = vsel %vm256, %v198, 0
    %v261 = vsel %vm256, %v199, 0
    %v263 = vsel %vm256, %v253, 0
    %v265 = vsel %vm256, %v255, 0
    %267 = vmatprep.subr.mxu0 0.0
    %268 = vmatpush1.xpose.msra.mxu0 %v263
    %269 = vmatprep.subr.mxu0 0.0
    %270 = vmatpush1.xpose.msra.mxu0 %v265
    %271 = vmatprep.subr.mxu0 0.0
    %272 = vmatpush1.xpose.msra.mxu0 0.0
    %273 = vmatprep.subr.mxu0 0.0
    %274 = vmatpush1.xpose.msra.mxu0 0.0
    %275 = vmatprep.subr.mxu0 0.0
    %276 = vmatpush1.xpose.msra.mxu0 0.0
    %277 = vmatprep.subr.mxu0 0.0
    %278 = vmatpush1.xpose.msra.mxu0 0.0
    %279 = vmatprep.subr.mxu0 0.0
    %280 = vmatpush1.xpose.msra.mxu0 0.0
    %281 = vmatprep.subr.mxu0 0.0
    %282 = vmatpush1.xpose.msra.mxu0 0.0
    %283 = vmatprep.subr.mxu0 0.0
    %284 = vmatpush1.xpose.msra.mxu0 0.0
    %285 = vmatprep.subr.mxu0 0.0
    %286 = vmatpush1.xpose.msra.mxu0 0.0
    %287 = vmatprep.subr.mxu0 0.0
    %288 = vmatpush1.xpose.msra.mxu0 0.0
    %289 = vmatprep.subr.mxu0 0.0
    %290 = vmatpush1.xpose.msra.mxu0 0.0
    %291 = vmatprep.subr.mxu0 0.0
    %292 = vmatpush1.xpose.msra.mxu0 0.0
    %293 = vmatprep.subr.mxu0 0.0
    %294 = vmatpush1.xpose.msra.mxu0 0.0
    %295 = vmatprep.subr.mxu0 0.0
    %296 = vmatpush1.xpose.msra.mxu0 0.0
    %297 = vmatprep.subr.mxu0 0.0
    %298 = vmatpush1.xpose.msra.mxu0 0.0
    %299 = vmatprep.subr.mxu0 0.0
    %300 = vmatpush1.xpose.msra.mxu0 0.0
    %301 = vmatprep.subr.mxu0 0.0
    %302 = vmatpush1.xpose.msra.mxu0 0.0
    %303 = vmatprep.subr.mxu0 0.0
    %304 = vmatpush1.xpose.msra.mxu0 0.0
    %305 = vmatprep.subr.mxu0 0.0
    %306 = vmatpush1.xpose.msra.mxu0 0.0
    %307 = vmatprep.subr.mxu0 0.0
    %308 = vmatpush1.xpose.msra.mxu0 0.0
    %309 = vmatprep.subr.mxu0 0.0
    %310 = vmatpush1.xpose.msra.mxu0 0.0
    %311 = vmatprep.subr.mxu0 0.0
    %312 = vmatpush1.xpose.msra.mxu0 0.0
    %313 = vmatprep.subr.mxu0 0.0
    %314 = vmatpush1.xpose.msra.mxu0 0.0
    %315 = vmatprep.subr.mxu0 0.0
    %316 = vmatpush1.xpose.msra.mxu0 0.0
    %317 = vmatprep.subr.mxu0 0.0
    %318 = vmatpush1.xpose.msra.mxu0 0.0
    %319 = vmatprep.subr.mxu0 0.0
    %320 = vmatpush1.xpose.msra.mxu0 0.0
    %321 = vmatprep.subr.mxu0 0.0
    %322 = vmatpush1.xpose.msra.mxu0 0.0
    %323 = vmatprep.subr.mxu0 0.0
    %324 = vmatpush1.xpose.msra.mxu0 0.0
    %325 = vmatprep.subr.mxu0 0.0
    %326 = vmatpush1.xpose.msra.mxu0 0.0
    %327 = vmatprep.subr.mxu0 0.0
    %328 = vmatpush1.xpose.msra.mxu0 0.0
    %329 = vmatprep.subr.mxu0 0.0
    %330 = vmatpush1.xpose.msra.mxu0 0.0
    %331 = vmatprep.mubr.f32.mxu0 0.0
    %332 = vmatmul.mubr.f32.gmra.mrb[0].mxu0 %v258
    %v333 = vpop.f32.mrb[0].mxu0
    %v334 = vadd.f32 0.0, %v333
    %v335 = vpop.f32.mrb[0].mxu0
    %336 = vmatprep.mubr.f32.mxu0 0.0
    %337 = vmatmul.mubr.f32.gmra.mrb[0].mxu0 %v261
    %v338 = vpop.f32.mrb[0].mxu0
    %v339 = vadd.f32 0.0, %v338
    %v340 = vpop.f32.mrb[0].mxu0
    %341 = vdwg.mxu0
    %vm342 = vcmask 130048
    %v343 = vsel %vm342, %v334, -inf
    %344 = vmax.xlane.f32.xlu0 %v343
    %v345 = vpop.xlane.xlu0 %344
    %v346 = vsel %vm342, %v339, -inf
    %347 = vmax.xlane.f32.xlu0 %v346
    %v348 = vpop.xlane.xlu0 %347
    %v349 = vsub.f32 %v334, %v345
    %v350 = vsub.f32 %v339, %v348
    %v351 = vmul.f32 %v349, 1.442695
    %v352 = vpow.pop %v351
    %v353 = vmul.f32 %v350, 1.442695
    %v354 = vpow.pop %v353
    %v355 = vsel %vm342, %v352, 0.0
    %356 = vadd.xlane.f32.xlu0 %v355
    %v357 = vpop.xlane.xlu0 %356
    %v358 = vsel %vm342, %v354, 0.0
    %359 = vadd.xlane.f32.xlu0 %v358
    %v360 = vpop.xlane.xlu0 %359
    %v361 = vrcp.pop %v357
    %v362 = vrcp.pop %v360
    %v363 = vmul.f32 %v352, %v361
    %v364 = vmul.f32 %v354, %v362
    %367 = vrot.lane.b32.xlu0 %v246, 64
    %v368 = vpop.permute.xlu0 %367
    %369 = vrot.lane.b32.xlu0 %v247, 64
    %v370 = vpop.permute.xlu0 %369
    %v374 = vsel %vm342, %v363, 0
    %v377 = vsel %vm342, %v364, 0
    %379 = vmatprep.subr.mxu0 0.0
    %380 = vmatpush1.msra.mxu0 %v368
    %381 = vmatprep.subr.mxu0 0.0
    %382 = vmatpush1.msra.mxu0 %v370
    %383 = vmatprep.subr.mxu0 0.0
    %384 = vmatpush1.msra.mxu0 0.0
    %385 = vmatprep.subr.mxu0 0.0
    %386 = vmatpush1.msra.mxu0 0.0
    %387 = vmatprep.subr.mxu0 0.0
    %388 = vmatpush1.msra.mxu0 0.0
    %389 = vmatprep.subr.mxu0 0.0
    %390 = vmatpush1.msra.mxu0 0.0
    %391 = vmatprep.subr.mxu0 0.0
    %392 = vmatpush1.msra.mxu0 0.0
    %393 = vmatprep.subr.mxu0 0.0
    %394 = vmatpush1.msra.mxu0 0.0
    %395 = vmatprep.subr.mxu0 0.0
    %396 = vmatpush1.msra.mxu0 0.0
    %397 = vmatprep.subr.mxu0 0.0
    %398 = vmatpush1.msra.mxu0 0.0
    %399 = vmatprep.subr.mxu0 0.0
    %400 = vmatpush1.msra.mxu0 0.0
    %401 = vmatprep.subr.mxu0 0.0
    %402 = vmatpush1.msra.mxu0 0.0
    %403 = vmatprep.subr.mxu0 0.0
    %404 = vmatpush1.msra.mxu0 0.0
    %405 = vmatprep.subr.mxu0 0.0
    %406 = vmatpush1.msra.mxu0 0.0
    %407 = vmatprep.subr.mxu0 0.0
    %408 = vmatpush1.msra.mxu0 0.0
    %409 = vmatprep.subr.mxu0 0.0
    %410 = vmatpush1.msra.mxu0 0.0
    %411 = vmatprep.subr.mxu0 0.0
    %412 = vmatpush1.msra.mxu0 0.0
    %413 = vmatprep.subr.mxu0 0.0
    %414 = vmatpush1.msra.mxu0 0.0
    %415 = vmatprep.subr.mxu0 0.0
    %416 = vmatpush1.msra.mxu0 0.0
    %417 = vmatprep.subr.mxu0 0.0
    %418 = vmatpush1.msra.mxu0 0.0
    %419 = vmatprep.subr.mxu0 0.0
    %420 = vmatpush1.msra.mxu0 0.0
    %421 = vmatprep.subr.mxu0 0.0
    %422 = vmatpush1.msra.mxu0 0.0
    %423 = vmatprep.subr.mxu0 0.0
    %424 = vmatpush1.msra.mxu0 0.0
    %425 = vmatprep.subr.mxu0 0.0
    %426 = vmatpush1.msra.mxu0 0.0
    %427 = vmatprep.subr.mxu0 0.0
    %428 = vmatpush1.msra.mxu0 0.0
    %429 = vmatprep.subr.mxu0 0.0
    %430 = vmatpush1.msra.mxu0 0.0
    %431 = vmatprep.subr.mxu0 0.0
    %432 = vmatpush1.msra.mxu0 0.0
    %433 = vmatprep.subr.mxu0 0.0
    %434 = vmatpush1.msra.mxu0 0.0
    %435 = vmatprep.subr.mxu0 0.0
    %436 = vmatpush1.msra.mxu0 0.0
    %437 = vmatprep.subr.mxu0 0.0
    %438 = vmatpush1.msra.mxu0 0.0
    %439 = vmatprep.subr.mxu0 0.0
    %440 = vmatpush1.msra.mxu0 0.0
    %441 = vmatprep.subr.mxu0 0.0
    %442 = vmatpush1.msra.mxu0 0.0
    %443 = vmatprep.mubr.f32.mxu0 0.0
    %444 = vmatmul.mubr.f32.gmra.mrb[0].mxu0 %v374
    %v445 = vpop.f32.mrb[0].mxu0
    %v446 = vadd.f32 0.0, %v445
    %v447 = vpop.f32.mrb[0].mxu0
    %448 = vmatprep.mubr.f32.mxu0 0.0
    %449 = vmatmul.mubr.f32.gmra.mrb[0].mxu0 %v377
    %v450 = vpop.f32.mrb[0].mxu0
    %v451 = vadd.f32 0.0, %v450
    %v452 = vpop.f32.mrb[0].mxu0
    %453 = vdwg.mxu0
    %454 = vrot.lane.b32.xlu0 %v198, 120
    %v455 = vpop.permute.xlu0 %454
    %456 = vrot.lane.b32.xlu0 %v199, 120
    %v457 = vpop.permute.xlu0 %456
    %458 = vrot.lane.b32.xlu0 %v210, 88
    %v459 = vpop.permute.xlu0 %458
    %460 = vrot.lane.b32.xlu0 %v211, 88
    %v461 = vpop.permute.xlu0 %460
    %v462 = vsel %vm256, %v455, 0
    %v464 = vsel %vm256, %v457, 0
    %v466 = vsel %vm256, %v459, 0
    %v468 = vsel %vm256, %v461, 0
    %470 = vmatprep.subr.mxu0 0.0
    %471 = vmatpush1.xpose.msra.mxu0 %v466
    %472 = vmatprep.subr.mxu0 0.0
    %473 = vmatpush1.xpose.msra.mxu0 %v468
    %474 = vmatprep.subr.mxu0 0.0
    %475 = vmatpush1.xpose.msra.mxu0 0.0
    %476 = vmatprep.subr.mxu0 0.0
    %477 = vmatpush1.xpose.msra.mxu0 0.0
    %478 = vmatprep.subr.mxu0 0.0
    %479 = vmatpush1.xpose.msra.mxu0 0.0
    %480 = vmatprep.subr.mxu0 0.0
    %481 = vmatpush1.xpose.msra.mxu0 0.0
    %482 = vmatprep.subr.mxu0 0.0
    %483 = vmatpush1.xpose.msra.mxu0 0.0
    %484 = vmatprep.subr.mxu0 0.0
    %485 = vmatpush1.xpose.msra.mxu0 0.0
    %486 = vmatprep.subr.mxu0 0.0
    %487 = vmatpush1.xpose.msra.mxu0 0.0
    %488 = vmatprep.subr.mxu0 0.0
    %489 = vmatpush1.xpose.msra.mxu0 0.0
    %490 = vmatprep.subr.mxu0 0.0
    %491 = vmatpush1.xpose.msra.mxu0 0.0
    %492 = vmatprep.subr.mxu0 0.0
    %493 = vmatpush1.xpose.msra.mxu0 0.0
    %494 = vmatprep.subr.mxu0 0.0
    %495 = vmatpush1.xpose.msra.mxu0 0.0
    %496 = vmatprep.subr.mxu0 0.0
    %497 = vmatpush1.xpose.msra.mxu0 0.0
    %498 = vmatprep.subr.mxu0 0.0
    %499 = vmatpush1.xpose.msra.mxu0 0.0
    %500 = vmatprep.subr.mxu0 0.0
    %501 = vmatpush1.xpose.msra.mxu0 0.0
    %502 = vmatprep.subr.mxu0 0.0
    %503 = vmatpush1.xpose.msra.mxu0 0.0
    %504 = vmatprep.subr.mxu0 0.0
    %505 = vmatpush1.xpose.msra.mxu0 0.0
    %506 = vmatprep.subr.mxu0 0.0
    %507 = vmatpush1.xpose.msra.mxu0 0.0
    %508 = vmatprep.subr.mxu0 0.0
    %509 = vmatpush1.xpose.msra.mxu0 0.0
    %510 = vmatprep.subr.mxu0 0.0
    %511 = vmatpush1.xpose.msra.mxu0 0.0
    %512 = vmatprep.subr.mxu0 0.0
    %513 = vmatpush1.xpose.msra.mxu0 0.0
    %514 = vmatprep.subr.mxu0 0.0
    %515 = vmatpush1.xpose.msra.mxu0 0.0
    %516 = vmatprep.subr.mxu0 0.0
    %517 = vmatpush1.xpose.msra.mxu0 0.0
    %518 = vmatprep.subr.mxu0 0.0
    %519 = vmatpush1.xpose.msra.mxu0 0.0
    %520 = vmatprep.subr.mxu0 0.0
    %521 = vmatpush1.xpose.msra.mxu0 0.0
    %522 = vmatprep.subr.mxu0 0.0
    %523 = vmatpush1.xpose.msra.mxu0 0.0
    %524 = vmatprep.subr.mxu0 0.0
    %525 = vmatpush1.xpose.msra.mxu0 0.0
    %526 = vmatprep.subr.mxu0 0.0
    %527 = vmatpush1.xpose.msra.mxu0 0.0
    %528 = vmatprep.subr.mxu0 0.0
    %529 = vmatpush1.xpose.msra.mxu0 0.0
    %530 = vmatprep.subr.mxu0 0.0
    %531 = vmatpush1.xpose.msra.mxu0 0.0
    %532 = vmatprep.subr.mxu0 0.0
    %533 = vmatpush1.xpose.msra.mxu0 0.0
    %534 = vmatprep.mubr.f32.mxu0 0.0
    %535 = vmatmul.mubr.f32.gmra.mrb[0].mxu0 %v462
    %v536 = vpop.f32.mrb[0].mxu0
    %v537 = vadd.f32 0.0, %v536
    %v538 = vpop.f32.mrb[0].mxu0
    %539 = vmatprep.mubr.f32.mxu0 0.0
    %540 = vmatmul.mubr.f32.gmra.mrb[0].mxu0 %v464
    %v541 = vpop.f32.mrb[0].mxu0
    %v542 = vadd.f32 0.0, %v541
    %v543 = vpop.f32.mrb[0].mxu0
    %544 = vdwg.mxu0
    %v545 = vsel %vm342, %v537, -inf
    %546 = vmax.xlane.f32.xlu0 %v545
    %v547 = vpop.xlane.xlu0 %546
    %v548 = vsel %vm342, %v542, -inf
    %549 = vmax.xlane.f32.xlu0 %v548
    %v550 = vpop.xlane.xlu0 %549
    %v551 = vsub.f32 %v537, %v547
    %v552 = vsub.f32 %v542, %v550
    %v553 = vmul.f32 %v551, 1.442695
    %v554 = vpow.pop %v553
    %v555 = vmul.f32 %v552, 1.442695
    %v556 = vpow.pop %v555
    %v557 = vsel %vm342, %v554, 0.0
    %558 = vadd.xlane.f32.xlu0 %v557
    %v559 = vpop.xlane.xlu0 %558
    %v560 = vsel %vm342, %v556, 0.0
    %561 = vadd.xlane.f32.xlu0 %v560
    %v562 = vpop.xlane.xlu0 %561
    %v563 = vrcp.pop %v559
    %v564 = vrcp.pop %v562
    %v565 = vmul.f32 %v554, %v563
    %v566 = vmul.f32 %v556, %v564
    %567 = vrot.lane.b32.xlu0 %v246, 56
    %v568 = vpop.permute.xlu0 %567
    %569 = vrot.lane.b32.xlu0 %v247, 56
    %v570 = vpop.permute.xlu0 %569
    %v574 = vsel %vm342, %v565, 0
    %v577 = vsel %vm342, %v566, 0
    %579 = vmatprep.subr.mxu0 0.0
    %580 = vmatpush1.msra.mxu0 %v568
    %581 = vmatprep.subr.mxu0 0.0
    %582 = vmatpush1.msra.mxu0 %v570
    %583 = vmatprep.subr.mxu0 0.0
    %584 = vmatpush1.msra.mxu0 0.0
    %585 = vmatprep.subr.mxu0 0.0
    %586 = vmatpush1.msra.mxu0 0.0
    %587 = vmatprep.subr.mxu0 0.0
    %588 = vmatpush1.msra.mxu0 0.0
    %589 = vmatprep.subr.mxu0 0.0
    %590 = vmatpush1.msra.mxu0 0.0
    %591 = vmatprep.subr.mxu0 0.0
    %592 = vmatpush1.msra.mxu0 0.0
    %593 = vmatprep.subr.mxu0 0.0
    %594 = vmatpush1.msra.mxu0 0.0
    %595 = vmatprep.subr.mxu0 0.0
    %596 = vmatpush1.msra.mxu0 0.0
    %597 = vmatprep.subr.mxu0 0.0
    %598 = vmatpush1.msra.mxu0 0.0
    %599 = vmatprep.subr.mxu0 0.0
    %600 = vmatpush1.msra.mxu0 0.0
    %601 = vmatprep.subr.mxu0 0.0
    %602 = vmatpush1.msra.mxu0 0.0
    %603 = vmatprep.subr.mxu0 0.0
    %604 = vmatpush1.msra.mxu0 0.0
    %605 = vmatprep.subr.mxu0 0.0
    %606 = vmatpush1.msra.mxu0 0.0
    %607 = vmatprep.subr.mxu0 0.0
    %608 = vmatpush1.msra.mxu0 0.0
    %609 = vmatprep.subr.mxu0 0.0
    %610 = vmatpush1.msra.mxu0 0.0
    %611 = vmatprep.subr.mxu0 0.0
    %612 = vmatpush1.msra.mxu0 0.0
    %613 = vmatprep.subr.mxu0 0.0
    %614 = vmatpush1.msra.mxu0 0.0
    %615 = vmatprep.subr.mxu0 0.0
    %616 = vmatpush1.msra.mxu0 0.0
    %617 = vmatprep.subr.mxu0 0.0
    %618 = vmatpush1.msra.mxu0 0.0
    %619 = vmatprep.subr.mxu0 0.0
    %620 = vmatpush1.msra.mxu0 0.0
    %621 = vmatprep.subr.mxu0 0.0
    %622 = vmatpush1.msra.mxu0 0.0
    %623 = vmatprep.subr.mxu0 0.0
    %624 = vmatpush1.msra.mxu0 0.0
    %625 = vmatprep.subr.mxu0 0.0
    %626 = vmatpush1.msra.mxu0 0.0
    %627 = vmatprep.subr.mxu0 0.0
    %628 = vmatpush1.msra.mxu0 0.0
    %629 = vmatprep.subr.mxu0 0.0
    %630 = vmatpush1.msra.mxu0 0.0
    %631 = vmatprep.subr.mxu0 0.0
    %632 = vmatpush1.msra.mxu0 0.0
    %633 = vmatprep.subr.mxu0 0.0
    %634 = vmatpush1.msra.mxu0 0.0
    %635 = vmatprep.subr.mxu0 0.0
    %636 = vmatpush1.msra.mxu0 0.0
    %637 = vmatprep.subr.mxu0 0.0
    %638 = vmatpush1.msra.mxu0 0.0
    %639 = vmatprep.subr.mxu0 0.0
    %640 = vmatpush1.msra.mxu0 0.0
    %641 = vmatprep.subr.mxu0 0.0
    %642 = vmatpush1.msra.mxu0 0.0
    %643 = vmatprep.mubr.f32.mxu0 0.0
    %644 = vmatmul.mubr.f32.gmra.mrb[0].mxu0 %v574
    %v645 = vpop.f32.mrb[0].mxu0
    %v646 = vadd.f32 0.0, %v645
    %v647 = vpop.f32.mrb[0].mxu0
    %648 = vmatprep.mubr.f32.mxu0 0.0
    %649 = vmatmul.mubr.f32.gmra.mrb[0].mxu0 %v577
    %v650 = vpop.f32.mrb[0].mxu0
    %v651 = vadd.f32 0.0, %v650
    %v652 = vpop.f32.mrb[0].mxu0
    %653 = vdwg.mxu0
    %654 = vrot.lane.b32.xlu0 %v198, 112
    %v655 = vpop.permute.xlu0 %654
    %656 = vrot.lane.b32.xlu0 %v199, 112
    %v657 = vpop.permute.xlu0 %656
    %658 = vrot.lane.b32.xlu0 %v210, 80
    %v659 = vpop.permute.xlu0 %658
    %660 = vrot.lane.b32.xlu0 %v211, 80
    %v661 = vpop.permute.xlu0 %660
    %v662 = vsel %vm256, %v655, 0
    %v664 = vsel %vm256, %v657, 0
    %v666 = vsel %vm256, %v659, 0
    %v668 = vsel %vm256, %v661, 0
    %670 = vmatprep.subr.mxu0 0.0
    %671 = vmatpush1.xpose.msra.mxu0 %v666
    %672 = vmatprep.subr.mxu0 0.0
    %673 = vmatpush1.xpose.msra.mxu0 %v668
    %674 = vmatprep.subr.mxu0 0.0
    %675 = vmatpush1.xpose.msra.mxu0 0.0
    %676 = vmatprep.subr.mxu0 0.0
    %677 = vmatpush1.xpose.msra.mxu0 0.0
    %678 = vmatprep.subr.mxu0 0.0
    %679 = vmatpush1.xpose.msra.mxu0 0.0
    %680 = vmatprep.subr.mxu0 0.0
    %681 = vmatpush1.xpose.msra.mxu0 0.0
    %682 = vmatprep.subr.mxu0 0.0
    %683 = vmatpush1.xpose.msra.mxu0 0.0
    %684 = vmatprep.subr.mxu0 0.0
    %685 = vmatpush1.xpose.msra.mxu0 0.0
    %686 = vmatprep.subr.mxu0 0.0
    %687 = vmatpush1.xpose.msra.mxu0 0.0
    %688 = vmatprep.subr.mxu0 0.0
    %689 = vmatpush1.xpose.msra.mxu0 0.0
    %690 = vmatprep.subr.mxu0 0.0
    %691 = vmatpush1.xpose.msra.mxu0 0.0
    %692 = vmatprep.subr.mxu0 0.0
    %693 = vmatpush1.xpose.msra.mxu0 0.0
    %694 = vmatprep.subr.mxu0 0.0
    %695 = vmatpush1.xpose.msra.mxu0 0.0
    %696 = vmatprep.subr.mxu0 0.0
    %697 = vmatpush1.xpose.msra.mxu0 0.0
    %698 = vmatprep.subr.mxu0 0.0
    %699 = vmatpush1.xpose.msra.mxu0 0.0
    %700 = vmatprep.subr.mxu0 0.0
    %701 = vmatpush1.xpose.msra.mxu0 0.0
    %702 = vmatprep.subr.mxu0 0.0
    %703 = vmatpush1.xpose.msra.mxu0 0.0
    %704 = vmatprep.subr.mxu0 0.0
    %705 = vmatpush1.xpose.msra.mxu0 0.0
    %706 = vmatprep.subr.mxu0 0.0
    %707 = vmatpush1.xpose.msra.mxu0 0.0
    %708 = vmatprep.subr.mxu0 0.0
    %709 = vmatpush1.xpose.msra.mxu0 0.0
    %710 = vmatprep.subr.mxu0 0.0
    %711 = vmatpush1.xpose.msra.mxu0 0.0
    %712 = vmatprep.subr.mxu0 0.0
    %713 = vmatpush1.xpose.msra.mxu0 0.0
    %714 = vmatprep.subr.mxu0 0.0
    %715 = vmatpush1.xpose.msra.mxu0 0.0
    %716 = vmatprep.subr.mxu0 0.0
    %717 = vmatpush1.xpose.msra.mxu0 0.0
    %718 = vmatprep.subr.mxu0 0.0
    %719 = vmatpush1.xpose.msra.mxu0 0.0
    %720 = vmatprep.subr.mxu0 0.0
    %721 = vmatpush1.xpose.msra.mxu0 0.0
    %722 = vmatprep.subr.mxu0 0.0
    %723 = vmatpush1.xpose.msra.mxu0 0.0
    %724 = vmatprep.subr.mxu0 0.0
    %725 = vmatpush1.xpose.msra.mxu0 0.0
    %726 = vmatprep.subr.mxu0 0.0
    %727 = vmatpush1.xpose.msra.mxu0 0.0
    %728 = vmatprep.subr.mxu0 0.0
    %729 = vmatpush1.xpose.msra.mxu0 0.0
    %730 = vmatprep.subr.mxu0 0.0
    %731 = vmatpush1.xpose.msra.mxu0 0.0
    %732 = vmatprep.subr.mxu0 0.0
    %733 = vmatpush1.xpose.msra.mxu0 0.0
    %734 = vmatprep.mubr.f32.mxu0 0.0
    %735 = vmatmul.mubr.f32.gmra.mrb[0].mxu0 %v662
    %v736 = vpop.f32.mrb[0].mxu0
    %v737 = vadd.f32 0.0, %v736
    %v738 = vpop.f32.mrb[0].mxu0
    %739 = vmatprep.mubr.f32.mxu0 0.0
    %740 = vmatmul.mubr.f32.gmra.mrb[0].mxu0 %v664
    %v741 = vpop.f32.mrb[0].mxu0
    %v742 = vadd.f32 0.0, %v741
    %v743 = vpop.f32.mrb[0].mxu0
    %744 = vdwg.mxu0
    %v745 = vsel %vm342, %v737, -inf
    %746 = vmax.xlane.f32.xlu0 %v745
    %v747 = vpop.xlane.xlu0 %746
    %v748 = vsel %vm342, %v742, -inf
    %749 = vmax.xlane.f32.xlu0 %v748
    %v750 = vpop.xlane.xlu0 %749
    %v751 = vsub.f32 %v737, %v747
    %v752 = vsub.f32 %v742, %v750
    %v753 = vmul.f32 %v751, 1.442695
    %v754 = vpow.pop %v753
    %v755 = vmul.f32 %v752, 1.442695
    %v756 = vpow.pop %v755
    %v757 = vsel %vm342, %v754, 0.0
    %758 = vadd.xlane.f32.xlu0 %v757
    %v759 = vpop.xlane.xlu0 %758
    %v760 = vsel %vm342, %v756, 0.0
    %761 = vadd.xlane.f32.xlu0 %v760
    %v762 = vpop.xlane.xlu0 %761
    %v763 = vrcp.pop %v759
    %v764 = vrcp.pop %v762
    %v765 = vmul.f32 %v754, %v763
    %v766 = vmul.f32 %v756, %v764
    %767 = vrot.lane.b32.xlu0 %v246, 48
    %v768 = vpop.permute.xlu0 %767
    %769 = vrot.lane.b32.xlu0 %v247, 48
    %v770 = vpop.permute.xlu0 %769
    %v774 = vsel %vm342, %v765, 0
    %v777 = vsel %vm342, %v766, 0
    %779 = vmatprep.subr.mxu0 0.0
    %780 = vmatpush1.msra.mxu0 %v768
    %781 = vmatprep.subr.mxu0 0.0
    %782 = vmatpush1.msra.mxu0 %v770
    %783 = vmatprep.subr.mxu0 0.0
    %784 = vmatpush1.msra.mxu0 0.0
    %785 = vmatprep.subr.mxu0 0.0
    %786 = vmatpush1.msra.mxu0 0.0
    %787 = vmatprep.subr.mxu0 0.0
    %788 = vmatpush1.msra.mxu0 0.0
    %789 = vmatprep.subr.mxu0 0.0
    %790 = vmatpush1.msra.mxu0 0.0
    %791 = vmatprep.subr.mxu0 0.0
    %792 = vmatpush1.msra.mxu0 0.0
    %793 = vmatprep.subr.mxu0 0.0
    %794 = vmatpush1.msra.mxu0 0.0
    %795 = vmatprep.subr.mxu0 0.0
    %796 = vmatpush1.msra.mxu0 0.0
    %797 = vmatprep.subr.mxu0 0.0
    %798 = vmatpush1.msra.mxu0 0.0
    %799 = vmatprep.subr.mxu0 0.0
    %800 = vmatpush1.msra.mxu0 0.0
    %801 = vmatprep.subr.mxu0 0.0
    %802 = vmatpush1.msra.mxu0 0.0
    %803 = vmatprep.subr.mxu0 0.0
    %804 = vmatpush1.msra.mxu0 0.0
    %805 = vmatprep.subr.mxu0 0.0
    %806 = vmatpush1.msra.mxu0 0.0
    %807 = vmatprep.subr.mxu0 0.0
    %808 = vmatpush1.msra.mxu0 0.0
    %809 = vmatprep.subr.mxu0 0.0
    %810 = vmatpush1.msra.mxu0 0.0
    %811 = vmatprep.subr.mxu0 0.0
    %812 = vmatpush1.msra.mxu0 0.0
    %813 = vmatprep.subr.mxu0 0.0
    %814 = vmatpush1.msra.mxu0 0.0
    %815 = vmatprep.subr.mxu0 0.0
    %816 = vmatpush1.msra.mxu0 0.0
    %817 = vmatprep.subr.mxu0 0.0
    %818 = vmatpush1.msra.mxu0 0.0
    %819 = vmatprep.subr.mxu0 0.0
    %820 = vmatpush1.msra.mxu0 0.0
    %821 = vmatprep.subr.mxu0 0.0
    %822 = vmatpush1.msra.mxu0 0.0
    %823 = vmatprep.subr.mxu0 0.0
    %824 = vmatpush1.msra.mxu0 0.0
    %825 = vmatprep.subr.mxu0 0.0
    %826 = vmatpush1.msra.mxu0 0.0
    %827 = vmatprep.subr.mxu0 0.0
    %828 = vmatpush1.msra.mxu0 0.0
    %829 = vmatprep.subr.mxu0 0.0
    %830 = vmatpush1.msra.mxu0 0.0
    %831 = vmatprep.subr.mxu0 0.0
    %832 = vmatpush1.msra.mxu0 0.0
    %833 = vmatprep.subr.mxu0 0.0
    %834 = vmatpush1.msra.mxu0 0.0
    %835 = vmatprep.subr.mxu0 0.0
    %836 = vmatpush1.msra.mxu0 0.0
    %837 = vmatprep.subr.mxu0 0.0
    %838 = vmatpush1.msra.mxu0 0.0
    %839 = vmatprep.subr.mxu0 0.0
    %840 = vmatpush1.msra.mxu0 0.0
    %841 = vmatprep.subr.mxu0 0.0
    %842 = vmatpush1.msra.mxu0 0.0
    %843 = vmatprep.mubr.f32.mxu0 0.0
    %844 = vmatmul.mubr.f32.gmra.mrb[0].mxu0 %v774
    %v845 = vpop.f32.mrb[0].mxu0
    %v846 = vadd.f32 0.0, %v845
    %v847 = vpop.f32.mrb[0].mxu0
    %848 = vmatprep.mubr.f32.mxu0 0.0
    %849 = vmatmul.mubr.f32.gmra.mrb[0].mxu0 %v777
    %v850 = vpop.f32.mrb[0].mxu0
    %v851 = vadd.f32 0.0, %v850
    %v852 = vpop.f32.mrb[0].mxu0
    %853 = vdwg.mxu0
    %854 = vrot.lane.b32.xlu0 %v198, 104
    %v855 = vpop.permute.xlu0 %854
    %856 = vrot.lane.b32.xlu0 %v199, 104
    %v857 = vpop.permute.xlu0 %856
    %858 = vrot.lane.b32.xlu0 %v210, 72
    %v859 = vpop.permute.xlu0 %858
    %860 = vrot.lane.b32.xlu0 %v211, 72
    %v861 = vpop.permute.xlu0 %860
    %v862 = vsel %vm256, %v855, 0
    %v864 = vsel %vm256, %v857, 0
    %v866 = vsel %vm256, %v859, 0
    %v868 = vsel %vm256, %v861, 0
    %870 = vmatprep.subr.mxu0 0.0
    %871 = vmatpush1.xpose.msra.mxu0 %v866
    %872 = vmatprep.subr.mxu0 0.0
    %873 = vmatpush1.xpose.msra.mxu0 %v868
    %874 = vmatprep.subr.mxu0 0.0
    %875 = vmatpush1.xpose.msra.mxu0 0.0
    %876 = vmatprep.subr.mxu0 0.0
    %877 = vmatpush1.xpose.msra.mxu0 0.0
    %878 = vmatprep.subr.mxu0 0.0
    %879 = vmatpush1.xpose.msra.mxu0 0.0
    %880 = vmatprep.subr.mxu0 0.0
    %881 = vmatpush1.xpose.msra.mxu0 0.0
    %882 = vmatprep.subr.mxu0 0.0
    %883 = vmatpush1.xpose.msra.mxu0 0.0
    %884 = vmatprep.subr.mxu0 0.0
    %885 = vmatpush1.xpose.msra.mxu0 0.0
    %886 = vmatprep.subr.mxu0 0.0
    %887 = vmatpush1.xpose.msra.mxu0 0.0
    %888 = vmatprep.subr.mxu0 0.0
    %889 = vmatpush1.xpose.msra.mxu0 0.0
    %890 = vmatprep.subr.mxu0 0.0
    %891 = vmatpush1.xpose.msra.mxu0 0.0
    %892 = vmatprep.subr.mxu0 0.0
    %893 = vmatpush1.xpose.msra.mxu0 0.0
    %894 = vmatprep.subr.mxu0 0.0
    %895 = vmatpush1.xpose.msra.mxu0 0.0
    %896 = vmatprep.subr.mxu0 0.0
    %897 = vmatpush1.xpose.msra.mxu0 0.0
    %898 = vmatprep.subr.mxu0 0.0
    %899 = vmatpush1.xpose.msra.mxu0 0.0
    %900 = vmatprep.subr.mxu0 0.0
    %901 = vmatpush1.xpose.msra.mxu0 0.0
    %902 = vmatprep.subr.mxu0 0.0
    %903 = vmatpush1.xpose.msra.mxu0 0.0
    %904 = vmatprep.subr.mxu0 0.0
    %905 = vmatpush1.xpose.msra.mxu0 0.0
    %906 = vmatprep.subr.mxu0 0.0
    %907 = vmatpush1.xpose.msra.mxu0 0.0
    %908 = vmatprep.subr.mxu0 0.0
    %909 = vmatpush1.xpose.msra.mxu0 0.0
    %910 = vmatprep.subr.mxu0 0.0
    %911 = vmatpush1.xpose.msra.mxu0 0.0
    %912 = vmatprep.subr.mxu0 0.0
    %913 = vmatpush1.xpose.msra.mxu0 0.0
    %914 = vmatprep.subr.mxu0 0.0
    %915 = vmatpush1.xpose.msra.mxu0 0.0
    %916 = vmatprep.subr.mxu0 0.0
    %917 = vmatpush1.xpose.msra.mxu0 0.0
    %918 = vmatprep.subr.mxu0 0.0
    %919 = vmatpush1.xpose.msra.mxu0 0.0
    %920 = vmatprep.subr.mxu0 0.0
    %921 = vmatpush1.xpose.msra.mxu0 0.0
    %922 = vmatprep.subr.mxu0 0.0
    %923 = vmatpush1.xpose.msra.mxu0 0.0
    %924 = vmatprep.subr.mxu0 0.0
    %925 = vmatpush1.xpose.msra.mxu0 0.0
    %926 = vmatprep.subr.mxu0 0.0
    %927 = vmatpush1.xpose.msra.mxu0 0.0
    %928 = vmatprep.subr.mxu0 0.0
    %929 = vmatpush1.xpose.msra.mxu0 0.0
    %930 = vmatprep.subr.mxu0 0.0
    %931 = vmatpush1.xpose.msra.mxu0 0.0
    %932 = vmatprep.subr.mxu0 0.0
    %933 = vmatpush1.xpose.msra.mxu0 0.0
    %934 = vmatprep.mubr.f32.mxu0 0.0
    %935 = vmatmul.mubr.f32.gmra.mrb[0].mxu0 %v862
    %v936 = vpop.f32.mrb[0].mxu0
    %v937 = vadd.f32 0.0, %v936
    %v938 = vpop.f32.mrb[0].mxu0
    %939 = vmatprep.mubr.f32.mxu0 0.0
    %940 = vmatmul.mubr.f32.gmra.mrb[0].mxu0 %v864
    %v941 = vpop.f32.mrb[0].mxu0
    %v942 = vadd.f32 0.0, %v941
    %v943 = vpop.f32.mrb[0].mxu0
    %944 = vdwg.mxu0
    %v945 = vsel %vm342, %v937, -inf
    %946 = vmax.xlane.f32.xlu0 %v945
    %v947 = vpop.xlane.xlu0 %946
    %v948 = vsel %vm342, %v942, -inf
    %949 = vmax.xlane.f32.xlu0 %v948
    %v950 = vpop.xlane.xlu0 %949
    %v951 = vsub.f32 %v937, %v947
    %v952 = vsub.f32 %v942, %v950
    %v953 = vmul.f32 %v951, 1.442695
    %v954 = vpow.pop %v953
    %v955 = vmul.f32 %v952, 1.442695
    %v956 = vpow.pop %v955
    %v957 = vsel %vm342, %v954, 0.0
    %958 = vadd.xlane.f32.xlu0 %v957
    %v959 = vpop.xlane.xlu0 %958
    %v960 = vsel %vm342, %v956, 0.0
    %961 = vadd.xlane.f32.xlu0 %v960
    %v962 = vpop.xlane.xlu0 %961
    %v963 = vrcp.pop %v959
    %v964 = vrcp.pop %v962
    %v965 = vmul.f32 %v954, %v963
    %v966 = vmul.f32 %v956, %v964
    %967 = vrot.lane.b32.xlu0 %v246, 40
    %v968 = vpop.permute.xlu0 %967
    %969 = vrot.lane.b32.xlu0 %v247, 40
    %v970 = vpop.permute.xlu0 %969
    %v974 = vsel %vm342, %v965, 0
    %v977 = vsel %vm342, %v966, 0
    %979 = vmatprep.subr.mxu0 0.0
    %980 = vmatpush1.msra.mxu0 %v968
    %981 = vmatprep.subr.mxu0 0.0
    %982 = vmatpush1.msra.mxu0 %v970
    %983 = vmatprep.subr.mxu0 0.0
    %984 = vmatpush1.msra.mxu0 0.0
    %985 = vmatprep.subr.mxu0 0.0
    %986 = vmatpush1.msra.mxu0 0.0
    %987 = vmatprep.subr.mxu0 0.0
    %988 = vmatpush1.msra.mxu0 0.0
    %989 = vmatprep.subr.mxu0 0.0
    %990 = vmatpush1.msra.mxu0 0.0
    %991 = vmatprep.subr.mxu0 0.0
    %992 = vmatpush1.msra.mxu0 0.0
    %993 = vmatprep.subr.mxu0 0.0
    %994 = vmatpush1.msra.mxu0 0.0
    %995 = vmatprep.subr.mxu0 0.0
    %996 = vmatpush1.msra.mxu0 0.0
    %997 = vmatprep.subr.mxu0 0.0
    %998 = vmatpush1.msra.mxu0 0.0
    %999 = vmatprep.subr.mxu0 0.0
    %1000 = vmatpush1.msra.mxu0 0.0
    %1001 = vmatprep.subr.mxu0 0.0
    %1002 = vmatpush1.msra.mxu0 0.0
    %1003 = vmatprep.subr.mxu0 0.0
    %1004 = vmatpush1.msra.mxu0 0.0
    %1005 = vmatprep.subr.mxu0 0.0
    %1006 = vmatpush1.msra.mxu0 0.0
    %1007 = vmatprep.subr.mxu0 0.0
    %1008 = vmatpush1.msra.mxu0 0.0
    %1009 = vmatprep.subr.mxu0 0.0
    %1010 = vmatpush1.msra.mxu0 0.0
    %1011 = vmatprep.subr.mxu0 0.0
    %1012 = vmatpush1.msra.mxu0 0.0
    %1013 = vmatprep.subr.mxu0 0.0
    %1014 = vmatpush1.msra.mxu0 0.0
    %1015 = vmatprep.subr.mxu0 0.0
    %1016 = vmatpush1.msra.mxu0 0.0
    %1017 = vmatprep.subr.mxu0 0.0
    %1018 = vmatpush1.msra.mxu0 0.0
    %1019 = vmatprep.subr.mxu0 0.0
    %1020 = vmatpush1.msra.mxu0 0.0
    %1021 = vmatprep.subr.mxu0 0.0
    %1022 = vmatpush1.msra.mxu0 0.0
    %1023 = vmatprep.subr.mxu0 0.0
    %1024 = vmatpush1.msra.mxu0 0.0
    %1025 = vmatprep.subr.mxu0 0.0
    %1026 = vmatpush1.msra.mxu0 0.0
    %1027 = vmatprep.subr.mxu0 0.0
    %1028 = vmatpush1.msra.mxu0 0.0
    %1029 = vmatprep.subr.mxu0 0.0
    %1030 = vmatpush1.msra.mxu0 0.0
    %1031 = vmatprep.subr.mxu0 0.0
    %1032 = vmatpush1.msra.mxu0 0.0
    %1033 = vmatprep.subr.mxu0 0.0
    %1034 = vmatpush1.msra.mxu0 0.0
    %1035 = vmatprep.subr.mxu0 0.0
    %1036 = vmatpush1.msra.mxu0 0.0
    %1037 = vmatprep.subr.mxu0 0.0
    %1038 = vmatpush1.msra.mxu0 0.0
    %1039 = vmatprep.subr.mxu0 0.0
    %1040 = vmatpush1.msra.mxu0 0.0
    %1041 = vmatprep.subr.mxu0 0.0
    %1042 = vmatpush1.msra.mxu0 0.0
    %1043 = vmatprep.mubr.f32.mxu0 0.0
    %1044 = vmatmul.mubr.f32.gmra.mrb[0].mxu0 %v974
    %v1045 = vpop.f32.mrb[0].mxu0
    %v1046 = vadd.f32 0.0, %v1045
    %v1047 = vpop.f32.mrb[0].mxu0
    %1048 = vmatprep.mubr.f32.mxu0 0.0
    %1049 = vmatmul.mubr.f32.gmra.mrb[0].mxu0 %v977
    %v1050 = vpop.f32.mrb[0].mxu0
    %v1051 = vadd.f32 0.0, %v1050
    %v1052 = vpop.f32.mrb[0].mxu0
    %1053 = vdwg.mxu0
    %1056 = vrot.lane.b32.xlu0 %v646, 8
    %v1057 = vpop.permute.xlu0 %1056
    %1058 = vrot.lane.b32.xlu0 %v651, 8
    %v1059 = vpop.permute.xlu0 %1058
    %1064 = vrot.lane.b32.xlu0 %v846, 16
    %v1065 = vpop.permute.xlu0 %1064
    %1066 = vrot.lane.b32.xlu0 %v851, 16
    %v1067 = vpop.permute.xlu0 %1066
    %1072 = vrot.lane.b32.xlu0 %v1046, 24
    %v1073 = vpop.permute.xlu0 %1072
    %1074 = vrot.lane.b32.xlu0 %v1051, 24
    %v1075 = vpop.permute.xlu0 %1074
    %v1078 = vsel %vm256, %v446, %v1057
    %v1079 = vsel %vm256, %v451, %v1059
    %v1080 = vsel %vm342, %v1078, %v1065
    %v1081 = vsel %vm342, %v1079, %v1067
    %vm1082 = vcmask 195584
    %v1083 = vsel %vm1082, %v1080, %v1073
    %v1084 = vsel %vm1082, %v1081, %v1075
    %1087 = vrot.lane.b32.xlu0 %v212, 96
    %v1088 = vpop.permute.xlu0 %1087
    %1089 = vrot.lane.b32.xlu0 %v213, 96
    %v1090 = vpop.permute.xlu0 %1089
    %v1092 = vsel %vm256, %v200, 0
    %v1095 = vsel %vm256, %v201, 0
    %v1097 = vsel %vm256, %v1088, 0
    %v1099 = vsel %vm256, %v1090, 0
    %1101 = vmatprep.subr.mxu0 0.0
    %1102 = vmatpush1.xpose.msra.mxu0 %v1097
    %1103 = vmatprep.subr.mxu0 0.0
    %1104 = vmatpush1.xpose.msra.mxu0 %v1099
    %1105 = vmatprep.subr.mxu0 0.0
    %1106 = vmatpush1.xpose.msra.mxu0 0.0
    %1107 = vmatprep.subr.mxu0 0.0
    %1108 = vmatpush1.xpose.msra.mxu0 0.0
    %1109 = vmatprep.subr.mxu0 0.0
    %1110 = vmatpush1.xpose.msra.mxu0 0.0
    %1111 = vmatprep.subr.mxu0 0.0
    %1112 = vmatpush1.xpose.msra.mxu0 0.0
    %1113 = vmatprep.subr.mxu0 0.0
    %1114 = vmatpush1.xpose.msra.mxu0 0.0
    %1115 = vmatprep.subr.mxu0 0.0
    %1116 = vmatpush1.xpose.msra.mxu0 0.0
    %1117 = vmatprep.subr.mxu0 0.0
    %1118 = vmatpush1.xpose.msra.mxu0 0.0
    %1119 = vmatprep.subr.mxu0 0.0
    %1120 = vmatpush1.xpose.msra.mxu0 0.0
    %1121 = vmatprep.subr.mxu0 0.0
    %1122 = vmatpush1.xpose.msra.mxu0 0.0
    %1123 = vmatprep.subr.mxu0 0.0
    %1124 = vmatpush1.xpose.msra.mxu0 0.0
    %1125 = vmatprep.subr.mxu0 0.0
    %1126 = vmatpush1.xpose.msra.mxu0 0.0
    %1127 = vmatprep.subr.mxu0 0.0
    %1128 = vmatpush1.xpose.msra.mxu0 0.0
    %1129 = vmatprep.subr.mxu0 0.0
    %1130 = vmatpush1.xpose.msra.mxu0 0.0
    %1131 = vmatprep.subr.mxu0 0.0
    %1132 = vmatpush1.xpose.msra.mxu0 0.0
    %1133 = vmatprep.subr.mxu0 0.0
    %1134 = vmatpush1.xpose.msra.mxu0 0.0
    %1135 = vmatprep.subr.mxu0 0.0
    %1136 = vmatpush1.xpose.msra.mxu0 0.0
    %1137 = vmatprep.subr.mxu0 0.0
    %1138 = vmatpush1.xpose.msra.mxu0 0.0
    %1139 = vmatprep.subr.mxu0 0.0
    %1140 = vmatpush1.xpose.msra.mxu0 0.0
    %1141 = vmatprep.subr.mxu0 0.0
    %1142 = vmatpush1.xpose.msra.mxu0 0.0
    %1143 = vmatprep.subr.mxu0 0.0
    %1144 = vmatpush1.xpose.msra.mxu0 0.0
    %1145 = vmatprep.subr.mxu0 0.0
    %1146 = vmatpush1.xpose.msra.mxu0 0.0
    %1147 = vmatprep.subr.mxu0 0.0
    %1148 = vmatpush1.xpose.msra.mxu0 0.0
    %1149 = vmatprep.subr.mxu0 0.0
    %1150 = vmatpush1.xpose.msra.mxu0 0.0
    %1151 = vmatprep.subr.mxu0 0.0
    %1152 = vmatpush1.xpose.msra.mxu0 0.0
    %1153 = vmatprep.subr.mxu0 0.0
    %1154 = vmatpush1.xpose.msra.mxu0 0.0
    %1155 = vmatprep.subr.mxu0 0.0
    %1156 = vmatpush1.xpose.msra.mxu0 0.0
    %1157 = vmatprep.subr.mxu0 0.0
    %1158 = vmatpush1.xpose.msra.mxu0 0.0
    %1159 = vmatprep.subr.mxu0 0.0
    %1160 = vmatpush1.xpose.msra.mxu0 0.0
    %1161 = vmatprep.subr.mxu0 0.0
    %1162 = vmatpush1.xpose.msra.mxu0 0.0
    %1163 = vmatprep.subr.mxu0 0.0
    %1164 = vmatpush1.xpose.msra.mxu0 0.0
    %1165 = vmatprep.mubr.f32.mxu0 0.0
    %1166 = vmatmul.mubr.f32.gmra.mrb[0].mxu0 %v1092
    %v1167 = vpop.f32.mrb[0].mxu0
    %v1168 = vadd.f32 0.0, %v1167
    %v1169 = vpop.f32.mrb[0].mxu0
    %1170 = vmatprep.mubr.f32.mxu0 0.0
    %1171 = vmatmul.mubr.f32.gmra.mrb[0].mxu0 %v1095
    %v1172 = vpop.f32.mrb[0].mxu0
    %v1173 = vadd.f32 0.0, %v1172
    %v1174 = vpop.f32.mrb[0].mxu0
    %1175 = vdwg.mxu0
    %v1176 = vsel %vm342, %v1168, -inf
    %1177 = vmax.xlane.f32.xlu0 %v1176
    %v1178 = vpop.xlane.xlu0 %1177
    %v1179 = vsel %vm342, %v1173, -inf
    %1180 = vmax.xlane.f32.xlu0 %v1179
    %v1181 = vpop.xlane.xlu0 %1180
    %v1182 = vsub.f32 %v1168, %v1178
    %v1183 = vsub.f32 %v1173, %v1181
    %v1184 = vmul.f32 %v1182, 1.442695
    %v1185 = vpow.pop %v1184
    %v1186 = vmul.f32 %v1183, 1.442695
    %v1187 = vpow.pop %v1186
    %v1188 = vsel %vm342, %v1185, 0.0
    %1189 = vadd.xlane.f32.xlu0 %v1188
    %v1190 = vpop.xlane.xlu0 %1189
    %v1191 = vsel %vm342, %v1187, 0.0
    %1192 = vadd.xlane.f32.xlu0 %v1191
    %v1193 = vpop.xlane.xlu0 %1192
    %v1194 = vrcp.pop %v1190
    %v1195 = vrcp.pop %v1193
    %v1196 = vmul.f32 %v1185, %v1194
    %v1197 = vmul.f32 %v1187, %v1195
    %1200 = vrot.lane.b32.xlu0 %v248, 64
    %v1201 = vpop.permute.xlu0 %1200
    %1202 = vrot.lane.b32.xlu0 %v249, 64
    %v1203 = vpop.permute.xlu0 %1202
    %v1207 = vsel %vm342, %v1196, 0
    %v1210 = vsel %vm342, %v1197, 0
    %1212 = vmatprep.subr.mxu0 0.0
    %1213 = vmatpush1.msra.mxu0 %v1201
    %1214 = vmatprep.subr.mxu0 0.0
    %1215 = vmatpush1.msra.mxu0 %v1203
    %1216 = vmatprep.subr.mxu0 0.0
    %1217 = vmatpush1.msra.mxu0 0.0
    %1218 = vmatprep.subr.mxu0 0.0
    %1219 = vmatpush1.msra.mxu0 0.0
    %1220 = vmatprep.subr.mxu0 0.0
    %1221 = vmatpush1.msra.mxu0 0.0
    %1222 = vmatprep.subr.mxu0 0.0
    %1223 = vmatpush1.msra.mxu0 0.0
    %1224 = vmatprep.subr.mxu0 0.0
    %1225 = vmatpush1.msra.mxu0 0.0
    %1226 = vmatprep.subr.mxu0 0.0
    %1227 = vmatpush1.msra.mxu0 0.0
    %1228 = vmatprep.subr.mxu0 0.0
    %1229 = vmatpush1.msra.mxu0 0.0
    %1230 = vmatprep.subr.mxu0 0.0
    %1231 = vmatpush1.msra.mxu0 0.0
    %1232 = vmatprep.subr.mxu0 0.0
    %1233 = vmatpush1.msra.mxu0 0.0
    %1234 = vmatprep.subr.mxu0 0.0
    %1235 = vmatpush1.msra.mxu0 0.0
    %1236 = vmatprep.subr.mxu0 0.0
    %1237 = vmatpush1.msra.mxu0 0.0
    %1238 = vmatprep.subr.mxu0 0.0
    %1239 = vmatpush1.msra.mxu0 0.0
    %1240 = vmatprep.subr.mxu0 0.0
    %1241 = vmatpush1.msra.mxu0 0.0
    %1242 = vmatprep.subr.mxu0 0.0
    %1243 = vmatpush1.msra.mxu0 0.0
    %1244 = vmatprep.subr.mxu0 0.0
    %1245 = vmatpush1.msra.mxu0 0.0
    %1246 = vmatprep.subr.mxu0 0.0
    %1247 = vmatpush1.msra.mxu0 0.0
    %1248 = vmatprep.subr.mxu0 0.0
    %1249 = vmatpush1.msra.mxu0 0.0
    %1250 = vmatprep.subr.mxu0 0.0
    %1251 = vmatpush1.msra.mxu0 0.0
    %1252 = vmatprep.subr.mxu0 0.0
    %1253 = vmatpush1.msra.mxu0 0.0
    %1254 = vmatprep.subr.mxu0 0.0
    %1255 = vmatpush1.msra.mxu0 0.0
    %1256 = vmatprep.subr.mxu0 0.0
    %1257 = vmatpush1.msra.mxu0 0.0
    %1258 = vmatprep.subr.mxu0 0.0
    %1259 = vmatpush1.msra.mxu0 0.0
    %1260 = vmatprep.subr.mxu0 0.0
    %1261 = vmatpush1.msra.mxu0 0.0
    %1262 = vmatprep.subr.mxu0 0.0
    %1263 = vmatpush1.msra.mxu0 0.0
    %1264 = vmatprep.subr.mxu0 0.0
    %1265 = vmatpush1.msra.mxu0 0.0
    %1266 = vmatprep.subr.mxu0 0.0
    %1267 = vmatpush1.msra.mxu0 0.0
    %1268 = vmatprep.subr.mxu0 0.0
    %1269 = vmatpush1.msra.mxu0 0.0
    %1270 = vmatprep.subr.mxu0 0.0
    %1271 = vmatpush1.msra.mxu0 0.0
    %1272 = vmatprep.subr.mxu0 0.0
    %1273 = vmatpush1.msra.mxu0 0.0
    %1274 = vmatprep.subr.mxu0 0.0
    %1275 = vmatpush1.msra.mxu0 0.0
    %1276 = vmatprep.mubr.f32.mxu0 0.0
    %1277 = vmatmul.mubr.f32.gmra.mrb[0].mxu0 %v1207
    %v1278 = vpop.f32.mrb[0].mxu0
    %v1279 = vadd.f32 0.0, %v1278
    %v1280 = vpop.f32.mrb[0].mxu0
    %1281 = vmatprep.mubr.f32.mxu0 0.0
    %1282 = vmatmul.mubr.f32.gmra.mrb[0].mxu0 %v1210
    %v1283 = vpop.f32.mrb[0].mxu0
    %v1284 = vadd.f32 0.0, %v1283
    %v1285 = vpop.f32.mrb[0].mxu0
    %1286 = vdwg.mxu0
    %1287 = vrot.lane.b32.xlu0 %v200, 120
    %v1288 = vpop.permute.xlu0 %1287
    %1289 = vrot.lane.b32.xlu0 %v201, 120
    %v1290 = vpop.permute.xlu0 %1289
    %1291 = vrot.lane.b32.xlu0 %v212, 88
    %v1292 = vpop.permute.xlu0 %1291
    %1293 = vrot.lane.b32.xlu0 %v213, 88
    %v1294 = vpop.permute.xlu0 %1293
    %v1295 = vsel %vm256, %v1288, 0
    %v1297 = vsel %vm256, %v1290, 0
    %v1299 = vsel %vm256, %v1292, 0
    %v1301 = vsel %vm256, %v1294, 0
    %1303 = vmatprep.subr.mxu0 0.0
    %1304 = vmatpush1.xpose.msra.mxu0 %v1299
    %1305 = vmatprep.subr.mxu0 0.0
    %1306 = vmatpush1.xpose.msra.mxu0 %v1301
    %1307 = vmatprep.subr.mxu0 0.0
    %1308 = vmatpush1.xpose.msra.mxu0 0.0
    %1309 = vmatprep.subr.mxu0 0.0
    %1310 = vmatpush1.xpose.msra.mxu0 0.0
    %1311 = vmatprep.subr.mxu0 0.0
    %1312 = vmatpush1.xpose.msra.mxu0 0.0
    %1313 = vmatprep.subr.mxu0 0.0
    %1314 = vmatpush1.xpose.msra.mxu0 0.0
    %1315 = vmatprep.subr.mxu0 0.0
    %1316 = vmatpush1.xpose.msra.mxu0 0.0
    %1317 = vmatprep.subr.mxu0 0.0
    %1318 = vmatpush1.xpose.msra.mxu0 0.0
    %1319 = vmatprep.subr.mxu0 0.0
    %1320 = vmatpush1.xpose.msra.mxu0 0.0
    %1321 = vmatprep.subr.mxu0 0.0
    %1322 = vmatpush1.xpose.msra.mxu0 0.0
    %1323 = vmatprep.subr.mxu0 0.0
    %1324 = vmatpush1.xpose.msra.mxu0 0.0
    %1325 = vmatprep.subr.mxu0 0.0
    %1326 = vmatpush1.xpose.msra.mxu0 0.0
    %1327 = vmatprep.subr.mxu0 0.0
    %1328 = vmatpush1.xpose.msra.mxu0 0.0
    %1329 = vmatprep.subr.mxu0 0.0
    %1330 = vmatpush1.xpose.msra.mxu0 0.0
    %1331 = vmatprep.subr.mxu0 0.0
    %1332 = vmatpush1.xpose.msra.mxu0 0.0
    %1333 = vmatprep.subr.mxu0 0.0
    %1334 = vmatpush1.xpose.msra.mxu0 0.0
    %1335 = vmatprep.subr.mxu0 0.0
    %1336 = vmatpush1.xpose.msra.mxu0 0.0
    %1337 = vmatprep.subr.mxu0 0.0
    %1338 = vmatpush1.xpose.msra.mxu0 0.0
    %1339 = vmatprep.subr.mxu0 0.0
    %1340 = vmatpush1.xpose.msra.mxu0 0.0
    %1341 = vmatprep.subr.mxu0 0.0
    %1342 = vmatpush1.xpose.msra.mxu0 0.0
    %1343 = vmatprep.subr.mxu0 0.0
    %1344 = vmatpush1.xpose.msra.mxu0 0.0
    %1345 = vmatprep.subr.mxu0 0.0
    %1346 = vmatpush1.xpose.msra.mxu0 0.0
    %1347 = vmatprep.subr.mxu0 0.0
    %1348 = vmatpush1.xpose.msra.mxu0 0.0
    %1349 = vmatprep.subr.mxu0 0.0
    %1350 = vmatpush1.xpose.msra.mxu0 0.0
    %1351 = vmatprep.subr.mxu0 0.0
    %1352 = vmatpush1.xpose.msra.mxu0 0.0
    %1353 = vmatprep.subr.mxu0 0.0
    %1354 = vmatpush1.xpose.msra.mxu0 0.0
    %1355 = vmatprep.subr.mxu0 0.0
    %1356 = vmatpush1.xpose.msra.mxu0 0.0
    %1357 = vmatprep.subr.mxu0 0.0
    %1358 = vmatpush1.xpose.msra.mxu0 0.0
    %1359 = vmatprep.subr.mxu0 0.0
    %1360 = vmatpush1.xpose.msra.mxu0 0.0
    %1361 = vmatprep.subr.mxu0 0.0
    %1362 = vmatpush1.xpose.msra.mxu0 0.0
    %1363 = vmatprep.subr.mxu0 0.0
    %1364 = vmatpush1.xpose.msra.mxu0 0.0
    %1365 = vmatprep.subr.mxu0 0.0
    %1366 = vmatpush1.xpose.msra.mxu0 0.0
    %1367 = vmatprep.mubr.f32.mxu0 0.0
    %1368 = vmatmul.mubr.f32.gmra.mrb[0].mxu0 %v1295
    %v1369 = vpop.f32.mrb[0].mxu0
    %v1370 = vadd.f32 0.0, %v1369
    %v1371 = vpop.f32.mrb[0].mxu0
    %1372 = vmatprep.mubr.f32.mxu0 0.0
    %1373 = vmatmul.mubr.f32.gmra.mrb[0].mxu0 %v1297
    %v1374 = vpop.f32.mrb[0].mxu0
    %v1375 = vadd.f32 0.0, %v1374
    %v1376 = vpop.f32.mrb[0].mxu0
    %1377 = vdwg.mxu0
    %v1378 = vsel %vm342, %v1370, -inf
    %1379 = vmax.xlane.f32.xlu0 %v1378
    %v1380 = vpop.xlane.xlu0 %1379
    %v1381 = vsel %vm342, %v1375, -inf
    %1382 = vmax.xlane.f32.xlu0 %v1381
    %v1383 = vpop.xlane.xlu0 %1382
    %v1384 = vsub.f32 %v1370, %v1380
    %v1385 = vsub.f32 %v1375, %v1383
    %v1386 = vmul.f32 %v1384, 1.442695
    %v1387 = vpow.pop %v1386
    %v1388 = vmul.f32 %v1385, 1.442695
    %v1389 = vpow.pop %v1388
    %v1390 = vsel %vm342, %v1387, 0.0
    %1391 = vadd.xlane.f32.xlu0 %v1390
    %v1392 = vpop.xlane.xlu0 %1391
    %v1393 = vsel %vm342, %v1389, 0.0
    %1394 = vadd.xlane.f32.xlu0 %v1393
    %v1395 = vpop.xlane.xlu0 %1394
    %v1396 = vrcp.pop %v1392
    %v1397 = vrcp.pop %v1395
    %v1398 = vmul.f32 %v1387, %v1396
    %v1399 = vmul.f32 %v1389, %v1397
    %1400 = vrot.lane.b32.xlu0 %v248, 56
    %v1401 = vpop.permute.xlu0 %1400
    %1402 = vrot.lane.b32.xlu0 %v249, 56
    %v1403 = vpop.permute.xlu0 %1402
    %v1407 = vsel %vm342, %v1398, 0
    %v1410 = vsel %vm342, %v1399, 0
    %1412 = vmatprep.subr.mxu0 0.0
    %1413 = vmatpush1.msra.mxu0 %v1401
    %1414 = vmatprep.subr.mxu0 0.0
    %1415 = vmatpush1.msra.mxu0 %v1403
    %1416 = vmatprep.subr.mxu0 0.0
    %1417 = vmatpush1.msra.mxu0 0.0
    %1418 = vmatprep.subr.mxu0 0.0
    %1419 = vmatpush1.msra.mxu0 0.0
    %1420 = vmatprep.subr.mxu0 0.0
    %1421 = vmatpush1.msra.mxu0 0.0
    %1422 = vmatprep.subr.mxu0 0.0
    %1423 = vmatpush1.msra.mxu0 0.0
    %1424 = vmatprep.subr.mxu0 0.0
    %1425 = vmatpush1.msra.mxu0 0.0
    %1426 = vmatprep.subr.mxu0 0.0
    %1427 = vmatpush1.msra.mxu0 0.0
    %1428 = vmatprep.subr.mxu0 0.0
    %1429 = vmatpush1.msra.mxu0 0.0
    %1430 = vmatprep.subr.mxu0 0.0
    %1431 = vmatpush1.msra.mxu0 0.0
    %1432 = vmatprep.subr.mxu0 0.0
    %1433 = vmatpush1.msra.mxu0 0.0
    %1434 = vmatprep.subr.mxu0 0.0
    %1435 = vmatpush1.msra.mxu0 0.0
    %1436 = vmatprep.subr.mxu0 0.0
    %1437 = vmatpush1.msra.mxu0 0.0
    %1438 = vmatprep.subr.mxu0 0.0
    %1439 = vmatpush1.msra.mxu0 0.0
    %1440 = vmatprep.subr.mxu0 0.0
    %1441 = vmatpush1.msra.mxu0 0.0
    %1442 = vmatprep.subr.mxu0 0.0
    %1443 = vmatpush1.msra.mxu0 0.0
    %1444 = vmatprep.subr.mxu0 0.0
    %1445 = vmatpush1.msra.mxu0 0.0
    %1446 = vmatprep.subr.mxu0 0.0
    %1447 = vmatpush1.msra.mxu0 0.0
    %1448 = vmatprep.subr.mxu0 0.0
    %1449 = vmatpush1.msra.mxu0 0.0
    %1450 = vmatprep.subr.mxu0 0.0
    %1451 = vmatpush1.msra.mxu0 0.0
    %1452 = vmatprep.subr.mxu0 0.0
    %1453 = vmatpush1.msra.mxu0 0.0
    %1454 = vmatprep.subr.mxu0 0.0
    %1455 = vmatpush1.msra.mxu0 0.0
    %1456 = vmatprep.subr.mxu0 0.0
    %1457 = vmatpush1.msra.mxu0 0.0
    %1458 = vmatprep.subr.mxu0 0.0
    %1459 = vmatpush1.msra.mxu0 0.0
    %1460 = vmatprep.subr.mxu0 0.0
    %1461 = vmatpush1.msra.mxu0 0.0
    %1462 = vmatprep.subr.mxu0 0.0
    %1463 = vmatpush1.msra.mxu0 0.0
    %1464 = vmatprep.subr.mxu0 0.0
    %1465 = vmatpush1.msra.mxu0 0.0
    %1466 = vmatprep.subr.mxu0 0.0
    %1467 = vmatpush1.msra.mxu0 0.0
    %1468 = vmatprep.subr.mxu0 0.0
    %1469 = vmatpush1.msra.mxu0 0.0
    %1470 = vmatprep.subr.mxu0 0.0
    %1471 = vmatpush1.msra.mxu0 0.0
    %1472 = vmatprep.subr.mxu0 0.0
    %1473 = vmatpush1.msra.mxu0 0.0
    %1474 = vmatprep.subr.mxu0 0.0
    %1475 = vmatpush1.msra.mxu0 0.0
    %1476 = vmatprep.mubr.f32.mxu0 0.0
    %1477 = vmatmul.mubr.f32.gmra.mrb[0].mxu0 %v1407
    %v1478 = vpop.f32.mrb[0].mxu0
    %v1479 = vadd.f32 0.0, %v1478
    %v1480 = vpop.f32.mrb[0].mxu0
    %1481 = vmatprep.mubr.f32.mxu0 0.0
    %1482 = vmatmul.mubr.f32.gmra.mrb[0].mxu0 %v1410
    %v1483 = vpop.f32.mrb[0].mxu0
    %v1484 = vadd.f32 0.0, %v1483
    %v1485 = vpop.f32.mrb[0].mxu0
    %1486 = vdwg.mxu0
    %1487 = vrot.lane.b32.xlu0 %v200, 112
    %v1488 = vpop.permute.xlu0 %1487
    %1489 = vrot.lane.b32.xlu0 %v201, 112
    %v1490 = vpop.permute.xlu0 %1489
    %1491 = vrot.lane.b32.xlu0 %v212, 80
    %v1492 = vpop.permute.xlu0 %1491
    %1493 = vrot.lane.b32.xlu0 %v213, 80
    %v1494 = vpop.permute.xlu0 %1493
    %v1495 = vsel %vm256, %v1488, 0
    %v1497 = vsel %vm256, %v1490, 0
    %v1499 = vsel %vm256, %v1492, 0
    %v1501 = vsel %vm256, %v1494, 0
    %1503 = vmatprep.subr.mxu0 0.0
    %1504 = vmatpush1.xpose.msra.mxu0 %v1499
    %1505 = vmatprep.subr.mxu0 0.0
    %1506 = vmatpush1.xpose.msra.mxu0 %v1501
    %1507 = vmatprep.subr.mxu0 0.0
    %1508 = vmatpush1.xpose.msra.mxu0 0.0
    %1509 = vmatprep.subr.mxu0 0.0
    %1510 = vmatpush1.xpose.msra.mxu0 0.0
    %1511 = vmatprep.subr.mxu0 0.0
    %1512 = vmatpush1.xpose.msra.mxu0 0.0
    %1513 = vmatprep.subr.mxu0 0.0
    %1514 = vmatpush1.xpose.msra.mxu0 0.0
    %1515 = vmatprep.subr.mxu0 0.0
    %1516 = vmatpush1.xpose.msra.mxu0 0.0
    %1517 = vmatprep.subr.mxu0 0.0
    %1518 = vmatpush1.xpose.msra.mxu0 0.0
    %1519 = vmatprep.subr.mxu0 0.0
    %1520 = vmatpush1.xpose.msra.mxu0 0.0
    %1521 = vmatprep.subr.mxu0 0.0
    %1522 = vmatpush1.xpose.msra.mxu0 0.0
    %1523 = vmatprep.subr.mxu0 0.0
    %1524 = vmatpush1.xpose.msra.mxu0 0.0
    %1525 = vmatprep.subr.mxu0 0.0
    %1526 = vmatpush1.xpose.msra.mxu0 0.0
    %1527 = vmatprep.subr.mxu0 0.0
    %1528 = vmatpush1.xpose.msra.mxu0 0.0
    %1529 = vmatprep.subr.mxu0 0.0
    %1530 = vmatpush1.xpose.msra.mxu0 0.0
    %1531 = vmatprep.subr.mxu0 0.0
    %1532 = vmatpush1.xpose.msra.mxu0 0.0
    %1533 = vmatprep.subr.mxu0 0.0
    %1534 = vmatpush1.xpose.msra.mxu0 0.0
    %1535 = vmatprep.subr.mxu0 0.0
    %1536 = vmatpush1.xpose.msra.mxu0 0.0
    %1537 = vmatprep.subr.mxu0 0.0
    %1538 = vmatpush1.xpose.msra.mxu0 0.0
    %1539 = vmatprep.subr.mxu0 0.0
    %1540 = vmatpush1.xpose.msra.mxu0 0.0
    %1541 = vmatprep.subr.mxu0 0.0
    %1542 = vmatpush1.xpose.msra.mxu0 0.0
    %1543 = vmatprep.subr.mxu0 0.0
    %1544 = vmatpush1.xpose.msra.mxu0 0.0
    %1545 = vmatprep.subr.mxu0 0.0
    %1546 = vmatpush1.xpose.msra.mxu0 0.0
    %1547 = vmatprep.subr.mxu0 0.0
    %1548 = vmatpush1.xpose.msra.mxu0 0.0
    %1549 = vmatprep.subr.mxu0 0.0
    %1550 = vmatpush1.xpose.msra.mxu0 0.0
    %1551 = vmatprep.subr.mxu0 0.0
    %1552 = vmatpush1.xpose.msra.mxu0 0.0
    %1553 = vmatprep.subr.mxu0 0.0
    %1554 = vmatpush1.xpose.msra.mxu0 0.0
    %1555 = vmatprep.subr.mxu0 0.0
    %1556 = vmatpush1.xpose.msra.mxu0 0.0
    %1557 = vmatprep.subr.mxu0 0.0
    %1558 = vmatpush1.xpose.msra.mxu0 0.0
    %1559 = vmatprep.subr.mxu0 0.0
    %1560 = vmatpush1.xpose.msra.mxu0 0.0
    %1561 = vmatprep.subr.mxu0 0.0
    %1562 = vmatpush1.xpose.msra.mxu0 0.0
    %1563 = vmatprep.subr.mxu0 0.0
    %1564 = vmatpush1.xpose.msra.mxu0 0.0
    %1565 = vmatprep.subr.mxu0 0.0
    %1566 = vmatpush1.xpose.msra.mxu0 0.0
    %1567 = vmatprep.mubr.f32.mxu0 0.0
    %1568 = vmatmul.mubr.f32.gmra.mrb[0].mxu0 %v1495
    %v1569 = vpop.f32.mrb[0].mxu0
    %v1570 = vadd.f32 0.0, %v1569
    %v1571 = vpop.f32.mrb[0].mxu0
    %1572 = vmatprep.mubr.f32.mxu0 0.0
    %1573 = vmatmul.mubr.f32.gmra.mrb[0].mxu0 %v1497
    %v1574 = vpop.f32.mrb[0].mxu0
    %v1575 = vadd.f32 0.0, %v1574
    %v1576 = vpop.f32.mrb[0].mxu0
    %1577 = vdwg.mxu0
    %v1578 = vsel %vm342, %v1570, -inf
    %1579 = vmax.xlane.f32.xlu0 %v1578
    %v1580 = vpop.xlane.xlu0 %1579
    %v1581 = vsel %vm342, %v1575, -inf
    %1582 = vmax.xlane.f32.xlu0 %v1581
    %v1583 = vpop.xlane.xlu0 %1582
    %v1584 = vsub.f32 %v1570, %v1580
    %v1585 = vsub.f32 %v1575, %v1583
    %v1586 = vmul.f32 %v1584, 1.442695
    %v1587 = vpow.pop %v1586
    %v1588 = vmul.f32 %v1585, 1.442695
    %v1589 = vpow.pop %v1588
    %v1590 = vsel %vm342, %v1587, 0.0
    %1591 = vadd.xlane.f32.xlu0 %v1590
    %v1592 = vpop.xlane.xlu0 %1591
    %v1593 = vsel %vm342, %v1589, 0.0
    %1594 = vadd.xlane.f32.xlu0 %v1593
    %v1595 = vpop.xlane.xlu0 %1594
    %v1596 = vrcp.pop %v1592
    %v1597 = vrcp.pop %v1595
    %v1598 = vmul.f32 %v1587, %v1596
    %v1599 = vmul.f32 %v1589, %v1597
    %1600 = vrot.lane.b32.xlu0 %v248, 48
    %v1601 = vpop.permute.xlu0 %1600
    %1602 = vrot.lane.b32.xlu0 %v249, 48
    %v1603 = vpop.permute.xlu0 %1602
    %v1607 = vsel %vm342, %v1598, 0
    %v1610 = vsel %vm342, %v1599, 0
    %1612 = vmatprep.subr.mxu0 0.0
    %1613 = vmatpush1.msra.mxu0 %v1601
    %1614 = vmatprep.subr.mxu0 0.0
    %1615 = vmatpush1.msra.mxu0 %v1603
    %1616 = vmatprep.subr.mxu0 0.0
    %1617 = vmatpush1.msra.mxu0 0.0
    %1618 = vmatprep.subr.mxu0 0.0
    %1619 = vmatpush1.msra.mxu0 0.0
    %1620 = vmatprep.subr.mxu0 0.0
    %1621 = vmatpush1.msra.mxu0 0.0
    %1622 = vmatprep.subr.mxu0 0.0
    %1623 = vmatpush1.msra.mxu0 0.0
    %1624 = vmatprep.subr.mxu0 0.0
    %1625 = vmatpush1.msra.mxu0 0.0
    %1626 = vmatprep.subr.mxu0 0.0
    %1627 = vmatpush1.msra.mxu0 0.0
    %1628 = vmatprep.subr.mxu0 0.0
    %1629 = vmatpush1.msra.mxu0 0.0
    %1630 = vmatprep.subr.mxu0 0.0
    %1631 = vmatpush1.msra.mxu0 0.0
    %1632 = vmatprep.subr.mxu0 0.0
    %1633 = vmatpush1.msra.mxu0 0.0
    %1634 = vmatprep.subr.mxu0 0.0
    %1635 = vmatpush1.msra.mxu0 0.0
    %1636 = vmatprep.subr.mxu0 0.0
    %1637 = vmatpush1.msra.mxu0 0.0
    %1638 = vmatprep.subr.mxu0 0.0
    %1639 = vmatpush1.msra.mxu0 0.0
    %1640 = vmatprep.subr.mxu0 0.0
    %1641 = vmatpush1.msra.mxu0 0.0
    %1642 = vmatprep.subr.mxu0 0.0
    %1643 = vmatpush1.msra.mxu0 0.0
    %1644 = vmatprep.subr.mxu0 0.0
    %1645 = vmatpush1.msra.mxu0 0.0
    %1646 = vmatprep.subr.mxu0 0.0
    %1647 = vmatpush1.msra.mxu0 0.0
    %1648 = vmatprep.subr.mxu0 0.0
    %1649 = vmatpush1.msra.mxu0 0.0
    %1650 = vmatprep.subr.mxu0 0.0
    %1651 = vmatpush1.msra.mxu0 0.0
    %1652 = vmatprep.subr.mxu0 0.0
    %1653 = vmatpush1.msra.mxu0 0.0
    %1654 = vmatprep.subr.mxu0 0.0
    %1655 = vmatpush1.msra.mxu0 0.0
    %1656 = vmatprep.subr.mxu0 0.0
    %1657 = vmatpush1.msra.mxu0 0.0
    %1658 = vmatprep.subr.mxu0 0.0
    %1659 = vmatpush1.msra.mxu0 0.0
    %1660 = vmatprep.subr.mxu0 0.0
    %1661 = vmatpush1.msra.mxu0 0.0
    %1662 = vmatprep.subr.mxu0 0.0
    %1663 = vmatpush1.msra.mxu0 0.0
    %1664 = vmatprep.subr.mxu0 0.0
    %1665 = vmatpush1.msra.mxu0 0.0
    %1666 = vmatprep.subr.mxu0 0.0
    %1667 = vmatpush1.msra.mxu0 0.0
    %1668 = vmatprep.subr.mxu0 0.0
    %1669 = vmatpush1.msra.mxu0 0.0
    %1670 = vmatprep.subr.mxu0 0.0
    %1671 = vmatpush1.msra.mxu0 0.0
    %1672 = vmatprep.subr.mxu0 0.0
    %1673 = vmatpush1.msra.mxu0 0.0
    %1674 = vmatprep.subr.mxu0 0.0
    %1675 = vmatpush1.msra.mxu0 0.0
    %1676 = vmatprep.mubr.f32.mxu0 0.0
    %1677 = vmatmul.mubr.f32.gmra.mrb[0].mxu0 %v1607
    %v1678 = vpop.f32.mrb[0].mxu0
    %v1679 = vadd.f32 0.0, %v1678
    %v1680 = vpop.f32.mrb[0].mxu0
    %1681 = vmatprep.mubr.f32.mxu0 0.0
    %1682 = vmatmul.mubr.f32.gmra.mrb[0].mxu0 %v1610
    %v1683 = vpop.f32.mrb[0].mxu0
    %v1684 = vadd.f32 0.0, %v1683
    %v1685 = vpop.f32.mrb[0].mxu0
    %1686 = vdwg.mxu0
    %1687 = vrot.lane.b32.xlu0 %v200, 104
    %v1688 = vpop.permute.xlu0 %1687
    %1689 = vrot.lane.b32.xlu0 %v201, 104
    %v1690 = vpop.permute.xlu0 %1689
    %1691 = vrot.lane.b32.xlu0 %v212, 72
    %v1692 = vpop.permute.xlu0 %1691
    %1693 = vrot.lane.b32.xlu0 %v213, 72
    %v1694 = vpop.permute.xlu0 %1693
    %v1695 = vsel %vm256, %v1688, 0
    %v1697 = vsel %vm256, %v1690, 0
    %v1699 = vsel %vm256, %v1692, 0
    %v1701 = vsel %vm256, %v1694, 0
    %1703 = vmatprep.subr.mxu0 0.0
    %1704 = vmatpush1.xpose.msra.mxu0 %v1699
    %1705 = vmatprep.subr.mxu0 0.0
    %1706 = vmatpush1.xpose.msra.mxu0 %v1701
    %1707 = vmatprep.subr.mxu0 0.0
    %1708 = vmatpush1.xpose.msra.mxu0 0.0
    %1709 = vmatprep.subr.mxu0 0.0
    %1710 = vmatpush1.xpose.msra.mxu0 0.0
    %1711 = vmatprep.subr.mxu0 0.0
    %1712 = vmatpush1.xpose.msra.mxu0 0.0
    %1713 = vmatprep.subr.mxu0 0.0
    %1714 = vmatpush1.xpose.msra.mxu0 0.0
    %1715 = vmatprep.subr.mxu0 0.0
    %1716 = vmatpush1.xpose.msra.mxu0 0.0
    %1717 = vmatprep.subr.mxu0 0.0
    %1718 = vmatpush1.xpose.msra.mxu0 0.0
    %1719 = vmatprep.subr.mxu0 0.0
    %1720 = vmatpush1.xpose.msra.mxu0 0.0
    %1721 = vmatprep.subr.mxu0 0.0
    %1722 = vmatpush1.xpose.msra.mxu0 0.0
    %1723 = vmatprep.subr.mxu0 0.0
    %1724 = vmatpush1.xpose.msra.mxu0 0.0
    %1725 = vmatprep.subr.mxu0 0.0
    %1726 = vmatpush1.xpose.msra.mxu0 0.0
    %1727 = vmatprep.subr.mxu0 0.0
    %1728 = vmatpush1.xpose.msra.mxu0 0.0
    %1729 = vmatprep.subr.mxu0 0.0
    %1730 = vmatpush1.xpose.msra.mxu0 0.0
    %1731 = vmatprep.subr.mxu0 0.0
    %1732 = vmatpush1.xpose.msra.mxu0 0.0
    %1733 = vmatprep.subr.mxu0 0.0
    %1734 = vmatpush1.xpose.msra.mxu0 0.0
    %1735 = vmatprep.subr.mxu0 0.0
    %1736 = vmatpush1.xpose.msra.mxu0 0.0
    %1737 = vmatprep.subr.mxu0 0.0
    %1738 = vmatpush1.xpose.msra.mxu0 0.0
    %1739 = vmatprep.subr.mxu0 0.0
    %1740 = vmatpush1.xpose.msra.mxu0 0.0
    %1741 = vmatprep.subr.mxu0 0.0
    %1742 = vmatpush1.xpose.msra.mxu0 0.0
    %1743 = vmatprep.subr.mxu0 0.0
    %1744 = vmatpush1.xpose.msra.mxu0 0.0
    %1745 = vmatprep.subr.mxu0 0.0
    %1746 = vmatpush1.xpose.msra.mxu0 0.0
    %1747 = vmatprep.subr.mxu0 0.0
    %1748 = vmatpush1.xpose.msra.mxu0 0.0
    %1749 = vmatprep.subr.mxu0 0.0
    %1750 = vmatpush1.xpose.msra.mxu0 0.0
    %1751 = vmatprep.subr.mxu0 0.0
    %1752 = vmatpush1.xpose.msra.mxu0 0.0
    %1753 = vmatprep.subr.mxu0 0.0
    %1754 = vmatpush1.xpose.msra.mxu0 0.0
    %1755 = vmatprep.subr.mxu0 0.0
    %1756 = vmatpush1.xpose.msra.mxu0 0.0
    %1757 = vmatprep.subr.mxu0 0.0
    %1758 = vmatpush1.xpose.msra.mxu0 0.0
    %1759 = vmatprep.subr.mxu0 0.0
    %1760 = vmatpush1.xpose.msra.mxu0 0.0
    %1761 = vmatprep.subr.mxu0 0.0
    %1762 = vmatpush1.xpose.msra.mxu0 0.0
    %1763 = vmatprep.subr.mxu0 0.0
    %1764 = vmatpush1.xpose.msra.mxu0 0.0
    %1765 = vmatprep.subr.mxu0 0.0
    %1766 = vmatpush1.xpose.msra.mxu0 0.0
    %1767 = vmatprep.mubr.f32.mxu0 0.0
    %1768 = vmatmul.mubr.f32.gmra.mrb[0].mxu0 %v1695
    %v1769 = vpop.f32.mrb[0].mxu0
    %v1770 = vadd.f32 0.0, %v1769
    %v1771 = vpop.f32.mrb[0].mxu0
    %1772 = vmatprep.mubr.f32.mxu0 0.0
    %1773 = vmatmul.mubr.f32.gmra.mrb[0].mxu0 %v1697
    %v1774 = vpop.f32.mrb[0].mxu0
    %v1775 = vadd.f32 0.0, %v1774
    %v1776 = vpop.f32.mrb[0].mxu0
    %1777 = vdwg.mxu0
    %v1778 = vsel %vm342, %v1770, -inf
    %1779 = vmax.xlane.f32.xlu0 %v1778
    %v1780 = vpop.xlane.xlu0 %1779
    %v1781 = vsel %vm342, %v1775, -inf
    %1782 = vmax.xlane.f32.xlu0 %v1781
    %v1783 = vpop.xlane.xlu0 %1782
    %v1784 = vsub.f32 %v1770, %v1780
    %v1785 = vsub.f32 %v1775, %v1783
    %v1786 = vmul.f32 %v1784, 1.442695
    %v1787 = vpow.pop %v1786
    %v1788 = vmul.f32 %v1785, 1.442695
    %v1789 = vpow.pop %v1788
    %v1790 = vsel %vm342, %v1787, 0.0
    %1791 = vadd.xlane.f32.xlu0 %v1790
    %v1792 = vpop.xlane.xlu0 %1791
    %v1793 = vsel %vm342, %v1789, 0.0
    %1794 = vadd.xlane.f32.xlu0 %v1793
    %v1795 = vpop.xlane.xlu0 %1794
    %v1796 = vrcp.pop %v1792
    %v1797 = vrcp.pop %v1795
    %v1798 = vmul.f32 %v1787, %v1796
    %v1799 = vmul.f32 %v1789, %v1797
    %1800 = vrot.lane.b32.xlu0 %v248, 40
    %v1801 = vpop.permute.xlu0 %1800
    %1802 = vrot.lane.b32.xlu0 %v249, 40
    %v1803 = vpop.permute.xlu0 %1802
    %v1807 = vsel %vm342, %v1798, 0
    %v1810 = vsel %vm342, %v1799, 0
    %1812 = vmatprep.subr.mxu0 0.0
    %1813 = vmatpush1.msra.mxu0 %v1801
    %1814 = vmatprep.subr.mxu0 0.0
    %1815 = vmatpush1.msra.mxu0 %v1803
    %1816 = vmatprep.subr.mxu0 0.0
    %1817 = vmatpush1.msra.mxu0 0.0
    %1818 = vmatprep.subr.mxu0 0.0
    %1819 = vmatpush1.msra.mxu0 0.0
    %1820 = vmatprep.subr.mxu0 0.0
    %1821 = vmatpush1.msra.mxu0 0.0
    %1822 = vmatprep.subr.mxu0 0.0
    %1823 = vmatpush1.msra.mxu0 0.0
    %1824 = vmatprep.subr.mxu0 0.0
    %1825 = vmatpush1.msra.mxu0 0.0
    %1826 = vmatprep.subr.mxu0 0.0
    %1827 = vmatpush1.msra.mxu0 0.0
    %1828 = vmatprep.subr.mxu0 0.0
    %1829 = vmatpush1.msra.mxu0 0.0
    %1830 = vmatprep.subr.mxu0 0.0
    %1831 = vmatpush1.msra.mxu0 0.0
    %1832 = vmatprep.subr.mxu0 0.0
    %1833 = vmatpush1.msra.mxu0 0.0
    %1834 = vmatprep.subr.mxu0 0.0
    %1835 = vmatpush1.msra.mxu0 0.0
    %1836 = vmatprep.subr.mxu0 0.0
    %1837 = vmatpush1.msra.mxu0 0.0
    %1838 = vmatprep.subr.mxu0 0.0
    %1839 = vmatpush1.msra.mxu0 0.0
    %1840 = vmatprep.subr.mxu0 0.0
    %1841 = vmatpush1.msra.mxu0 0.0
    %1842 = vmatprep.subr.mxu0 0.0
    %1843 = vmatpush1.msra.mxu0 0.0
    %1844 = vmatprep.subr.mxu0 0.0
    %1845 = vmatpush1.msra.mxu0 0.0
    %1846 = vmatprep.subr.mxu0 0.0
    %1847 = vmatpush1.msra.mxu0 0.0
    %1848 = vmatprep.subr.mxu0 0.0
    %1849 = vmatpush1.msra.mxu0 0.0
    %1850 = vmatprep.subr.mxu0 0.0
    %1851 = vmatpush1.msra.mxu0 0.0
    %1852 = vmatprep.subr.mxu0 0.0
    %1853 = vmatpush1.msra.mxu0 0.0
    %1854 = vmatprep.subr.mxu0 0.0
    %1855 = vmatpush1.msra.mxu0 0.0
    %1856 = vmatprep.subr.mxu0 0.0
    %1857 = vmatpush1.msra.mxu0 0.0
    %1858 = vmatprep.subr.mxu0 0.0
    %1859 = vmatpush1.msra.mxu0 0.0
    %1860 = vmatprep.subr.mxu0 0.0
    %1861 = vmatpush1.msra.mxu0 0.0
    %1862 = vmatprep.subr.mxu0 0.0
    %1863 = vmatpush1.msra.mxu0 0.0
    %1864 = vmatprep.subr.mxu0 0.0
    %1865 = vmatpush1.msra.mxu0 0.0
    %1866 = vmatprep.subr.mxu0 0.0
    %1867 = vmatpush1.msra.mxu0 0.0
    %1868 = vmatprep.subr.mxu0 0.0
    %1869 = vmatpush1.msra.mxu0 0.0
    %1870 = vmatprep.subr.mxu0 0.0
    %1871 = vmatpush1.msra.mxu0 0.0
    %1872 = vmatprep.subr.mxu0 0.0
    %1873 = vmatpush1.msra.mxu0 0.0
    %1874 = vmatprep.subr.mxu0 0.0
    %1875 = vmatpush1.msra.mxu0 0.0
    %1876 = vmatprep.mubr.f32.mxu0 0.0
    %1877 = vmatmul.mubr.f32.gmra.mrb[0].mxu0 %v1807
    %v1878 = vpop.f32.mrb[0].mxu0
    %v1879 = vadd.f32 0.0, %v1878
    %v1880 = vpop.f32.mrb[0].mxu0
    %1881 = vmatprep.mubr.f32.mxu0 0.0
    %1882 = vmatmul.mubr.f32.gmra.mrb[0].mxu0 %v1810
    %v1883 = vpop.f32.mrb[0].mxu0
    %v1884 = vadd.f32 0.0, %v1883
    %v1885 = vpop.f32.mrb[0].mxu0
    %1886 = vdwg.mxu0
    %1889 = vrot.lane.b32.xlu0 %v1479, 8
    %v1890 = vpop.permute.xlu0 %1889
    %1891 = vrot.lane.b32.xlu0 %v1484, 8
    %v1892 = vpop.permute.xlu0 %1891
    %1897 = vrot.lane.b32.xlu0 %v1679, 16
    %v1898 = vpop.permute.xlu0 %1897
    %1899 = vrot.lane.b32.xlu0 %v1684, 16
    %v1900 = vpop.permute.xlu0 %1899
    %1905 = vrot.lane.b32.xlu0 %v1879, 24
    %v1906 = vpop.permute.xlu0 %1905
    %1907 = vrot.lane.b32.xlu0 %v1884, 24
    %v1908 = vpop.permute.xlu0 %1907
    %v1911 = vsel %vm256, %v1279, %v1890
    %v1912 = vsel %vm256, %v1284, %v1892
    %v1913 = vsel %vm342, %v1911, %v1898
    %v1914 = vsel %vm342, %v1912, %v1900
    %v1915 = vsel %vm1082, %v1913, %v1906
    %v1916 = vsel %vm1082, %v1914, %v1908
    %v1917 = vlaneseq
    %v1918 = vshrl.u32 %v1917, 7
    %v1919 = vsub.s32 0, %v1918
    %v1920 = vrot.slane %v82, %v1919
    %1925 = vrot.lane.b32.xlu0 %v88, 32
    %v1926 = vpop.permute.xlu0 %1925
    %1927 = vrot.lane.b32.xlu0 %v89, 32
    %v1928 = vpop.permute.xlu0 %1927
    %1929 = vrot.lane.b32.xlu0 %v90, 32
    %v1930 = vpop.permute.xlu0 %1929
    %1931 = vrot.lane.b32.xlu0 %v91, 32
    %v1932 = vpop.permute.xlu0 %1931
    %v1938 = vsel %vm96, %v1083, 0
    %v1941 = vsel %vm96, %v1084, 0
    %v1944 = vsel %vm96, %v1915, 0
    %v1947 = vsel %vm96, %v1916, 0
    %1949 = vmatprep.subr.mxu0 0.0
    %1950 = vmatpush1.msra.mxu0 %v1926
    %1951 = vmatprep.subr.mxu0 0.0
    %1952 = vmatpush1.msra.mxu0 %v1928
    %1953 = vmatprep.subr.mxu0 0.0
    %1954 = vmatpush1.msra.mxu0 %v1930
    %1955 = vmatprep.subr.mxu0 0.0
    %1956 = vmatpush1.msra.mxu0 %v1932
    %1957 = vmatprep.subr.mxu0 0.0
    %1958 = vmatpush1.msra.mxu0 0.0
    %1959 = vmatprep.subr.mxu0 0.0
    %1960 = vmatpush1.msra.mxu0 0.0
    %1961 = vmatprep.subr.mxu0 0.0
    %1962 = vmatpush1.msra.mxu0 0.0
    %1963 = vmatprep.subr.mxu0 0.0
    %1964 = vmatpush1.msra.mxu0 0.0
    %1965 = vmatprep.subr.mxu0 0.0
    %1966 = vmatpush1.msra.mxu0 0.0
    %1967 = vmatprep.subr.mxu0 0.0
    %1968 = vmatpush1.msra.mxu0 0.0
    %1969 = vmatprep.subr.mxu0 0.0
    %1970 = vmatpush1.msra.mxu0 0.0
    %1971 = vmatprep.subr.mxu0 0.0
    %1972 = vmatpush1.msra.mxu0 0.0
    %1973 = vmatprep.subr.mxu0 0.0
    %1974 = vmatpush1.msra.mxu0 0.0
    %1975 = vmatprep.subr.mxu0 0.0
    %1976 = vmatpush1.msra.mxu0 0.0
    %1977 = vmatprep.subr.mxu0 0.0
    %1978 = vmatpush1.msra.mxu0 0.0
    %1979 = vmatprep.subr.mxu0 0.0
    %1980 = vmatpush1.msra.mxu0 0.0
    %1981 = vmatprep.subr.mxu0 0.0
    %1982 = vmatpush1.msra.mxu0 0.0
    %1983 = vmatprep.subr.mxu0 0.0
    %1984 = vmatpush1.msra.mxu0 0.0
    %1985 = vmatprep.subr.mxu0 0.0
    %1986 = vmatpush1.msra.mxu0 0.0
    %1987 = vmatprep.subr.mxu0 0.0
    %1988 = vmatpush1.msra.mxu0 0.0
    %1989 = vmatprep.subr.mxu0 0.0
    %1990 = vmatpush1.msra.mxu0 0.0
    %1991 = vmatprep.subr.mxu0 0.0
    %1992 = vmatpush1.msra.mxu0 0.0
    %1993 = vmatprep.subr.mxu0 0.0
    %1994 = vmatpush1.msra.mxu0 0.0
    %1995 = vmatprep.subr.mxu0 0.0
    %1996 = vmatpush1.msra.mxu0 0.0
    %1997 = vmatprep.subr.mxu0 0.0
    %1998 = vmatpush1.msra.mxu0 0.0
    %1999 = vmatprep.subr.mxu0 0.0
    %2000 = vmatpush1.msra.mxu0 0.0
    %2001 = vmatprep.subr.mxu0 0.0
    %2002 = vmatpush1.msra.mxu0 0.0
    %2003 = vmatprep.subr.mxu0 0.0
    %2004 = vmatpush1.msra.mxu0 0.0
    %2005 = vmatprep.subr.mxu0 0.0
    %2006 = vmatpush1.msra.mxu0 0.0
    %2007 = vmatprep.subr.mxu0 0.0
    %2008 = vmatpush1.msra.mxu0 0.0
    %2009 = vmatprep.subr.mxu0 0.0
    %2010 = vmatpush1.msra.mxu0 0.0
    %2011 = vmatprep.subr.mxu0 0.0
    %2012 = vmatpush1.msra.mxu0 0.0
    %2013 = vmatprep.mubr.f32.mxu0 0.0
    %2014 = vmatmul.mubr.f32.gmra.mrb[0].mxu0 %v1938
    %v2015 = vpop.f32.mrb[0].mxu0
    %v2016 = vadd.f32 %v1920, %v2015
    %v2017 = vpop.f32.mrb[0].mxu0
    %2018 = vmatprep.mubr.f32.mxu0 0.0
    %2019 = vmatmul.mubr.f32.gmra.mrb[0].mxu0 %v1941
    %v2020 = vpop.f32.mrb[0].mxu0
    %v2021 = vadd.f32 %v1920, %v2020
    %v2022 = vpop.f32.mrb[0].mxu0
    %2023 = vmatprep.mubr.f32.mxu0 0.0
    %2024 = vmatmul.mubr.f32.gmra.mrb[0].mxu0 %v1944
    %v2025 = vpop.f32.mrb[0].mxu0
    %v2026 = vadd.f32 %v1920, %v2025
    %v2027 = vpop.f32.mrb[0].mxu0
    %2028 = vmatprep.mubr.f32.mxu0 0.0
    %2029 = vmatmul.mubr.f32.gmra.mrb[0].mxu0 %v1947
    %v2030 = vpop.f32.mrb[0].mxu0
    %v2031 = vadd.f32 %v1920, %v2030
    %v2032 = vpop.f32.mrb[0].mxu0
    %2033 = vdwg.mxu0
    %v2034 = vadd.f32 %v71, %v2016
    %v2035 = vadd.f32 %v72, %v2021
    %v2036 = vadd.f32 %v73, %v2026
    %v2037 = vadd.f32 %v74, %v2031
    %v2038 = vsel %vm96, %v2034, 0.0
    %2039 = vadd.xlane.f32.xlu0 %v2038
    %v2040 = vpop.xlane.xlu0 %2039
    %v2041 = vsel %vm96, %v2035, 0.0
    %2042 = vadd.xlane.f32.xlu0 %v2041
    %v2043 = vpop.xlane.xlu0 %2042
    %v2044 = vsel %vm96, %v2036, 0.0
    %2045 = vadd.xlane.f32.xlu0 %v2044
    %v2046 = vpop.xlane.xlu0 %2045
    %v2047 = vsel %vm96, %v2037, 0.0
    %2048 = vadd.xlane.f32.xlu0 %v2047
    %v2049 = vpop.xlane.xlu0 %2048
    %v2050 = vrcp.pop 32.0
    %v2051 = vmul.f32 %v2040, %v2050
    %v2052 = vmul.f32 %v2043, %v2050
    %v2053 = vmul.f32 %v2046, %v2050
    %v2054 = vmul.f32 %v2049, %v2050
    %v2055 = vsub.f32 %v2034, %v2051
    %v2056 = vsub.f32 %v2035, %v2052
    %v2057 = vsub.f32 %v2036, %v2053
    %v2058 = vsub.f32 %v2037, %v2054
    %v2059 = vmul.f32 %v2055, %v2055
    %v2060 = vmul.f32 %v2056, %v2056
    %v2061 = vmul.f32 %v2057, %v2057
    %v2062 = vmul.f32 %v2058, %v2058
    %v2063 = vsel %vm96, %v2059, 0.0
    %2064 = vadd.xlane.f32.xlu0 %v2063
    %v2065 = vpop.xlane.xlu0 %2064
    %v2066 = vsel %vm96, %v2060, 0.0
    %2067 = vadd.xlane.f32.xlu0 %v2066
    %v2068 = vpop.xlane.xlu0 %2067
    %v2069 = vsel %vm96, %v2061, 0.0
    %2070 = vadd.xlane.f32.xlu0 %v2069
    %v2071 = vpop.xlane.xlu0 %2070
    %v2072 = vsel %vm96, %v2062, 0.0
    %2073 = vadd.xlane.f32.xlu0 %v2072
    %v2074 = vpop.xlane.xlu0 %2073
    %v2075 = vmul.f32 %v2065, %v2050
    %v2076 = vmul.f32 %v2068, %v2050
    %v2077 = vmul.f32 %v2071, %v2050
    %v2078 = vmul.f32 %v2074, %v2050
    %v2079 = vadd.f32 %v2075, 1e-05
    %v2080 = vadd.f32 %v2076, 1e-05
    %v2081 = vadd.f32 %v2077, 1e-05
    %v2082 = vadd.f32 %v2078, 1e-05
    %v2083 = vrsqrt.pop %v2079
    %v2084 = vrsqrt.pop %v2080
    %v2085 = vrsqrt.pop %v2081
    %v2086 = vrsqrt.pop %v2082
    %v2087 = vmul.f32 %v2055, %v2083
    %v2088 = vmul.f32 %v2056, %v2084
    %v2089 = vmul.f32 %v2057, %v2085
    %v2090 = vmul.f32 %v2058, %v2086
    %v2091 = vlaneseq
    %v2092 = vshrl.u32 %v2091, 7
    %v2093 = vsub.s32 0, %v2092
    %v2094 = vrot.slane %v83, %v2093
    %v2095 = vmul.f32 %v2087, %v2094
    %v2096 = vmul.f32 %v2088, %v2094
    %v2097 = vmul.f32 %v2089, %v2094
    %v2098 = vmul.f32 %v2090, %v2094
    %v2099 = vlaneseq
    %v2100 = vshrl.u32 %v2099, 7
    %v2101 = vsub.s32 0, %v2100
    %v2102 = vrot.slane %v84, %v2101
    %v2103 = vadd.f32 %v2095, %v2102
    %v2104 = vadd.f32 %v2096, %v2102
    %v2105 = vadd.f32 %v2097, %v2102
    %v2106 = vadd.f32 %v2098, %v2102
    %v2107 = vld [vmem:[%s4] sm:$0xff]
    %v2108 = vld [vmem:[%s4 + $0x8] sm:$0xff]
    %v2109 = vld [vmem:[%s4 + $0x10] sm:$0xff]
    %v2110 = vld [vmem:[%s4 + $0x18] sm:$0xff]
    %v2111 = vld [vmem:[%s7] sm:$0x1]
    %v2113 = vlaneseq
    %v2114 = vshrl.u32 %v2113, 7
    %v2115 = vsub.s32 0, %v2114
    %v2116 = vrot.slane %v2111, %v2115
    %v2119 = vsel %vm96, %v2103, 0
    %v2122 = vsel %vm96, %v2104, 0
    %v2125 = vsel %vm96, %v2105, 0
    %v2128 = vsel %vm96, %v2106, 0
    %2130 = vmatprep.subr.mxu0 0.0
    %2131 = vmatpush1.msra.mxu0 %v2107
    %2132 = vmatprep.subr.mxu0 0.0
    %2133 = vmatpush1.msra.mxu0 %v2108
    %2134 = vmatprep.subr.mxu0 0.0
    %2135 = vmatpush1.msra.mxu0 %v2109
    %2136 = vmatprep.subr.mxu0 0.0
    %2137 = vmatpush1.msra.mxu0 %v2110
    %2138 = vmatprep.subr.mxu0 0.0
    %2139 = vmatpush1.msra.mxu0 0.0
    %2140 = vmatprep.subr.mxu0 0.0
    %2141 = vmatpush1.msra.mxu0 0.0
    %2142 = vmatprep.subr.mxu0 0.0
    %2143 = vmatpush1.msra.mxu0 0.0
    %2144 = vmatprep.subr.mxu0 0.0
    %2145 = vmatpush1.msra.mxu0 0.0
    %2146 = vmatprep.subr.mxu0 0.0
    %2147 = vmatpush1.msra.mxu0 0.0
    %2148 = vmatprep.subr.mxu0 0.0
    %2149 = vmatpush1.msra.mxu0 0.0
    %2150 = vmatprep.subr.mxu0 0.0
    %2151 = vmatpush1.msra.mxu0 0.0
    %2152 = vmatprep.subr.mxu0 0.0
    %2153 = vmatpush1.msra.mxu0 0.0
    %2154 = vmatprep.subr.mxu0 0.0
    %2155 = vmatpush1.msra.mxu0 0.0
    %2156 = vmatprep.subr.mxu0 0.0
    %2157 = vmatpush1.msra.mxu0 0.0
    %2158 = vmatprep.subr.mxu0 0.0
    %2159 = vmatpush1.msra.mxu0 0.0
    %2160 = vmatprep.subr.mxu0 0.0
    %2161 = vmatpush1.msra.mxu0 0.0
    %2162 = vmatprep.subr.mxu0 0.0
    %2163 = vmatpush1.msra.mxu0 0.0
    %2164 = vmatprep.subr.mxu0 0.0
    %2165 = vmatpush1.msra.mxu0 0.0
    %2166 = vmatprep.subr.mxu0 0.0
    %2167 = vmatpush1.msra.mxu0 0.0
    %2168 = vmatprep.subr.mxu0 0.0
    %2169 = vmatpush1.msra.mxu0 0.0
    %2170 = vmatprep.subr.mxu0 0.0
    %2171 = vmatpush1.msra.mxu0 0.0
    %2172 = vmatprep.subr.mxu0 0.0
    %2173 = vmatpush1.msra.mxu0 0.0
    %2174 = vmatprep.subr.mxu0 0.0
    %2175 = vmatpush1.msra.mxu0 0.0
    %2176 = vmatprep.subr.mxu0 0.0
    %2177 = vmatpush1.msra.mxu0 0.0
    %2178 = vmatprep.subr.mxu0 0.0
    %2179 = vmatpush1.msra.mxu0 0.0
    %2180 = vmatprep.subr.mxu0 0.0
    %2181 = vmatpush1.msra.mxu0 0.0
    %2182 = vmatprep.subr.mxu0 0.0
    %2183 = vmatpush1.msra.mxu0 0.0
    %2184 = vmatprep.subr.mxu0 0.0
    %2185 = vmatpush1.msra.mxu0 0.0
    %2186 = vmatprep.subr.mxu0 0.0
    %2187 = vmatpush1.msra.mxu0 0.0
    %2188 = vmatprep.subr.mxu0 0.0
    %2189 = vmatpush1.msra.mxu0 0.0
    %2190 = vmatprep.subr.mxu0 0.0
    %2191 = vmatpush1.msra.mxu0 0.0
    %2192 = vmatprep.subr.mxu0 0.0
    %2193 = vmatpush1.msra.mxu0 0.0
    %2194 = vmatprep.mubr.f32.mxu0 0.0
    %2195 = vmatmul.mubr.f32.gmra.mrb[0].mxu0 %v2119
    %v2196 = vpop.f32.mrb[0].mxu0
    %v2197 = vadd.f32 %v2116, %v2196
    %v2198 = vpop.f32.mrb[0].mxu0
    %2199 = vmatprep.mubr.f32.mxu0 0.0
    %2200 = vmatmul.mubr.f32.gmra.mrb[0].mxu0 %v2122
    %v2201 = vpop.f32.mrb[0].mxu0
    %v2202 = vadd.f32 %v2116, %v2201
    %v2203 = vpop.f32.mrb[0].mxu0
    %2204 = vmatprep.mubr.f32.mxu0 0.0
    %2205 = vmatmul.mubr.f32.gmra.mrb[0].mxu0 %v2125
    %v2206 = vpop.f32.mrb[0].mxu0
    %v2207 = vadd.f32 %v2116, %v2206
    %v2208 = vpop.f32.mrb[0].mxu0
    %2209 = vmatprep.mubr.f32.mxu0 0.0
    %2210 = vmatmul.mubr.f32.gmra.mrb[0].mxu0 %v2128
    %v2211 = vpop.f32.mrb[0].mxu0
    %v2212 = vadd.f32 %v2116, %v2211
    %v2213 = vpop.f32.mrb[0].mxu0
    %2214 = vdwg.mxu0
    %v2215 = vmax.f32 %v2197, 0.0
    %v2216 = vmax.f32 %v2202, 0.0
    %v2217 = vmax.f32 %v2207, 0.0
    %v2218 = vmax.f32 %v2212, 0.0
    %v2219 = vld [vmem:[%s5] sm:$0xff]
    %v2220 = vld [vmem:[%s5 + $0x8] sm:$0xff]
    %v2221 = vld [vmem:[%s5 + $0x10] sm:$0xff]
    %v2222 = vld [vmem:[%s5 + $0x18] sm:$0xff]
    %v2223 = vld [vmem:[%s5 + $0x20] sm:$0xff]
    %v2224 = vld [vmem:[%s5 + $0x28] sm:$0xff]
    %v2225 = vld [vmem:[%s5 + $0x30] sm:$0xff]
    %v2226 = vld [vmem:[%s5 + $0x38] sm:$0xff]
    %v2227 = vlaneseq
    %v2228 = vshrl.u32 %v2227, 7
    %v2229 = vsub.s32 0, %v2228
    %v2230 = vrot.slane %v85, %v2229
    %vm2231 = vcmask 523264
    %v2233 = vsel %vm2231, %v2215, 0
    %v2236 = vsel %vm2231, %v2216, 0
    %v2239 = vsel %vm2231, %v2217, 0
    %v2242 = vsel %vm2231, %v2218, 0
    %2244 = vmatprep.subr.mxu0 0.0
    %2245 = vmatpush1.msra.mxu0 %v2219
    %2246 = vmatprep.subr.mxu0 0.0
    %2247 = vmatpush1.msra.mxu0 %v2220
    %2248 = vmatprep.subr.mxu0 0.0
    %2249 = vmatpush1.msra.mxu0 %v2221
    %2250 = vmatprep.subr.mxu0 0.0
    %2251 = vmatpush1.msra.mxu0 %v2222
    %2252 = vmatprep.subr.mxu0 0.0
    %2253 = vmatpush1.msra.mxu0 %v2223
    %2254 = vmatprep.subr.mxu0 0.0
    %2255 = vmatpush1.msra.mxu0 %v2224
    %2256 = vmatprep.subr.mxu0 0.0
    %2257 = vmatpush1.msra.mxu0 %v2225
    %2258 = vmatprep.subr.mxu0 0.0
    %2259 = vmatpush1.msra.mxu0 %v2226
    %2260 = vmatprep.subr.mxu0 0.0
    %2261 = vmatpush1.msra.mxu0 0.0
    %2262 = vmatprep.subr.mxu0 0.0
    %2263 = vmatpush1.msra.mxu0 0.0
    %2264 = vmatprep.subr.mxu0 0.0
    %2265 = vmatpush1.msra.mxu0 0.0
    %2266 = vmatprep.subr.mxu0 0.0
    %2267 = vmatpush1.msra.mxu0 0.0
    %2268 = vmatprep.subr.mxu0 0.0
    %2269 = vmatpush1.msra.mxu0 0.0
    %2270 = vmatprep.subr.mxu0 0.0
    %2271 = vmatpush1.msra.mxu0 0.0
    %2272 = vmatprep.subr.mxu0 0.0
    %2273 = vmatpush1.msra.mxu0 0.0
    %2274 = vmatprep.subr.mxu0 0.0
    %2275 = vmatpush1.msra.mxu0 0.0
    %2276 = vmatprep.subr.mxu0 0.0
    %2277 = vmatpush1.msra.mxu0 0.0
    %2278 = vmatprep.subr.mxu0 0.0
    %2279 = vmatpush1.msra.mxu0 0.0
    %2280 = vmatprep.subr.mxu0 0.0
    %2281 = vmatpush1.msra.mxu0 0.0
    %2282 = vmatprep.subr.mxu0 0.0
    %2283 = vmatpush1.msra.mxu0 0.0
    %2284 = vmatprep.subr.mxu0 0.0
    %2285 = vmatpush1.msra.mxu0 0.0
    %2286 = vmatprep.subr.mxu0 0.0
    %2287 = vmatpush1.msra.mxu0 0.0
    %2288 = vmatprep.subr.mxu0 0.0
    %2289 = vmatpush1.msra.mxu0 0.0
    %2290 = vmatprep.subr.mxu0 0.0
    %2291 = vmatpush1.msra.mxu0 0.0
    %2292 = vmatprep.subr.mxu0 0.0
    %2293 = vmatpush1.msra.mxu0 0.0
    %2294 = vmatprep.subr.mxu0 0.0
    %2295 = vmatpush1.msra.mxu0 0.0
    %2296 = vmatprep.subr.mxu0 0.0
    %2297 = vmatpush1.msra.mxu0 0.0
    %2298 = vmatprep.subr.mxu0 0.0
    %2299 = vmatpush1.msra.mxu0 0.0
    %2300 = vmatprep.subr.mxu0 0.0
    %2301 = vmatpush1.msra.mxu0 0.0
    %2302 = vmatprep.subr.mxu0 0.0
    %2303 = vmatpush1.msra.mxu0 0.0
    %2304 = vmatprep.subr.mxu0 0.0
    %2305 = vmatpush1.msra.mxu0 0.0
    %2306 = vmatprep.subr.mxu0 0.0
    %2307 = vmatpush1.msra.mxu0 0.0
    %2308 = vmatprep.mubr.f32.mxu0 0.0
    %2309 = vmatmul.mubr.f32.gmra.mrb[0].mxu0 %v2233
    %v2310 = vpop.f32.mrb[0].mxu0
    %v2311 = vadd.f32 %v2230, %v2310
    %v2312 = vpop.f32.mrb[0].mxu0
    %2313 = vmatprep.mubr.f32.mxu0 0.0
    %2314 = vmatmul.mubr.f32.gmra.mrb[0].mxu0 %v2236
    %v2315 = vpop.f32.mrb[0].mxu0
    %v2316 = vadd.f32 %v2230, %v2315
    %v2317 = vpop.f32.mrb[0].mxu0
    %2318 = vmatprep.mubr.f32.mxu0 0.0
    %2319 = vmatmul.mubr.f32.gmra.mrb[0].mxu0 %v2239
    %v2320 = vpop.f32.mrb[0].mxu0
    %v2321 = vadd.f32 %v2230, %v2320
    %v2322 = vpop.f32.mrb[0].mxu0
    %2323 = vmatprep.mubr.f32.mxu0 0.0
    %2324 = vmatmul.mubr.f32.gmra.mrb[0].mxu0 %v2242
    %v2325 = vpop.f32.mrb[0].mxu0
    %v2326 = vadd.f32 %v2230, %v2325
    %v2327 = vpop.f32.mrb[0].mxu0
    %2328 = vdwg.mxu0
    %v2329 = vadd.f32 %v2103, %v2311
    %v2330 = vadd.f32 %v2104, %v2316
    %v2331 = vadd.f32 %v2105, %v2321
    %v2332 = vadd.f32 %v2106, %v2326
    %v2333 = vsel %vm96, %v2329, 0.0
    %2334 = vadd.xlane.f32.xlu0 %v2333
    %v2335 = vpop.xlane.xlu0 %2334
    %v2336 = vsel %vm96, %v2330, 0.0
    %2337 = vadd.xlane.f32.xlu0 %v2336
    %v2338 = vpop.xlane.xlu0 %2337
    %v2339 = vsel %vm96, %v2331, 0.0
    %2340 = vadd.xlane.f32.xlu0 %v2339
    %v2341 = vpop.xlane.xlu0 %2340
    %v2342 = vsel %vm96, %v2332, 0.0
    %2343 = vadd.xlane.f32.xlu0 %v2342
    %v2344 = vpop.xlane.xlu0 %2343
    %v2345 = vmul.f32 %v2335, %v2050
    %v2346 = vmul.f32 %v2338, %v2050
    %v2347 = vmul.f32 %v2341, %v2050
    %v2348 = vmul.f32 %v2344, %v2050
    %v2349 = vsub.f32 %v2329, %v2345
    %v2350 = vsub.f32 %v2330, %v2346
    %v2351 = vsub.f32 %v2331, %v2347
    %v2352 = vsub.f32 %v2332, %v2348
    %v2353 = vmul.f32 %v2349, %v2349
    %v2354 = vmul.f32 %v2350, %v2350
    %v2355 = vmul.f32 %v2351, %v2351
    %v2356 = vmul.f32 %v2352, %v2352
    %v2357 = vsel %vm96, %v2353, 0.0
    %2358 = vadd.xlane.f32.xlu0 %v2357
    %v2359 = vpop.xlane.xlu0 %2358
    %v2360 = vsel %vm96, %v2354, 0.0
    %2361 = vadd.xlane.f32.xlu0 %v2360
    %v2362 = vpop.xlane.xlu0 %2361
    %v2363 = vsel %vm96, %v2355, 0.0
    %2364 = vadd.xlane.f32.xlu0 %v2363
    %v2365 = vpop.xlane.xlu0 %2364
    %v2366 = vsel %vm96, %v2356, 0.0
    %2367 = vadd.xlane.f32.xlu0 %v2366
    %v2368 = vpop.xlane.xlu0 %2367
    %v2369 = vmul.f32 %v2359, %v2050
    %v2370 = vmul.f32 %v2362, %v2050
    %v2371 = vmul.f32 %v2365, %v2050
    %v2372 = vmul.f32 %v2368, %v2050
    %v2373 = vadd.f32 %v2369, 1e-05
    %v2374 = vadd.f32 %v2370, 1e-05
    %v2375 = vadd.f32 %v2371, 1e-05
    %v2376 = vadd.f32 %v2372, 1e-05
    %v2377 = vrsqrt.pop %v2373
    %v2378 = vrsqrt.pop %v2374
    %v2379 = vrsqrt.pop %v2375
    %v2380 = vrsqrt.pop %v2376
    %v2381 = vmul.f32 %v2349, %v2377
    %v2382 = vmul.f32 %v2350, %v2378
    %v2383 = vmul.f32 %v2351, %v2379
    %v2384 = vmul.f32 %v2352, %v2380
    %v2385 = vlaneseq
    %v2386 = vshrl.u32 %v2385, 7
    %v2387 = vsub.s32 0, %v2386
    %v2388 = vrot.slane %v86, %v2387
    %v2389 = vmul.f32 %v2381, %v2388
    %v2390 = vmul.f32 %v2382, %v2388
    %v2391 = vmul.f32 %v2383, %v2388
    %v2392 = vmul.f32 %v2384, %v2388
    %v2393 = vlaneseq
    %v2394 = vshrl.u32 %v2393, 7
    %v2395 = vsub.s32 0, %v2394
    %v2396 = vrot.slane %v87, %v2395
    %v2397 = vadd.f32 %v2389, %v2396
    %v2398 = vadd.f32 %v2390, %v2396
    %v2399 = vadd.f32 %v2391, %v2396
    %v2400 = vadd.f32 %v2392, %v2396
    %v2401 = vld [vmem:[#allocation7 + $0x9] sm:$0x1]
    %v2402 = vld [vmem:[#allocation7 + $0xa] sm:$0x1]
    %v2403 = vld [vmem:[#allocation7 + $0xb] sm:$0x1]
    %v2404 = vld [vmem:[#allocation7 + $0xc] sm:$0x1]
    %v2405 = vld [vmem:[#allocation7 + $0xd] sm:$0x1]
    %v2406 = vld [vmem:[#allocation7 + $0xe] sm:$0x1]
    %v2407 = vld [vmem:[#allocation7 + $0xf] sm:$0x1]
    %v2408 = vld [vmem:[#allocation7 + $0x10] sm:$0x1]
    %v2409 = vld [vmem:[#allocation7 + $0x11] sm:$0x1]
    %s2410 = scalar_lea.vmem %s3, 32
    %v2411 = vld [vmem:[%s2410] sm:$0xff]
    %v2412 = vld [vmem:[%s2410 + $0x8] sm:$0xff]
    %v2413 = vld [vmem:[%s2410 + $0x10] sm:$0xff]
    %v2414 = vld [vmem:[%s2410 + $0x18] sm:$0xff]
    %v2415 = vadd.f32 %v2397, %v75
    %v2416 = vadd.f32 %v2398, %v76
    %v2417 = vadd.f32 %v2399, %v77
    %v2418 = vadd.f32 %v2400, %v78
    %v2420 = vsel %vm96, %v2415, 0
    %v2423 = vsel %vm96, %v2416, 0
    %v2426 = vsel %vm96, %v2417, 0
    %v2429 = vsel %vm96, %v2418, 0
    %2431 = vmatprep.subr.mxu0 0.0
    %2432 = vmatpush1.msra.mxu0 %v2411
    %2433 = vmatprep.subr.mxu0 0.0
    %2434 = vmatpush1.msra.mxu0 %v2412
    %2435 = vmatprep.subr.mxu0 0.0
    %2436 = vmatpush1.msra.mxu0 %v2413
    %2437 = vmatprep.subr.mxu0 0.0
    %2438 = vmatpush1.msra.mxu0 %v2414
    %2439 = vmatprep.subr.mxu0 0.0
    %2440 = vmatpush1.msra.mxu0 0.0
    %2441 = vmatprep.subr.mxu0 0.0
    %2442 = vmatpush1.msra.mxu0 0.0
    %2443 = vmatprep.subr.mxu0 0.0
    %2444 = vmatpush1.msra.mxu0 0.0
    %2445 = vmatprep.subr.mxu0 0.0
    %2446 = vmatpush1.msra.mxu0 0.0
    %2447 = vmatprep.subr.mxu0 0.0
    %2448 = vmatpush1.msra.mxu0 0.0
    %2449 = vmatprep.subr.mxu0 0.0
    %2450 = vmatpush1.msra.mxu0 0.0
    %2451 = vmatprep.subr.mxu0 0.0
    %2452 = vmatpush1.msra.mxu0 0.0
    %2453 = vmatprep.subr.mxu0 0.0
    %2454 = vmatpush1.msra.mxu0 0.0
    %2455 = vmatprep.subr.mxu0 0.0
    %2456 = vmatpush1.msra.mxu0 0.0
    %2457 = vmatprep.subr.mxu0 0.0
    %2458 = vmatpush1.msra.mxu0 0.0
    %2459 = vmatprep.subr.mxu0 0.0
    %2460 = vmatpush1.msra.mxu0 0.0
    %2461 = vmatprep.subr.mxu0 0.0
    %2462 = vmatpush1.msra.mxu0 0.0
    %2463 = vmatprep.subr.mxu0 0.0
    %2464 = vmatpush1.msra.mxu0 0.0
    %2465 = vmatprep.subr.mxu0 0.0
    %2466 = vmatpush1.msra.mxu0 0.0
    %2467 = vmatprep.subr.mxu0 0.0
    %2468 = vmatpush1.msra.mxu0 0.0
    %2469 = vmatprep.subr.mxu0 0.0
    %2470 = vmatpush1.msra.mxu0 0.0
    %2471 = vmatprep.subr.mxu0 0.0
    %2472 = vmatpush1.msra.mxu0 0.0
    %2473 = vmatprep.subr.mxu0 0.0
    %2474 = vmatpush1.msra.mxu0 0.0
    %2475 = vmatprep.subr.mxu0 0.0
    %2476 = vmatpush1.msra.mxu0 0.0
    %2477 = vmatprep.subr.mxu0 0.0
    %2478 = vmatpush1.msra.mxu0 0.0
    %2479 = vmatprep.subr.mxu0 0.0
    %2480 = vmatpush1.msra.mxu0 0.0
    %2481 = vmatprep.subr.mxu0 0.0
    %2482 = vmatpush1.msra.mxu0 0.0
    %2483 = vmatprep.subr.mxu0 0.0
    %2484 = vmatpush1.msra.mxu0 0.0
    %2485 = vmatprep.subr.mxu0 0.0
    %2486 = vmatpush1.msra.mxu0 0.0
    %2487 = vmatprep.subr.mxu0 0.0
    %2488 = vmatpush1.msra.mxu0 0.0
    %2489 = vmatprep.subr.mxu0 0.0
    %2490 = vmatpush1.msra.mxu0 0.0
    %2491 = vmatprep.subr.mxu0 0.0
    %2492 = vmatpush1.msra.mxu0 0.0
    %2493 = vmatprep.subr.mxu0 0.0
    %2494 = vmatpush1.msra.mxu0 0.0
    %2495 = vmatprep.mubr.f32.mxu0 0.0
    %2496 = vmatmul.mubr.f32.gmra.mrb[0].mxu0 %v2420
    %v2497 = vpop.f32.mrb[0].mxu0
    %v2498 = vadd.f32 0.0, %v2497
    %v2499 = vpop.f32.mrb[0].mxu0
    %2500 = vmatprep.mubr.f32.mxu0 0.0
    %2501 = vmatmul.mubr.f32.gmra.mrb[0].mxu0 %v2423
    %v2502 = vpop.f32.mrb[0].mxu0
    %v2503 = vadd.f32 0.0, %v2502
    %v2504 = vpop.f32.mrb[0].mxu0
    %2505 = vmatprep.mubr.f32.mxu0 0.0
    %2506 = vmatmul.mubr.f32.gmra.mrb[0].mxu0 %v2426
    %v2507 = vpop.f32.mrb[0].mxu0
    %v2508 = vadd.f32 0.0, %v2507
    %v2509 = vpop.f32.mrb[0].mxu0
    %2510 = vmatprep.mubr.f32.mxu0 0.0
    %2511 = vmatmul.mubr.f32.gmra.mrb[0].mxu0 %v2429
    %v2512 = vpop.f32.mrb[0].mxu0
    %v2513 = vadd.f32 0.0, %v2512
    %v2514 = vpop.f32.mrb[0].mxu0
    %2515 = vdwg.mxu0
    %v2516 = vlaneseq
    %v2517 = vshrl.u32 %v2516, 7
    %v2518 = vsub.s32 0, %v2517
    %v2519 = vrot.slane %v2401, %v2518
    %v2520 = vadd.f32 %v2498, %v2519
    %v2521 = vadd.f32 %v2503, %v2519
    %v2522 = vadd.f32 %v2508, %v2519
    %v2523 = vadd.f32 %v2513, %v2519
    %v2524 = vlaneseq
    %v2525 = vshrl.u32 %v2524, 7
    %v2526 = vsub.s32 0, %v2525
    %v2527 = vrot.slane %v2402, %v2526
    %2529 = vrot.lane.b32.xlu0 %v2527, 32
    %v2530 = vpop.permute.xlu0 %2529
    %v2532 = vadd.f32 %v2498, %v2530
    %v2533 = vadd.f32 %v2503, %v2530
    %v2534 = vadd.f32 %v2508, %v2530
    %v2535 = vadd.f32 %v2513, %v2530
    %v2536 = vlaneseq
    %v2537 = vshrl.u32 %v2536, 7
    %v2538 = vsub.s32 0, %v2537
    %v2539 = vrot.slane %v2403, %v2538
    %2541 = vrot.lane.b32.xlu0 %v2539, 64
    %v2542 = vpop.permute.xlu0 %2541
    %v2544 = vadd.f32 %v2498, %v2542
    %v2545 = vadd.f32 %v2503, %v2542
    %v2546 = vadd.f32 %v2508, %v2542
    %v2547 = vadd.f32 %v2513, %v2542
    %s2548 = scalar_lea.vmem %s2, 32
    %v2549 = vld [vmem:[%s2548] sm:$0xff]
    %v2550 = vld [vmem:[%s2548 + $0x8] sm:$0xff]
    %v2551 = vld [vmem:[%s2548 + $0x10] sm:$0xff]
    %v2552 = vld [vmem:[%s2548 + $0x18] sm:$0xff]
    %2557 = vrot.lane.b32.xlu0 %v2549, 64
    %v2558 = vpop.permute.xlu0 %2557
    %2559 = vrot.lane.b32.xlu0 %v2550, 64
    %v2560 = vpop.permute.xlu0 %2559
    %2561 = vrot.lane.b32.xlu0 %v2551, 64
    %v2562 = vpop.permute.xlu0 %2561
    %2563 = vrot.lane.b32.xlu0 %v2552, 64
    %v2564 = vpop.permute.xlu0 %2563
    %v2569 = vsub.f32 %v2544, %v2558
    %v2570 = vsub.f32 %v2545, %v2560
    %v2571 = vsub.f32 %v2546, %v2562
    %v2572 = vsub.f32 %v2547, %v2564
    %2575 = vrot.lane.b32.xlu0 %v2532, 96
    %v2576 = vpop.permute.xlu0 %2575
    %2577 = vrot.lane.b32.xlu0 %v2533, 96
    %v2578 = vpop.permute.xlu0 %2577
    %v2580 = vsel %vm256, %v2520, 0
    %v2583 = vsel %vm256, %v2521, 0
    %v2585 = vsel %vm256, %v2576, 0
    %v2587 = vsel %vm256, %v2578, 0
    %2589 = vmatprep.subr.mxu0 0.0
    %2590 = vmatpush1.xpose.msra.mxu0 %v2585
    %2591 = vmatprep.subr.mxu0 0.0
    %2592 = vmatpush1.xpose.msra.mxu0 %v2587
    %2593 = vmatprep.subr.mxu0 0.0
    %2594 = vmatpush1.xpose.msra.mxu0 0.0
    %2595 = vmatprep.subr.mxu0 0.0
    %2596 = vmatpush1.xpose.msra.mxu0 0.0
    %2597 = vmatprep.subr.mxu0 0.0
    %2598 = vmatpush1.xpose.msra.mxu0 0.0
    %2599 = vmatprep.subr.mxu0 0.0
    %2600 = vmatpush1.xpose.msra.mxu0 0.0
    %2601 = vmatprep.subr.mxu0 0.0
    %2602 = vmatpush1.xpose.msra.mxu0 0.0
    %2603 = vmatprep.subr.mxu0 0.0
    %2604 = vmatpush1.xpose.msra.mxu0 0.0
    %2605 = vmatprep.subr.mxu0 0.0
    %2606 = vmatpush1.xpose.msra.mxu0 0.0
    %2607 = vmatprep.subr.mxu0 0.0
    %2608 = vmatpush1.xpose.msra.mxu0 0.0
    %2609 = vmatprep.subr.mxu0 0.0
    %2610 = vmatpush1.xpose.msra.mxu0 0.0
    %2611 = vmatprep.subr.mxu0 0.0
    %2612 = vmatpush1.xpose.msra.mxu0 0.0
    %2613 = vmatprep.subr.mxu0 0.0
    %2614 = vmatpush1.xpose.msra.mxu0 0.0
    %2615 = vmatprep.subr.mxu0 0.0
    %2616 = vmatpush1.xpose.msra.mxu0 0.0
    %2617 = vmatprep.subr.mxu0 0.0
    %2618 = vmatpush1.xpose.msra.mxu0 0.0
    %2619 = vmatprep.subr.mxu0 0.0
    %2620 = vmatpush1.xpose.msra.mxu0 0.0
    %2621 = vmatprep.subr.mxu0 0.0
    %2622 = vmatpush1.xpose.msra.mxu0 0.0
    %2623 = vmatprep.subr.mxu0 0.0
    %2624 = vmatpush1.xpose.msra.mxu0 0.0
    %2625 = vmatprep.subr.mxu0 0.0
    %2626 = vmatpush1.xpose.msra.mxu0 0.0
    %2627 = vmatprep.subr.mxu0 0.0
    %2628 = vmatpush1.xpose.msra.mxu0 0.0
    %2629 = vmatprep.subr.mxu0 0.0
    %2630 = vmatpush1.xpose.msra.mxu0 0.0
    %2631 = vmatprep.subr.mxu0 0.0
    %2632 = vmatpush1.xpose.msra.mxu0 0.0
    %2633 = vmatprep.subr.mxu0 0.0
    %2634 = vmatpush1.xpose.msra.mxu0 0.0
    %2635 = vmatprep.subr.mxu0 0.0
    %2636 = vmatpush1.xpose.msra.mxu0 0.0
    %2637 = vmatprep.subr.mxu0 0.0
    %2638 = vmatpush1.xpose.msra.mxu0 0.0
    %2639 = vmatprep.subr.mxu0 0.0
    %2640 = vmatpush1.xpose.msra.mxu0 0.0
    %2641 = vmatprep.subr.mxu0 0.0
    %2642 = vmatpush1.xpose.msra.mxu0 0.0
    %2643 = vmatprep.subr.mxu0 0.0
    %2644 = vmatpush1.xpose.msra.mxu0 0.0
    %2645 = vmatprep.subr.mxu0 0.0
    %2646 = vmatpush1.xpose.msra.mxu0 0.0
    %2647 = vmatprep.subr.mxu0 0.0
    %2648 = vmatpush1.xpose.msra.mxu0 0.0
    %2649 = vmatprep.subr.mxu0 0.0
    %2650 = vmatpush1.xpose.msra.mxu0 0.0
    %2651 = vmatprep.subr.mxu0 0.0
    %2652 = vmatpush1.xpose.msra.mxu0 0.0
    %2653 = vmatprep.mubr.f32.mxu0 0.0
    %2654 = vmatmul.mubr.f32.gmra.mrb[0].mxu0 %v2580
    %v2655 = vpop.f32.mrb[0].mxu0
    %v2656 = vadd.f32 0.0, %v2655
    %v2657 = vpop.f32.mrb[0].mxu0
    %2658 = vmatprep.mubr.f32.mxu0 0.0
    %2659 = vmatmul.mubr.f32.gmra.mrb[0].mxu0 %v2583
    %v2660 = vpop.f32.mrb[0].mxu0
    %v2661 = vadd.f32 0.0, %v2660
    %v2662 = vpop.f32.mrb[0].mxu0
    %2663 = vdwg.mxu0
    %v2664 = vsel %vm342, %v2656, -inf
    %2665 = vmax.xlane.f32.xlu0 %v2664
    %v2666 = vpop.xlane.xlu0 %2665
    %v2667 = vsel %vm342, %v2661, -inf
    %2668 = vmax.xlane.f32.xlu0 %v2667
    %v2669 = vpop.xlane.xlu0 %2668
    %v2670 = vsub.f32 %v2656, %v2666
    %v2671 = vsub.f32 %v2661, %v2669
    %v2672 = vmul.f32 %v2670, 1.442695
    %v2673 = vpow.pop %v2672
    %v2674 = vmul.f32 %v2671, 1.442695
    %v2675 = vpow.pop %v2674
    %v2676 = vsel %vm342, %v2673, 0.0
    %2677 = vadd.xlane.f32.xlu0 %v2676
    %v2678 = vpop.xlane.xlu0 %2677
    %v2679 = vsel %vm342, %v2675, 0.0
    %2680 = vadd.xlane.f32.xlu0 %v2679
    %v2681 = vpop.xlane.xlu0 %2680
    %v2682 = vrcp.pop %v2678
    %v2683 = vrcp.pop %v2681
    %v2684 = vmul.f32 %v2673, %v2682
    %v2685 = vmul.f32 %v2675, %v2683
    %2688 = vrot.lane.b32.xlu0 %v2569, 64
    %v2689 = vpop.permute.xlu0 %2688
    %2690 = vrot.lane.b32.xlu0 %v2570, 64
    %v2691 = vpop.permute.xlu0 %2690
    %v2695 = vsel %vm342, %v2684, 0
    %v2698 = vsel %vm342, %v2685, 0
    %2700 = vmatprep.subr.mxu0 0.0
    %2701 = vmatpush1.msra.mxu0 %v2689
    %2702 = vmatprep.subr.mxu0 0.0
    %2703 = vmatpush1.msra.mxu0 %v2691
    %2704 = vmatprep.subr.mxu0 0.0
    %2705 = vmatpush1.msra.mxu0 0.0
    %2706 = vmatprep.subr.mxu0 0.0
    %2707 = vmatpush1.msra.mxu0 0.0
    %2708 = vmatprep.subr.mxu0 0.0
    %2709 = vmatpush1.msra.mxu0 0.0
    %2710 = vmatprep.subr.mxu0 0.0
    %2711 = vmatpush1.msra.mxu0 0.0
    %2712 = vmatprep.subr.mxu0 0.0
    %2713 = vmatpush1.msra.mxu0 0.0
    %2714 = vmatprep.subr.mxu0 0.0
    %2715 = vmatpush1.msra.mxu0 0.0
    %2716 = vmatprep.subr.mxu0 0.0
    %2717 = vmatpush1.msra.mxu0 0.0
    %2718 = vmatprep.subr.mxu0 0.0
    %2719 = vmatpush1.msra.mxu0 0.0
    %2720 = vmatprep.subr.mxu0 0.0
    %2721 = vmatpush1.msra.mxu0 0.0
    %2722 = vmatprep.subr.mxu0 0.0
    %2723 = vmatpush1.msra.mxu0 0.0
    %2724 = vmatprep.subr.mxu0 0.0
    %2725 = vmatpush1.msra.mxu0 0.0
    %2726 = vmatprep.subr.mxu0 0.0
    %2727 = vmatpush1.msra.mxu0 0.0
    %2728 = vmatprep.subr.mxu0 0.0
    %2729 = vmatpush1.msra.mxu0 0.0
    %2730 = vmatprep.subr.mxu0 0.0
    %2731 = vmatpush1.msra.mxu0 0.0
    %2732 = vmatprep.subr.mxu0 0.0
    %2733 = vmatpush1.msra.mxu0 0.0
    %2734 = vmatprep.subr.mxu0 0.0
    %2735 = vmatpush1.msra.mxu0 0.0
    %2736 = vmatprep.subr.mxu0 0.0
    %2737 = vmatpush1.msra.mxu0 0.0
    %2738 = vmatprep.subr.mxu0 0.0
    %2739 = vmatpush1.msra.mxu0 0.0
    %2740 = vmatprep.subr.mxu0 0.0
    %2741 = vmatpush1.msra.mxu0 0.0
    %2742 = vmatprep.subr.mxu0 0.0
    %2743 = vmatpush1.msra.mxu0 0.0
    %2744 = vmatprep.subr.mxu0 0.0
    %2745 = vmatpush1.msra.mxu0 0.0
    %2746 = vmatprep.subr.mxu0 0.0
    %2747 = vmatpush1.msra.mxu0 0.0
    %2748 = vmatprep.subr.mxu0 0.0
    %2749 = vmatpush1.msra.mxu0 0.0
    %2750 = vmatprep.subr.mxu0 0.0
    %2751 = vmatpush1.msra.mxu0 0.0
    %2752 = vmatprep.subr.mxu0 0.0
    %2753 = vmatpush1.msra.mxu0 0.0
    %2754 = vmatprep.subr.mxu0 0.0
    %2755 = vmatpush1.msra.mxu0 0.0
    %2756 = vmatprep.subr.mxu0 0.0
    %2757 = vmatpush1.msra.mxu0 0.0
    %2758 = vmatprep.subr.mxu0 0.0
    %2759 = vmatpush1.msra.mxu0 0.0
    %2760 = vmatprep.subr.mxu0 0.0
    %2761 = vmatpush1.msra.mxu0 0.0
    %2762 = vmatprep.subr.mxu0 0.0
    %2763 = vmatpush1.msra.mxu0 0.0
    %2764 = vmatprep.mubr.f32.mxu0 0.0
    %2765 = vmatmul.mubr.f32.gmra.mrb[0].mxu0 %v2695
    %v2766 = vpop.f32.mrb[0].mxu0
    %v2767 = vadd.f32 0.0, %v2766
    %v2768 = vpop.f32.mrb[0].mxu0
    %2769 = vmatprep.mubr.f32.mxu0 0.0
    %2770 = vmatmul.mubr.f32.gmra.mrb[0].mxu0 %v2698
    %v2771 = vpop.f32.mrb[0].mxu0
    %v2772 = vadd.f32 0.0, %v2771
    %v2773 = vpop.f32.mrb[0].mxu0
    %2774 = vdwg.mxu0
    %2775 = vrot.lane.b32.xlu0 %v2520, 120
    %v2776 = vpop.permute.xlu0 %2775
    %2777 = vrot.lane.b32.xlu0 %v2521, 120
    %v2778 = vpop.permute.xlu0 %2777
    %2779 = vrot.lane.b32.xlu0 %v2532, 88
    %v2780 = vpop.permute.xlu0 %2779
    %2781 = vrot.lane.b32.xlu0 %v2533, 88
    %v2782 = vpop.permute.xlu0 %2781
    %v2783 = vsel %vm256, %v2776, 0
    %v2785 = vsel %vm256, %v2778, 0
    %v2787 = vsel %vm256, %v2780, 0
    %v2789 = vsel %vm256, %v2782, 0
    %2791 = vmatprep.subr.mxu0 0.0
    %2792 = vmatpush1.xpose.msra.mxu0 %v2787
    %2793 = vmatprep.subr.mxu0 0.0
    %2794 = vmatpush1.xpose.msra.mxu0 %v2789
    %2795 = vmatprep.subr.mxu0 0.0
    %2796 = vmatpush1.xpose.msra.mxu0 0.0
    %2797 = vmatprep.subr.mxu0 0.0
    %2798 = vmatpush1.xpose.msra.mxu0 0.0
    %2799 = vmatprep.subr.mxu0 0.0
    %2800 = vmatpush1.xpose.msra.mxu0 0.0
    %2801 = vmatprep.subr.mxu0 0.0
    %2802 = vmatpush1.xpose.msra.mxu0 0.0
    %2803 = vmatprep.subr.mxu0 0.0
    %2804 = vmatpush1.xpose.msra.mxu0 0.0
    %2805 = vmatprep.subr.mxu0 0.0
    %2806 = vmatpush1.xpose.msra.mxu0 0.0
    %2807 = vmatprep.subr.mxu0 0.0
    %2808 = vmatpush1.xpose.msra.mxu0 0.0
    %2809 = vmatprep.subr.mxu0 0.0
    %2810 = vmatpush1.xpose.msra.mxu0 0.0
    %2811 = vmatprep.subr.mxu0 0.0
    %2812 = vmatpush1.xpose.msra.mxu0 0.0
    %2813 = vmatprep.subr.mxu0 0.0
    %2814 = vmatpush1.xpose.msra.mxu0 0.0
    %2815 = vmatprep.subr.mxu0 0.0
    %2816 = vmatpush1.xpose.msra.mxu0 0.0
    %2817 = vmatprep.subr.mxu0 0.0
    %2818 = vmatpush1.xpose.msra.mxu0 0.0
    %2819 = vmatprep.subr.mxu0 0.0
    %2820 = vmatpush1.xpose.msra.mxu0 0.0
    %2821 = vmatprep.subr.mxu0 0.0
    %2822 = vmatpush1.xpose.msra.mxu0 0.0
    %2823 = vmatprep.subr.mxu0 0.0
    %2824 = vmatpush1.xpose.msra.mxu0 0.0
    %2825 = vmatprep.subr.mxu0 0.0
    %2826 = vmatpush1.xpose.msra.mxu0 0.0
    %2827 = vmatprep.subr.mxu0 0.0
    %2828 = vmatpush1.xpose.msra.mxu0 0.0
    %2829 = vmatprep.subr.mxu0 0.0
    %2830 = vmatpush1.xpose.msra.mxu0 0.0
    %2831 = vmatprep.subr.mxu0 0.0
    %2832 = vmatpush1.xpose.msra.mxu0 0.0
    %2833 = vmatprep.subr.mxu0 0.0
    %2834 = vmatpush1.xpose.msra.mxu0 0.0
    %2835 = vmatprep.subr.mxu0 0.0
    %2836 = vmatpush1.xpose.msra.mxu0 0.0
    %2837 = vmatprep.subr.mxu0 0.0
    %2838 = vmatpush1.xpose.msra.mxu0 0.0
    %2839 = vmatprep.subr.mxu0 0.0
    %2840 = vmatpush1.xpose.msra.mxu0 0.0
    %2841 = vmatprep.subr.mxu0 0.0
    %2842 = vmatpush1.xpose.msra.mxu0 0.0
    %2843 = vmatprep.subr.mxu0 0.0
    %2844 = vmatpush1.xpose.msra.mxu0 0.0
    %2845 = vmatprep.subr.mxu0 0.0
    %2846 = vmatpush1.xpose.msra.mxu0 0.0
    %2847 = vmatprep.subr.mxu0 0.0
    %2848 = vmatpush1.xpose.msra.mxu0 0.0
    %2849 = vmatprep.subr.mxu0 0.0
    %2850 = vmatpush1.xpose.msra.mxu0 0.0
    %2851 = vmatprep.subr.mxu0 0.0
    %2852 = vmatpush1.xpose.msra.mxu0 0.0
    %2853 = vmatprep.subr.mxu0 0.0
    %2854 = vmatpush1.xpose.msra.mxu0 0.0
    %2855 = vmatprep.mubr.f32.mxu0 0.0
    %2856 = vmatmul.mubr.f32.gmra.mrb[0].mxu0 %v2783
    %v2857 = vpop.f32.mrb[0].mxu0
    %v2858 = vadd.f32 0.0, %v2857
    %v2859 = vpop.f32.mrb[0].mxu0
    %2860 = vmatprep.mubr.f32.mxu0 0.0
    %2861 = vmatmul.mubr.f32.gmra.mrb[0].mxu0 %v2785
    %v2862 = vpop.f32.mrb[0].mxu0
    %v2863 = vadd.f32 0.0, %v2862
    %v2864 = vpop.f32.mrb[0].mxu0
    %2865 = vdwg.mxu0
    %v2866 = vsel %vm342, %v2858, -inf
    %2867 = vmax.xlane.f32.xlu0 %v2866
    %v2868 = vpop.xlane.xlu0 %2867
    %v2869 = vsel %vm342, %v2863, -inf
    %2870 = vmax.xlane.f32.xlu0 %v2869
    %v2871 = vpop.xlane.xlu0 %2870
    %v2872 = vsub.f32 %v2858, %v2868
    %v2873 = vsub.f32 %v2863, %v2871
    %v2874 = vmul.f32 %v2872, 1.442695
    %v2875 = vpow.pop %v2874
    %v2876 = vmul.f32 %v2873, 1.442695
    %v2877 = vpow.pop %v2876
    %v2878 = vsel %vm342, %v2875, 0.0
    %2879 = vadd.xlane.f32.xlu0 %v2878
    %v2880 = vpop.xlane.xlu0 %2879
    %v2881 = vsel %vm342, %v2877, 0.0
    %2882 = vadd.xlane.f32.xlu0 %v2881
    %v2883 = vpop.xlane.xlu0 %2882
    %v2884 = vrcp.pop %v2880
    %v2885 = vrcp.pop %v2883
    %v2886 = vmul.f32 %v2875, %v2884
    %v2887 = vmul.f32 %v2877, %v2885
    %2888 = vrot.lane.b32.xlu0 %v2569, 56
    %v2889 = vpop.permute.xlu0 %2888
    %2890 = vrot.lane.b32.xlu0 %v2570, 56
    %v2891 = vpop.permute.xlu0 %2890
    %v2895 = vsel %vm342, %v2886, 0
    %v2898 = vsel %vm342, %v2887, 0
    %2900 = vmatprep.subr.mxu0 0.0
    %2901 = vmatpush1.msra.mxu0 %v2889
    %2902 = vmatprep.subr.mxu0 0.0
    %2903 = vmatpush1.msra.mxu0 %v2891
    %2904 = vmatprep.subr.mxu0 0.0
    %2905 = vmatpush1.msra.mxu0 0.0
    %2906 = vmatprep.subr.mxu0 0.0
    %2907 = vmatpush1.msra.mxu0 0.0
    %2908 = vmatprep.subr.mxu0 0.0
    %2909 = vmatpush1.msra.mxu0 0.0
    %2910 = vmatprep.subr.mxu0 0.0
    %2911 = vmatpush1.msra.mxu0 0.0
    %2912 = vmatprep.subr.mxu0 0.0
    %2913 = vmatpush1.msra.mxu0 0.0
    %2914 = vmatprep.subr.mxu0 0.0
    %2915 = vmatpush1.msra.mxu0 0.0
    %2916 = vmatprep.subr.mxu0 0.0
    %2917 = vmatpush1.msra.mxu0 0.0
    %2918 = vmatprep.subr.mxu0 0.0
    %2919 = vmatpush1.msra.mxu0 0.0
    %2920 = vmatprep.subr.mxu0 0.0
    %2921 = vmatpush1.msra.mxu0 0.0
    %2922 = vmatprep.subr.mxu0 0.0
    %2923 = vmatpush1.msra.mxu0 0.0
    %2924 = vmatprep.subr.mxu0 0.0
    %2925 = vmatpush1.msra.mxu0 0.0
    %2926 = vmatprep.subr.mxu0 0.0
    %2927 = vmatpush1.msra.mxu0 0.0
    %2928 = vmatprep.subr.mxu0 0.0
    %2929 = vmatpush1.msra.mxu0 0.0
    %2930 = vmatprep.subr.mxu0 0.0
    %2931 = vmatpush1.msra.mxu0 0.0
    %2932 = vmatprep.subr.mxu0 0.0
    %2933 = vmatpush1.msra.mxu0 0.0
    %2934 = vmatprep.subr.mxu0 0.0
    %2935 = vmatpush1.msra.mxu0 0.0
    %2936 = vmatprep.subr.mxu0 0.0
    %2937 = vmatpush1.msra.mxu0 0.0
    %2938 = vmatprep.subr.mxu0 0.0
    %2939 = vmatpush1.msra.mxu0 0.0
    %2940 = vmatprep.subr.mxu0 0.0
    %2941 = vmatpush1.msra.mxu0 0.0
    %2942 = vmatprep.subr.mxu0 0.0
    %2943 = vmatpush1.msra.mxu0 0.0
    %2944 = vmatprep.subr.mxu0 0.0
    %2945 = vmatpush1.msra.mxu0 0.0
    %2946 = vmatprep.subr.mxu0 0.0
    %2947 = vmatpush1.msra.mxu0 0.0
    %2948 = vmatprep.subr.mxu0 0.0
    %2949 = vmatpush1.msra.mxu0 0.0
    %2950 = vmatprep.subr.mxu0 0.0
    %2951 = vmatpush1.msra.mxu0 0.0
    %2952 = vmatprep.subr.mxu0 0.0
    %2953 = vmatpush1.msra.mxu0 0.0
    %2954 = vmatprep.subr.mxu0 0.0
    %2955 = vmatpush1.msra.mxu0 0.0
    %2956 = vmatprep.subr.mxu0 0.0
    %2957 = vmatpush1.msra.mxu0 0.0
    %2958 = vmatprep.subr.mxu0 0.0
    %2959 = vmatpush1.msra.mxu0 0.0
    %2960 = vmatprep.subr.mxu0 0.0
    %2961 = vmatpush1.msra.mxu0 0.0
    %2962 = vmatprep.subr.mxu0 0.0
    %2963 = vmatpush1.msra.mxu0 0.0
    %2964 = vmatprep.mubr.f32.mxu0 0.0
    %2965 = vmatmul.mubr.f32.gmra.mrb[0].mxu0 %v2895
    %v2966 = vpop.f32.mrb[0].mxu0
    %v2967 = vadd.f32 0.0, %v2966
    %v2968 = vpop.f32.mrb[0].mxu0
    %2969 = vmatprep.mubr.f32.mxu0 0.0
    %2970 = vmatmul.mubr.f32.gmra.mrb[0].mxu0 %v2898
    %v2971 = vpop.f32.mrb[0].mxu0
    %v2972 = vadd.f32 0.0, %v2971
    %v2973 = vpop.f32.mrb[0].mxu0
    %2974 = vdwg.mxu0
    %2975 = vrot.lane.b32.xlu0 %v2520, 112
    %v2976 = vpop.permute.xlu0 %2975
    %2977 = vrot.lane.b32.xlu0 %v2521, 112
    %v2978 = vpop.permute.xlu0 %2977
    %2979 = vrot.lane.b32.xlu0 %v2532, 80
    %v2980 = vpop.permute.xlu0 %2979
    %2981 = vrot.lane.b32.xlu0 %v2533, 80
    %v2982 = vpop.permute.xlu0 %2981
    %v2983 = vsel %vm256, %v2976, 0
    %v2985 = vsel %vm256, %v2978, 0
    %v2987 = vsel %vm256, %v2980, 0
    %v2989 = vsel %vm256, %v2982, 0
    %2991 = vmatprep.subr.mxu0 0.0
    %2992 = vmatpush1.xpose.msra.mxu0 %v2987
    %2993 = vmatprep.subr.mxu0 0.0
    %2994 = vmatpush1.xpose.msra.mxu0 %v2989
    %2995 = vmatprep.subr.mxu0 0.0
    %2996 = vmatpush1.xpose.msra.mxu0 0.0
    %2997 = vmatprep.subr.mxu0 0.0
    %2998 = vmatpush1.xpose.msra.mxu0 0.0
    %2999 = vmatprep.subr.mxu0 0.0
    %3000 = vmatpush1.xpose.msra.mxu0 0.0
    %3001 = vmatprep.subr.mxu0 0.0
    %3002 = vmatpush1.xpose.msra.mxu0 0.0
    %3003 = vmatprep.subr.mxu0 0.0
    %3004 = vmatpush1.xpose.msra.mxu0 0.0
    %3005 = vmatprep.subr.mxu0 0.0
    %3006 = vmatpush1.xpose.msra.mxu0 0.0
    %3007 = vmatprep.subr.mxu0 0.0
    %3008 = vmatpush1.xpose.msra.mxu0 0.0
    %3009 = vmatprep.subr.mxu0 0.0
    %3010 = vmatpush1.xpose.msra.mxu0 0.0
    %3011 = vmatprep.subr.mxu0 0.0
    %3012 = vmatpush1.xpose.msra.mxu0 0.0
    %3013 = vmatprep.subr.mxu0 0.0
    %3014 = vmatpush1.xpose.msra.mxu0 0.0
    %3015 = vmatprep.subr.mxu0 0.0
    %3016 = vmatpush1.xpose.msra.mxu0 0.0
    %3017 = vmatprep.subr.mxu0 0.0
    %3018 = vmatpush1.xpose.msra.mxu0 0.0
    %3019 = vmatprep.subr.mxu0 0.0
    %3020 = vmatpush1.xpose.msra.mxu0 0.0
    %3021 = vmatprep.subr.mxu0 0.0
    %3022 = vmatpush1.xpose.msra.mxu0 0.0
    %3023 = vmatprep.subr.mxu0 0.0
    %3024 = vmatpush1.xpose.msra.mxu0 0.0
    %3025 = vmatprep.subr.mxu0 0.0
    %3026 = vmatpush1.xpose.msra.mxu0 0.0
    %3027 = vmatprep.subr.mxu0 0.0
    %3028 = vmatpush1.xpose.msra.mxu0 0.0
    %3029 = vmatprep.subr.mxu0 0.0
    %3030 = vmatpush1.xpose.msra.mxu0 0.0
    %3031 = vmatprep.subr.mxu0 0.0
    %3032 = vmatpush1.xpose.msra.mxu0 0.0
    %3033 = vmatprep.subr.mxu0 0.0
    %3034 = vmatpush1.xpose.msra.mxu0 0.0
    %3035 = vmatprep.subr.mxu0 0.0
    %3036 = vmatpush1.xpose.msra.mxu0 0.0
    %3037 = vmatprep.subr.mxu0 0.0
    %3038 = vmatpush1.xpose.msra.mxu0 0.0
    %3039 = vmatprep.subr.mxu0 0.0
    %3040 = vmatpush1.xpose.msra.mxu0 0.0
    %3041 = vmatprep.subr.mxu0 0.0
    %3042 = vmatpush1.xpose.msra.mxu0 0.0
    %3043 = vmatprep.subr.mxu0 0.0
    %3044 = vmatpush1.xpose.msra.mxu0 0.0
    %3045 = vmatprep.subr.mxu0 0.0
    %3046 = vmatpush1.xpose.msra.mxu0 0.0
    %3047 = vmatprep.subr.mxu0 0.0
    %3048 = vmatpush1.xpose.msra.mxu0 0.0
    %3049 = vmatprep.subr.mxu0 0.0
    %3050 = vmatpush1.xpose.msra.mxu0 0.0
    %3051 = vmatprep.subr.mxu0 0.0
    %3052 = vmatpush1.xpose.msra.mxu0 0.0
    %3053 = vmatprep.subr.mxu0 0.0
    %3054 = vmatpush1.xpose.msra.mxu0 0.0
    %3055 = vmatprep.mubr.f32.mxu0 0.0
    %3056 = vmatmul.mubr.f32.gmra.mrb[0].mxu0 %v2983
    %v3057 = vpop.f32.mrb[0].mxu0
    %v3058 = vadd.f32 0.0, %v3057
    %v3059 = vpop.f32.mrb[0].mxu0
    %3060 = vmatprep.mubr.f32.mxu0 0.0
    %3061 = vmatmul.mubr.f32.gmra.mrb[0].mxu0 %v2985
    %v3062 = vpop.f32.mrb[0].mxu0
    %v3063 = vadd.f32 0.0, %v3062
    %v3064 = vpop.f32.mrb[0].mxu0
    %3065 = vdwg.mxu0
    %v3066 = vsel %vm342, %v3058, -inf
    %3067 = vmax.xlane.f32.xlu0 %v3066
    %v3068 = vpop.xlane.xlu0 %3067
    %v3069 = vsel %vm342, %v3063, -inf
    %3070 = vmax.xlane.f32.xlu0 %v3069
    %v3071 = vpop.xlane.xlu0 %3070
    %v3072 = vsub.f32 %v3058, %v3068
    %v3073 = vsub.f32 %v3063, %v3071
    %v3074 = vmul.f32 %v3072, 1.442695
    %v3075 = vpow.pop %v3074
    %v3076 = vmul.f32 %v3073, 1.442695
    %v3077 = vpow.pop %v3076
    %v3078 = vsel %vm342, %v3075, 0.0
    %3079 = vadd.xlane.f32.xlu0 %v3078
    %v3080 = vpop.xlane.xlu0 %3079
    %v3081 = vsel %vm342, %v3077, 0.0
    %3082 = vadd.xlane.f32.xlu0 %v3081
    %v3083 = vpop.xlane.xlu0 %3082
    %v3084 = vrcp.pop %v3080
    %v3085 = vrcp.pop %v3083
    %v3086 = vmul.f32 %v3075, %v3084
    %v3087 = vmul.f32 %v3077, %v3085
    %3088 = vrot.lane.b32.xlu0 %v2569, 48
    %v3089 = vpop.permute.xlu0 %3088
    %3090 = vrot.lane.b32.xlu0 %v2570, 48
    %v3091 = vpop.permute.xlu0 %3090
    %v3095 = vsel %vm342, %v3086, 0
    %v3098 = vsel %vm342, %v3087, 0
    %3100 = vmatprep.subr.mxu0 0.0
    %3101 = vmatpush1.msra.mxu0 %v3089
    %3102 = vmatprep.subr.mxu0 0.0
    %3103 = vmatpush1.msra.mxu0 %v3091
    %3104 = vmatprep.subr.mxu0 0.0
    %3105 = vmatpush1.msra.mxu0 0.0
    %3106 = vmatprep.subr.mxu0 0.0
    %3107 = vmatpush1.msra.mxu0 0.0
    %3108 = vmatprep.subr.mxu0 0.0
    %3109 = vmatpush1.msra.mxu0 0.0
    %3110 = vmatprep.subr.mxu0 0.0
    %3111 = vmatpush1.msra.mxu0 0.0
    %3112 = vmatprep.subr.mxu0 0.0
    %3113 = vmatpush1.msra.mxu0 0.0
    %3114 = vmatprep.subr.mxu0 0.0
    %3115 = vmatpush1.msra.mxu0 0.0
    %3116 = vmatprep.subr.mxu0 0.0
    %3117 = vmatpush1.msra.mxu0 0.0
    %3118 = vmatprep.subr.mxu0 0.0
    %3119 = vmatpush1.msra.mxu0 0.0
    %3120 = vmatprep.subr.mxu0 0.0
    %3121 = vmatpush1.msra.mxu0 0.0
    %3122 = vmatprep.subr.mxu0 0.0
    %3123 = vmatpush1.msra.mxu0 0.0
    %3124 = vmatprep.subr.mxu0 0.0
    %3125 = vmatpush1.msra.mxu0 0.0
    %3126 = vmatprep.subr.mxu0 0.0
    %3127 = vmatpush1.msra.mxu0 0.0
    %3128 = vmatprep.subr.mxu0 0.0
    %3129 = vmatpush1.msra.mxu0 0.0
    %3130 = vmatprep.subr.mxu0 0.0
    %3131 = vmatpush1.msra.mxu0 0.0
    %3132 = vmatprep.subr.mxu0 0.0
    %3133 = vmatpush1.msra.mxu0 0.0
    %3134 = vmatprep.subr.mxu0 0.0
    %3135 = vmatpush1.msra.mxu0 0.0
    %3136 = vmatprep.subr.mxu0 0.0
    %3137 = vmatpush1.msra.mxu0 0.0
    %3138 = vmatprep.subr.mxu0 0.0
    %3139 = vmatpush1.msra.mxu0 0.0
    %3140 = vmatprep.subr.mxu0 0.0
    %3141 = vmatpush1.msra.mxu0 0.0
    %3142 = vmatprep.subr.mxu0 0.0
    %3143 = vmatpush1.msra.mxu0 0.0
    %3144 = vmatprep.subr.mxu0 0.0
    %3145 = vmatpush1.msra.mxu0 0.0
    %3146 = vmatprep.subr.mxu0 0.0
    %3147 = vmatpush1.msra.mxu0 0.0
    %3148 = vmatprep.subr.mxu0 0.0
    %3149 = vmatpush1.msra.mxu0 0.0
    %3150 = vmatprep.subr.mxu0 0.0
    %3151 = vmatpush1.msra.mxu0 0.0
    %3152 = vmatprep.subr.mxu0 0.0
    %3153 = vmatpush1.msra.mxu0 0.0
    %3154 = vmatprep.subr.mxu0 0.0
    %3155 = vmatpush1.msra.mxu0 0.0
    %3156 = vmatprep.subr.mxu0 0.0
    %3157 = vmatpush1.msra.mxu0 0.0
    %3158 = vmatprep.subr.mxu0 0.0
    %3159 = vmatpush1.msra.mxu0 0.0
    %3160 = vmatprep.subr.mxu0 0.0
    %3161 = vmatpush1.msra.mxu0 0.0
    %3162 = vmatprep.subr.mxu0 0.0
    %3163 = vmatpush1.msra.mxu0 0.0
    %3164 = vmatprep.mubr.f32.mxu0 0.0
    %3165 = vmatmul.mubr.f32.gmra.mrb[0].mxu0 %v3095
    %v3166 = vpop.f32.mrb[0].mxu0
    %v3167 = vadd.f32 0.0, %v3166
    %v3168 = vpop.f32.mrb[0].mxu0
    %3169 = vmatprep.mubr.f32.mxu0 0.0
    %3170 = vmatmul.mubr.f32.gmra.mrb[0].mxu0 %v3098
    %v3171 = vpop.f32.mrb[0].mxu0
    %v3172 = vadd.f32 0.0, %v3171
    %v3173 = vpop.f32.mrb[0].mxu0
    %3174 = vdwg.mxu0
    %3175 = vrot.lane.b32.xlu0 %v2520, 104
    %v3176 = vpop.permute.xlu0 %3175
    %3177 = vrot.lane.b32.xlu0 %v2521, 104
    %v3178 = vpop.permute.xlu0 %3177
    %3179 = vrot.lane.b32.xlu0 %v2532, 72
    %v3180 = vpop.permute.xlu0 %3179
    %3181 = vrot.lane.b32.xlu0 %v2533, 72
    %v3182 = vpop.permute.xlu0 %3181
    %v3183 = vsel %vm256, %v3176, 0
    %v3185 = vsel %vm256, %v3178, 0
    %v3187 = vsel %vm256, %v3180, 0
    %v3189 = vsel %vm256, %v3182, 0
    %3191 = vmatprep.subr.mxu0 0.0
    %3192 = vmatpush1.xpose.msra.mxu0 %v3187
    %3193 = vmatprep.subr.mxu0 0.0
    %3194 = vmatpush1.xpose.msra.mxu0 %v3189
    %3195 = vmatprep.subr.mxu0 0.0
    %3196 = vmatpush1.xpose.msra.mxu0 0.0
    %3197 = vmatprep.subr.mxu0 0.0
    %3198 = vmatpush1.xpose.msra.mxu0 0.0
    %3199 = vmatprep.subr.mxu0 0.0
    %3200 = vmatpush1.xpose.msra.mxu0 0.0
    %3201 = vmatprep.subr.mxu0 0.0
    %3202 = vmatpush1.xpose.msra.mxu0 0.0
    %3203 = vmatprep.subr.mxu0 0.0
    %3204 = vmatpush1.xpose.msra.mxu0 0.0
    %3205 = vmatprep.subr.mxu0 0.0
    %3206 = vmatpush1.xpose.msra.mxu0 0.0
    %3207 = vmatprep.subr.mxu0 0.0
    %3208 = vmatpush1.xpose.msra.mxu0 0.0
    %3209 = vmatprep.subr.mxu0 0.0
    %3210 = vmatpush1.xpose.msra.mxu0 0.0
    %3211 = vmatprep.subr.mxu0 0.0
    %3212 = vmatpush1.xpose.msra.mxu0 0.0
    %3213 = vmatprep.subr.mxu0 0.0
    %3214 = vmatpush1.xpose.msra.mxu0 0.0
    %3215 = vmatprep.subr.mxu0 0.0
    %3216 = vmatpush1.xpose.msra.mxu0 0.0
    %3217 = vmatprep.subr.mxu0 0.0
    %3218 = vmatpush1.xpose.msra.mxu0 0.0
    %3219 = vmatprep.subr.mxu0 0.0
    %3220 = vmatpush1.xpose.msra.mxu0 0.0
    %3221 = vmatprep.subr.mxu0 0.0
    %3222 = vmatpush1.xpose.msra.mxu0 0.0
    %3223 = vmatprep.subr.mxu0 0.0
    %3224 = vmatpush1.xpose.msra.mxu0 0.0
    %3225 = vmatprep.subr.mxu0 0.0
    %3226 = vmatpush1.xpose.msra.mxu0 0.0
    %3227 = vmatprep.subr.mxu0 0.0
    %3228 = vmatpush1.xpose.msra.mxu0 0.0
    %3229 = vmatprep.subr.mxu0 0.0
    %3230 = vmatpush1.xpose.msra.mxu0 0.0
    %3231 = vmatprep.subr.mxu0 0.0
    %3232 = vmatpush1.xpose.msra.mxu0 0.0
    %3233 = vmatprep.subr.mxu0 0.0
    %3234 = vmatpush1.xpose.msra.mxu0 0.0
    %3235 = vmatprep.subr.mxu0 0.0
    %3236 = vmatpush1.xpose.msra.mxu0 0.0
    %3237 = vmatprep.subr.mxu0 0.0
    %3238 = vmatpush1.xpose.msra.mxu0 0.0
    %3239 = vmatprep.subr.mxu0 0.0
    %3240 = vmatpush1.xpose.msra.mxu0 0.0
    %3241 = vmatprep.subr.mxu0 0.0
    %3242 = vmatpush1.xpose.msra.mxu0 0.0
    %3243 = vmatprep.subr.mxu0 0.0
    %3244 = vmatpush1.xpose.msra.mxu0 0.0
    %3245 = vmatprep.subr.mxu0 0.0
    %3246 = vmatpush1.xpose.msra.mxu0 0.0
    %3247 = vmatprep.subr.mxu0 0.0
    %3248 = vmatpush1.xpose.msra.mxu0 0.0
    %3249 = vmatprep.subr.mxu0 0.0
    %3250 = vmatpush1.xpose.msra.mxu0 0.0
    %3251 = vmatprep.subr.mxu0 0.0
    %3252 = vmatpush1.xpose.msra.mxu0 0.0
    %3253 = vmatprep.subr.mxu0 0.0
    %3254 = vmatpush1.xpose.msra.mxu0 0.0
    %3255 = vmatprep.mubr.f32.mxu0 0.0
    %3256 = vmatmul.mubr.f32.gmra.mrb[0].mxu0 %v3183
    %v3257 = vpop.f32.mrb[0].mxu0
    %v3258 = vadd.f32 0.0, %v3257
    %v3259 = vpop.f32.mrb[0].mxu0
    %3260 = vmatprep.mubr.f32.mxu0 0.0
    %3261 = vmatmul.mubr.f32.gmra.mrb[0].mxu0 %v3185
    %v3262 = vpop.f32.mrb[0].mxu0
    %v3263 = vadd.f32 0.0, %v3262
    %v3264 = vpop.f32.mrb[0].mxu0
    %3265 = vdwg.mxu0
    %v3266 = vsel %vm342, %v3258, -inf
    %3267 = vmax.xlane.f32.xlu0 %v3266
    %v3268 = vpop.xlane.xlu0 %3267
    %v3269 = vsel %vm342, %v3263, -inf
    %3270 = vmax.xlane.f32.xlu0 %v3269
    %v3271 = vpop.xlane.xlu0 %3270
    %v3272 = vsub.f32 %v3258, %v3268
    %v3273 = vsub.f32 %v3263, %v3271
    %v3274 = vmul.f32 %v3272, 1.442695
    %v3275 = vpow.pop %v3274
    %v3276 = vmul.f32 %v3273, 1.442695
    %v3277 = vpow.pop %v3276
    %v3278 = vsel %vm342, %v3275, 0.0
    %3279 = vadd.xlane.f32.xlu0 %v3278
    %v3280 = vpop.xlane.xlu0 %3279
    %v3281 = vsel %vm342, %v3277, 0.0
    %3282 = vadd.xlane.f32.xlu0 %v3281
    %v3283 = vpop.xlane.xlu0 %3282
    %v3284 = vrcp.pop %v3280
    %v3285 = vrcp.pop %v3283
    %v3286 = vmul.f32 %v3275, %v3284
    %v3287 = vmul.f32 %v3277, %v3285
    %3288 = vrot.lane.b32.xlu0 %v2569, 40
    %v3289 = vpop.permute.xlu0 %3288
    %3290 = vrot.lane.b32.xlu0 %v2570, 40
    %v3291 = vpop.permute.xlu0 %3290
    %v3295 = vsel %vm342, %v3286, 0
    %v3298 = vsel %vm342, %v3287, 0
    %3300 = vmatprep.subr.mxu0 0.0
    %3301 = vmatpush1.msra.mxu0 %v3289
    %3302 = vmatprep.subr.mxu0 0.0
    %3303 = vmatpush1.msra.mxu0 %v3291
    %3304 = vmatprep.subr.mxu0 0.0
    %3305 = vmatpush1.msra.mxu0 0.0
    %3306 = vmatprep.subr.mxu0 0.0
    %3307 = vmatpush1.msra.mxu0 0.0
    %3308 = vmatprep.subr.mxu0 0.0
    %3309 = vmatpush1.msra.mxu0 0.0
    %3310 = vmatprep.subr.mxu0 0.0
    %3311 = vmatpush1.msra.mxu0 0.0
    %3312 = vmatprep.subr.mxu0 0.0
    %3313 = vmatpush1.msra.mxu0 0.0
    %3314 = vmatprep.subr.mxu0 0.0
    %3315 = vmatpush1.msra.mxu0 0.0
    %3316 = vmatprep.subr.mxu0 0.0
    %3317 = vmatpush1.msra.mxu0 0.0
    %3318 = vmatprep.subr.mxu0 0.0
    %3319 = vmatpush1.msra.mxu0 0.0
    %3320 = vmatprep.subr.mxu0 0.0
    %3321 = vmatpush1.msra.mxu0 0.0
    %3322 = vmatprep.subr.mxu0 0.0
    %3323 = vmatpush1.msra.mxu0 0.0
    %3324 = vmatprep.subr.mxu0 0.0
    %3325 = vmatpush1.msra.mxu0 0.0
    %3326 = vmatprep.subr.mxu0 0.0
    %3327 = vmatpush1.msra.mxu0 0.0
    %3328 = vmatprep.subr.mxu0 0.0
    %3329 = vmatpush1.msra.mxu0 0.0
    %3330 = vmatprep.subr.mxu0 0.0
    %3331 = vmatpush1.msra.mxu0 0.0
    %3332 = vmatprep.subr.mxu0 0.0
    %3333 = vmatpush1.msra.mxu0 0.0
    %3334 = vmatprep.subr.mxu0 0.0
    %3335 = vmatpush1.msra.mxu0 0.0
    %3336 = vmatprep.subr.mxu0 0.0
    %3337 = vmatpush1.msra.mxu0 0.0
    %3338 = vmatprep.subr.mxu0 0.0
    %3339 = vmatpush1.msra.mxu0 0.0
    %3340 = vmatprep.subr.mxu0 0.0
    %3341 = vmatpush1.msra.mxu0 0.0
    %3342 = vmatprep.subr.mxu0 0.0
    %3343 = vmatpush1.msra.mxu0 0.0
    %3344 = vmatprep.subr.mxu0 0.0
    %3345 = vmatpush1.msra.mxu0 0.0
    %3346 = vmatprep.subr.mxu0 0.0
    %3347 = vmatpush1.msra.mxu0 0.0
    %3348 = vmatprep.subr.mxu0 0.0
    %3349 = vmatpush1.msra.mxu0 0.0
    %3350 = vmatprep.subr.mxu0 0.0
    %3351 = vmatpush1.msra.mxu0 0.0
    %3352 = vmatprep.subr.mxu0 0.0
    %3353 = vmatpush1.msra.mxu0 0.0
    %3354 = vmatprep.subr.mxu0 0.0
    %3355 = vmatpush1.msra.mxu0 0.0
    %3356 = vmatprep.subr.mxu0 0.0
    %3357 = vmatpush1.msra.mxu0 0.0
    %3358 = vmatprep.subr.mxu0 0.0
    %3359 = vmatpush1.msra.mxu0 0.0
    %3360 = vmatprep.subr.mxu0 0.0
    %3361 = vmatpush1.msra.mxu0 0.0
    %3362 = vmatprep.subr.mxu0 0.0
    %3363 = vmatpush1.msra.mxu0 0.0
    %3364 = vmatprep.mubr.f32.mxu0 0.0
    %3365 = vmatmul.mubr.f32.gmra.mrb[0].mxu0 %v3295
    %v3366 = vpop.f32.mrb[0].mxu0
    %v3367 = vadd.f32 0.0, %v3366
    %v3368 = vpop.f32.mrb[0].mxu0
    %3369 = vmatprep.mubr.f32.mxu0 0.0
    %3370 = vmatmul.mubr.f32.gmra.mrb[0].mxu0 %v3298
    %v3371 = vpop.f32.mrb[0].mxu0
    %v3372 = vadd.f32 0.0, %v3371
    %v3373 = vpop.f32.mrb[0].mxu0
    %3374 = vdwg.mxu0
    %3377 = vrot.lane.b32.xlu0 %v2967, 8
    %v3378 = vpop.permute.xlu0 %3377
    %3379 = vrot.lane.b32.xlu0 %v2972, 8
    %v3380 = vpop.permute.xlu0 %3379
    %3385 = vrot.lane.b32.xlu0 %v3167, 16
    %v3386 = vpop.permute.xlu0 %3385
    %3387 = vrot.lane.b32.xlu0 %v3172, 16
    %v3388 = vpop.permute.xlu0 %3387
    %3393 = vrot.lane.b32.xlu0 %v3367, 24
    %v3394 = vpop.permute.xlu0 %3393
    %3395 = vrot.lane.b32.xlu0 %v3372, 24
    %v3396 = vpop.permute.xlu0 %3395
    %v3399 = vsel %vm256, %v2767, %v3378
    %v3400 = vsel %vm256, %v2772, %v3380
    %v3401 = vsel %vm342, %v3399, %v3386
    %v3402 = vsel %vm342, %v3400, %v3388
    %v3403 = vsel %vm1082, %v3401, %v3394
    %v3404 = vsel %vm1082, %v3402, %v3396
    %3407 = vrot.lane.b32.xlu0 %v2534, 96
    %v3408 = vpop.permute.xlu0 %3407
    %3409 = vrot.lane.b32.xlu0 %v2535, 96
    %v3410 = vpop.permute.xlu0 %3409
    %v3412 = vsel %vm256, %v2522, 0
    %v3415 = vsel %vm256, %v2523, 0
    %v3417 = vsel %vm256, %v3408, 0
    %v3419 = vsel %vm256, %v3410, 0
    %3421 = vmatprep.subr.mxu0 0.0
    %3422 = vmatpush1.xpose.msra.mxu0 %v3417
    %3423 = vmatprep.subr.mxu0 0.0
    %3424 = vmatpush1.xpose.msra.mxu0 %v3419
    %3425 = vmatprep.subr.mxu0 0.0
    %3426 = vmatpush1.xpose.msra.mxu0 0.0
    %3427 = vmatprep.subr.mxu0 0.0
    %3428 = vmatpush1.xpose.msra.mxu0 0.0
    %3429 = vmatprep.subr.mxu0 0.0
    %3430 = vmatpush1.xpose.msra.mxu0 0.0
    %3431 = vmatprep.subr.mxu0 0.0
    %3432 = vmatpush1.xpose.msra.mxu0 0.0
    %3433 = vmatprep.subr.mxu0 0.0
    %3434 = vmatpush1.xpose.msra.mxu0 0.0
    %3435 = vmatprep.subr.mxu0 0.0
    %3436 = vmatpush1.xpose.msra.mxu0 0.0
    %3437 = vmatprep.subr.mxu0 0.0
    %3438 = vmatpush1.xpose.msra.mxu0 0.0
    %3439 = vmatprep.subr.mxu0 0.0
    %3440 = vmatpush1.xpose.msra.mxu0 0.0
    %3441 = vmatprep.subr.mxu0 0.0
    %3442 = vmatpush1.xpose.msra.mxu0 0.0
    %3443 = vmatprep.subr.mxu0 0.0
    %3444 = vmatpush1.xpose.msra.mxu0 0.0
    %3445 = vmatprep.subr.mxu0 0.0
    %3446 = vmatpush1.xpose.msra.mxu0 0.0
    %3447 = vmatprep.subr.mxu0 0.0
    %3448 = vmatpush1.xpose.msra.mxu0 0.0
    %3449 = vmatprep.subr.mxu0 0.0
    %3450 = vmatpush1.xpose.msra.mxu0 0.0
    %3451 = vmatprep.subr.mxu0 0.0
    %3452 = vmatpush1.xpose.msra.mxu0 0.0
    %3453 = vmatprep.subr.mxu0 0.0
    %3454 = vmatpush1.xpose.msra.mxu0 0.0
    %3455 = vmatprep.subr.mxu0 0.0
    %3456 = vmatpush1.xpose.msra.mxu0 0.0
    %3457 = vmatprep.subr.mxu0 0.0
    %3458 = vmatpush1.xpose.msra.mxu0 0.0
    %3459 = vmatprep.subr.mxu0 0.0
    %3460 = vmatpush1.xpose.msra.mxu0 0.0
    %3461 = vmatprep.subr.mxu0 0.0
    %3462 = vmatpush1.xpose.msra.mxu0 0.0
    %3463 = vmatprep.subr.mxu0 0.0
    %3464 = vmatpush1.xpose.msra.mxu0 0.0
    %3465 = vmatprep.subr.mxu0 0.0
    %3466 = vmatpush1.xpose.msra.mxu0 0.0
    %3467 = vmatprep.subr.mxu0 0.0
    %3468 = vmatpush1.xpose.msra.mxu0 0.0
    %3469 = vmatprep.subr.mxu0 0.0
    %3470 = vmatpush1.xpose.msra.mxu0 0.0
    %3471 = vmatprep.subr.mxu0 0.0
    %3472 = vmatpush1.xpose.msra.mxu0 0.0
    %3473 = vmatprep.subr.mxu0 0.0
    %3474 = vmatpush1.xpose.msra.mxu0 0.0
    %3475 = vmatprep.subr.mxu0 0.0
    %3476 = vmatpush1.xpose.msra.mxu0 0.0
    %3477 = vmatprep.subr.mxu0 0.0
    %3478 = vmatpush1.xpose.msra.mxu0 0.0
    %3479 = vmatprep.subr.mxu0 0.0
    %3480 = vmatpush1.xpose.msra.mxu0 0.0
    %3481 = vmatprep.subr.mxu0 0.0
    %3482 = vmatpush1.xpose.msra.mxu0 0.0
    %3483 = vmatprep.subr.mxu0 0.0
    %3484 = vmatpush1.xpose.msra.mxu0 0.0
    %3485 = vmatprep.mubr.f32.mxu0 0.0
    %3486 = vmatmul.mubr.f32.gmra.mrb[0].mxu0 %v3412
    %v3487 = vpop.f32.mrb[0].mxu0
    %v3488 = vadd.f32 0.0, %v3487
    %v3489 = vpop.f32.mrb[0].mxu0
    %3490 = vmatprep.mubr.f32.mxu0 0.0
    %3491 = vmatmul.mubr.f32.gmra.mrb[0].mxu0 %v3415
    %v3492 = vpop.f32.mrb[0].mxu0
    %v3493 = vadd.f32 0.0, %v3492
    %v3494 = vpop.f32.mrb[0].mxu0
    %3495 = vdwg.mxu0
    %v3496 = vsel %vm342, %v3488, -inf
    %3497 = vmax.xlane.f32.xlu0 %v3496
    %v3498 = vpop.xlane.xlu0 %3497
    %v3499 = vsel %vm342, %v3493, -inf
    %3500 = vmax.xlane.f32.xlu0 %v3499
    %v3501 = vpop.xlane.xlu0 %3500
    %v3502 = vsub.f32 %v3488, %v3498
    %v3503 = vsub.f32 %v3493, %v3501
    %v3504 = vmul.f32 %v3502, 1.442695
    %v3505 = vpow.pop %v3504
    %v3506 = vmul.f32 %v3503, 1.442695
    %v3507 = vpow.pop %v3506
    %v3508 = vsel %vm342, %v3505, 0.0
    %3509 = vadd.xlane.f32.xlu0 %v3508
    %v3510 = vpop.xlane.xlu0 %3509
    %v3511 = vsel %vm342, %v3507, 0.0
    %3512 = vadd.xlane.f32.xlu0 %v3511
    %v3513 = vpop.xlane.xlu0 %3512
    %v3514 = vrcp.pop %v3510
    %v3515 = vrcp.pop %v3513
    %v3516 = vmul.f32 %v3505, %v3514
    %v3517 = vmul.f32 %v3507, %v3515
    %3520 = vrot.lane.b32.xlu0 %v2571, 64
    %v3521 = vpop.permute.xlu0 %3520
    %3522 = vrot.lane.b32.xlu0 %v2572, 64
    %v3523 = vpop.permute.xlu0 %3522
    %v3527 = vsel %vm342, %v3516, 0
    %v3530 = vsel %vm342, %v3517, 0
    %3532 = vmatprep.subr.mxu0 0.0
    %3533 = vmatpush1.msra.mxu0 %v3521
    %3534 = vmatprep.subr.mxu0 0.0
    %3535 = vmatpush1.msra.mxu0 %v3523
    %3536 = vmatprep.subr.mxu0 0.0
    %3537 = vmatpush1.msra.mxu0 0.0
    %3538 = vmatprep.subr.mxu0 0.0
    %3539 = vmatpush1.msra.mxu0 0.0
    %3540 = vmatprep.subr.mxu0 0.0
    %3541 = vmatpush1.msra.mxu0 0.0
    %3542 = vmatprep.subr.mxu0 0.0
    %3543 = vmatpush1.msra.mxu0 0.0
    %3544 = vmatprep.subr.mxu0 0.0
    %3545 = vmatpush1.msra.mxu0 0.0
    %3546 = vmatprep.subr.mxu0 0.0
    %3547 = vmatpush1.msra.mxu0 0.0
    %3548 = vmatprep.subr.mxu0 0.0
    %3549 = vmatpush1.msra.mxu0 0.0
    %3550 = vmatprep.subr.mxu0 0.0
    %3551 = vmatpush1.msra.mxu0 0.0
    %3552 = vmatprep.subr.mxu0 0.0
    %3553 = vmatpush1.msra.mxu0 0.0
    %3554 = vmatprep.subr.mxu0 0.0
    %3555 = vmatpush1.msra.mxu0 0.0
    %3556 = vmatprep.subr.mxu0 0.0
    %3557 = vmatpush1.msra.mxu0 0.0
    %3558 = vmatprep.subr.mxu0 0.0
    %3559 = vmatpush1.msra.mxu0 0.0
    %3560 = vmatprep.subr.mxu0 0.0
    %3561 = vmatpush1.msra.mxu0 0.0
    %3562 = vmatprep.subr.mxu0 0.0
    %3563 = vmatpush1.msra.mxu0 0.0
    %3564 = vmatprep.subr.mxu0 0.0
    %3565 = vmatpush1.msra.mxu0 0.0
    %3566 = vmatprep.subr.mxu0 0.0
    %3567 = vmatpush1.msra.mxu0 0.0
    %3568 = vmatprep.subr.mxu0 0.0
    %3569 = vmatpush1.msra.mxu0 0.0
    %3570 = vmatprep.subr.mxu0 0.0
    %3571 = vmatpush1.msra.mxu0 0.0
    %3572 = vmatprep.subr.mxu0 0.0
    %3573 = vmatpush1.msra.mxu0 0.0
    %3574 = vmatprep.subr.mxu0 0.0
    %3575 = vmatpush1.msra.mxu0 0.0
    %3576 = vmatprep.subr.mxu0 0.0
    %3577 = vmatpush1.msra.mxu0 0.0
    %3578 = vmatprep.subr.mxu0 0.0
    %3579 = vmatpush1.msra.mxu0 0.0
    %3580 = vmatprep.subr.mxu0 0.0
    %3581 = vmatpush1.msra.mxu0 0.0
    %3582 = vmatprep.subr.mxu0 0.0
    %3583 = vmatpush1.msra.mxu0 0.0
    %3584 = vmatprep.subr.mxu0 0.0
    %3585 = vmatpush1.msra.mxu0 0.0
    %3586 = vmatprep.subr.mxu0 0.0
    %3587 = vmatpush1.msra.mxu0 0.0
    %3588 = vmatprep.subr.mxu0 0.0
    %3589 = vmatpush1.msra.mxu0 0.0
    %3590 = vmatprep.subr.mxu0 0.0
    %3591 = vmatpush1.msra.mxu0 0.0
    %3592 = vmatprep.subr.mxu0 0.0
    %3593 = vmatpush1.msra.mxu0 0.0
    %3594 = vmatprep.subr.mxu0 0.0
    %3595 = vmatpush1.msra.mxu0 0.0
    %3596 = vmatprep.mubr.f32.mxu0 0.0
    %3597 = vmatmul.mubr.f32.gmra.mrb[0].mxu0 %v3527
    %v3598 = vpop.f32.mrb[0].mxu0
    %v3599 = vadd.f32 0.0, %v3598
    %v3600 = vpop.f32.mrb[0].mxu0
    %3601 = vmatprep.mubr.f32.mxu0 0.0
    %3602 = vmatmul.mubr.f32.gmra.mrb[0].mxu0 %v3530
    %v3603 = vpop.f32.mrb[0].mxu0
    %v3604 = vadd.f32 0.0, %v3603
    %v3605 = vpop.f32.mrb[0].mxu0
    %3606 = vdwg.mxu0
    %3607 = vrot.lane.b32.xlu0 %v2522, 120
    %v3608 = vpop.permute.xlu0 %3607
    %3609 = vrot.lane.b32.xlu0 %v2523, 120
    %v3610 = vpop.permute.xlu0 %3609
    %3611 = vrot.lane.b32.xlu0 %v2534, 88
    %v3612 = vpop.permute.xlu0 %3611
    %3613 = vrot.lane.b32.xlu0 %v2535, 88
    %v3614 = vpop.permute.xlu0 %3613
    %v3615 = vsel %vm256, %v3608, 0
    %v3617 = vsel %vm256, %v3610, 0
    %v3619 = vsel %vm256, %v3612, 0
    %v3621 = vsel %vm256, %v3614, 0
    %3623 = vmatprep.subr.mxu0 0.0
    %3624 = vmatpush1.xpose.msra.mxu0 %v3619
    %3625 = vmatprep.subr.mxu0 0.0
    %3626 = vmatpush1.xpose.msra.mxu0 %v3621
    %3627 = vmatprep.subr.mxu0 0.0
    %3628 = vmatpush1.xpose.msra.mxu0 0.0
    %3629 = vmatprep.subr.mxu0 0.0
    %3630 = vmatpush1.xpose.msra.mxu0 0.0
    %3631 = vmatprep.subr.mxu0 0.0
    %3632 = vmatpush1.xpose.msra.mxu0 0.0
    %3633 = vmatprep.subr.mxu0 0.0
    %3634 = vmatpush1.xpose.msra.mxu0 0.0
    %3635 = vmatprep.subr.mxu0 0.0
    %3636 = vmatpush1.xpose.msra.mxu0 0.0
    %3637 = vmatprep.subr.mxu0 0.0
    %3638 = vmatpush1.xpose.msra.mxu0 0.0
    %3639 = vmatprep.subr.mxu0 0.0
    %3640 = vmatpush1.xpose.msra.mxu0 0.0
    %3641 = vmatprep.subr.mxu0 0.0
    %3642 = vmatpush1.xpose.msra.mxu0 0.0
    %3643 = vmatprep.subr.mxu0 0.0
    %3644 = vmatpush1.xpose.msra.mxu0 0.0
    %3645 = vmatprep.subr.mxu0 0.0
    %3646 = vmatpush1.xpose.msra.mxu0 0.0
    %3647 = vmatprep.subr.mxu0 0.0
    %3648 = vmatpush1.xpose.msra.mxu0 0.0
    %3649 = vmatprep.subr.mxu0 0.0
    %3650 = vmatpush1.xpose.msra.mxu0 0.0
    %3651 = vmatprep.subr.mxu0 0.0
    %3652 = vmatpush1.xpose.msra.mxu0 0.0
    %3653 = vmatprep.subr.mxu0 0.0
    %3654 = vmatpush1.xpose.msra.mxu0 0.0
    %3655 = vmatprep.subr.mxu0 0.0
    %3656 = vmatpush1.xpose.msra.mxu0 0.0
    %3657 = vmatprep.subr.mxu0 0.0
    %3658 = vmatpush1.xpose.msra.mxu0 0.0
    %3659 = vmatprep.subr.mxu0 0.0
    %3660 = vmatpush1.xpose.msra.mxu0 0.0
    %3661 = vmatprep.subr.mxu0 0.0
    %3662 = vmatpush1.xpose.msra.mxu0 0.0
    %3663 = vmatprep.subr.mxu0 0.0
    %3664 = vmatpush1.xpose.msra.mxu0 0.0
    %3665 = vmatprep.subr.mxu0 0.0
    %3666 = vmatpush1.xpose.msra.mxu0 0.0
    %3667 = vmatprep.subr.mxu0 0.0
    %3668 = vmatpush1.xpose.msra.mxu0 0.0
    %3669 = vmatprep.subr.mxu0 0.0
    %3670 = vmatpush1.xpose.msra.mxu0 0.0
    %3671 = vmatprep.subr.mxu0 0.0
    %3672 = vmatpush1.xpose.msra.mxu0 0.0
    %3673 = vmatprep.subr.mxu0 0.0
    %3674 = vmatpush1.xpose.msra.mxu0 0.0
    %3675 = vmatprep.subr.mxu0 0.0
    %3676 = vmatpush1.xpose.msra.mxu0 0.0
    %3677 = vmatprep.subr.mxu0 0.0
    %3678 = vmatpush1.xpose.msra.mxu0 0.0
    %3679 = vmatprep.subr.mxu0 0.0
    %3680 = vmatpush1.xpose.msra.mxu0 0.0
    %3681 = vmatprep.subr.mxu0 0.0
    %3682 = vmatpush1.xpose.msra.mxu0 0.0
    %3683 = vmatprep.subr.mxu0 0.0
    %3684 = vmatpush1.xpose.msra.mxu0 0.0
    %3685 = vmatprep.subr.mxu0 0.0
    %3686 = vmatpush1.xpose.msra.mxu0 0.0
    %3687 = vmatprep.mubr.f32.mxu0 0.0
    %3688 = vmatmul.mubr.f32.gmra.mrb[0].mxu0 %v3615
    %v3689 = vpop.f32.mrb[0].mxu0
    %v3690 = vadd.f32 0.0, %v3689
    %v3691 = vpop.f32.mrb[0].mxu0
    %3692 = vmatprep.mubr.f32.mxu0 0.0
    %3693 = vmatmul.mubr.f32.gmra.mrb[0].mxu0 %v3617
    %v3694 = vpop.f32.mrb[0].mxu0
    %v3695 = vadd.f32 0.0, %v3694
    %v3696 = vpop.f32.mrb[0].mxu0
    %3697 = vdwg.mxu0
    %v3698 = vsel %vm342, %v3690, -inf
    %3699 = vmax.xlane.f32.xlu0 %v3698
    %v3700 = vpop.xlane.xlu0 %3699
    %v3701 = vsel %vm342, %v3695, -inf
    %3702 = vmax.xlane.f32.xlu0 %v3701
    %v3703 = vpop.xlane.xlu0 %3702
    %v3704 = vsub.f32 %v3690, %v3700
    %v3705 = vsub.f32 %v3695, %v3703
    %v3706 = vmul.f32 %v3704, 1.442695
    %v3707 = vpow.pop %v3706
    %v3708 = vmul.f32 %v3705, 1.442695
    %v3709 = vpow.pop %v3708
    %v3710 = vsel %vm342, %v3707, 0.0
    %3711 = vadd.xlane.f32.xlu0 %v3710
    %v3712 = vpop.xlane.xlu0 %3711
    %v3713 = vsel %vm342, %v3709, 0.0
    %3714 = vadd.xlane.f32.xlu0 %v3713
    %v3715 = vpop.xlane.xlu0 %3714
    %v3716 = vrcp.pop %v3712
    %v3717 = vrcp.pop %v3715
    %v3718 = vmul.f32 %v3707, %v3716
    %v3719 = vmul.f32 %v3709, %v3717
    %3720 = vrot.lane.b32.xlu0 %v2571, 56
    %v3721 = vpop.permute.xlu0 %3720
    %3722 = vrot.lane.b32.xlu0 %v2572, 56
    %v3723 = vpop.permute.xlu0 %3722
    %v3727 = vsel %vm342, %v3718, 0
    %v3730 = vsel %vm342, %v3719, 0
    %3732 = vmatprep.subr.mxu0 0.0
    %3733 = vmatpush1.msra.mxu0 %v3721
    %3734 = vmatprep.subr.mxu0 0.0
    %3735 = vmatpush1.msra.mxu0 %v3723
    %3736 = vmatprep.subr.mxu0 0.0
    %3737 = vmatpush1.msra.mxu0 0.0
    %3738 = vmatprep.subr.mxu0 0.0
    %3739 = vmatpush1.msra.mxu0 0.0
    %3740 = vmatprep.subr.mxu0 0.0
    %3741 = vmatpush1.msra.mxu0 0.0
    %3742 = vmatprep.subr.mxu0 0.0
    %3743 = vmatpush1.msra.mxu0 0.0
    %3744 = vmatprep.subr.mxu0 0.0
    %3745 = vmatpush1.msra.mxu0 0.0
    %3746 = vmatprep.subr.mxu0 0.0
    %3747 = vmatpush1.msra.mxu0 0.0
    %3748 = vmatprep.subr.mxu0 0.0
    %3749 = vmatpush1.msra.mxu0 0.0
    %3750 = vmatprep.subr.mxu0 0.0
    %3751 = vmatpush1.msra.mxu0 0.0
    %3752 = vmatprep.subr.mxu0 0.0
    %3753 = vmatpush1.msra.mxu0 0.0
    %3754 = vmatprep.subr.mxu0 0.0
    %3755 = vmatpush1.msra.mxu0 0.0
    %3756 = vmatprep.subr.mxu0 0.0
    %3757 = vmatpush1.msra.mxu0 0.0
    %3758 = vmatprep.subr.mxu0 0.0
    %3759 = vmatpush1.msra.mxu0 0.0
    %3760 = vmatprep.subr.mxu0 0.0
    %3761 = vmatpush1.msra.mxu0 0.0
    %3762 = vmatprep.subr.mxu0 0.0
    %3763 = vmatpush1.msra.mxu0 0.0
    %3764 = vmatprep.subr.mxu0 0.0
    %3765 = vmatpush1.msra.mxu0 0.0
    %3766 = vmatprep.subr.mxu0 0.0
    %3767 = vmatpush1.msra.mxu0 0.0
    %3768 = vmatprep.subr.mxu0 0.0
    %3769 = vmatpush1.msra.mxu0 0.0
    %3770 = vmatprep.subr.mxu0 0.0
    %3771 = vmatpush1.msra.mxu0 0.0
    %3772 = vmatprep.subr.mxu0 0.0
    %3773 = vmatpush1.msra.mxu0 0.0
    %3774 = vmatprep.subr.mxu0 0.0
    %3775 = vmatpush1.msra.mxu0 0.0
    %3776 = vmatprep.subr.mxu0 0.0
    %3777 = vmatpush1.msra.mxu0 0.0
    %3778 = vmatprep.subr.mxu0 0.0
    %3779 = vmatpush1.msra.mxu0 0.0
    %3780 = vmatprep.subr.mxu0 0.0
    %3781 = vmatpush1.msra.mxu0 0.0
    %3782 = vmatprep.subr.mxu0 0.0
    %3783 = vmatpush1.msra.mxu0 0.0
    %3784 = vmatprep.subr.mxu0 0.0
    %3785 = vmatpush1.msra.mxu0 0.0
    %3786 = vmatprep.subr.mxu0 0.0
    %3787 = vmatpush1.msra.mxu0 0.0
    %3788 = vmatprep.subr.mxu0 0.0
    %3789 = vmatpush1.msra.mxu0 0.0
    %3790 = vmatprep.subr.mxu0 0.0
    %3791 = vmatpush1.msra.mxu0 0.0
    %3792 = vmatprep.subr.mxu0 0.0
    %3793 = vmatpush1.msra.mxu0 0.0
    %3794 = vmatprep.subr.mxu0 0.0
    %3795 = vmatpush1.msra.mxu0 0.0
    %3796 = vmatprep.mubr.f32.mxu0 0.0
    %3797 = vmatmul.mubr.f32.gmra.mrb[0].mxu0 %v3727
    %v3798 = vpop.f32.mrb[0].mxu0
    %v3799 = vadd.f32 0.0, %v3798
    %v3800 = vpop.f32.mrb[0].mxu0
    %3801 = vmatprep.mubr.f32.mxu0 0.0
    %3802 = vmatmul.mubr.f32.gmra.mrb[0].mxu0 %v3730
    %v3803 = vpop.f32.mrb[0].mxu0
    %v3804 = vadd.f32 0.0, %v3803
    %v3805 = vpop.f32.mrb[0].mxu0
    %3806 = vdwg.mxu0
    %3807 = vrot.lane.b32.xlu0 %v2522, 112
    %v3808 = vpop.permute.xlu0 %3807
    %3809 = vrot.lane.b32.xlu0 %v2523, 112
    %v3810 = vpop.permute.xlu0 %3809
    %3811 = vrot.lane.b32.xlu0 %v2534, 80
    %v3812 = vpop.permute.xlu0 %3811
    %3813 = vrot.lane.b32.xlu0 %v2535, 80
    %v3814 = vpop.permute.xlu0 %3813
    %v3815 = vsel %vm256, %v3808, 0
    %v3817 = vsel %vm256, %v3810, 0
    %v3819 = vsel %vm256, %v3812, 0
    %v3821 = vsel %vm256, %v3814, 0
    %3823 = vmatprep.subr.mxu0 0.0
    %3824 = vmatpush1.xpose.msra.mxu0 %v3819
    %3825 = vmatprep.subr.mxu0 0.0
    %3826 = vmatpush1.xpose.msra.mxu0 %v3821
    %3827 = vmatprep.subr.mxu0 0.0
    %3828 = vmatpush1.xpose.msra.mxu0 0.0
    %3829 = vmatprep.subr.mxu0 0.0
    %3830 = vmatpush1.xpose.msra.mxu0 0.0
    %3831 = vmatprep.subr.mxu0 0.0
    %3832 = vmatpush1.xpose.msra.mxu0 0.0
    %3833 = vmatprep.subr.mxu0 0.0
    %3834 = vmatpush1.xpose.msra.mxu0 0.0
    %3835 = vmatprep.subr.mxu0 0.0
    %3836 = vmatpush1.xpose.msra.mxu0 0.0
    %3837 = vmatprep.subr.mxu0 0.0
    %3838 = vmatpush1.xpose.msra.mxu0 0.0
    %3839 = vmatprep.subr.mxu0 0.0
    %3840 = vmatpush1.xpose.msra.mxu0 0.0
    %3841 = vmatprep.subr.mxu0 0.0
    %3842 = vmatpush1.xpose.msra.mxu0 0.0
    %3843 = vmatprep.subr.mxu0 0.0
    %3844 = vmatpush1.xpose.msra.mxu0 0.0
    %3845 = vmatprep.subr.mxu0 0.0
    %3846 = vmatpush1.xpose.msra.mxu0 0.0
    %3847 = vmatprep.subr.mxu0 0.0
    %3848 = vmatpush1.xpose.msra.mxu0 0.0
    %3849 = vmatprep.subr.mxu0 0.0
    %3850 = vmatpush1.xpose.msra.mxu0 0.0
    %3851 = vmatprep.subr.mxu0 0.0
    %3852 = vmatpush1.xpose.msra.mxu0 0.0
    %3853 = vmatprep.subr.mxu0 0.0
    %3854 = vmatpush1.xpose.msra.mxu0 0.0
    %3855 = vmatprep.subr.mxu0 0.0
    %3856 = vmatpush1.xpose.msra.mxu0 0.0
    %3857 = vmatprep.subr.mxu0 0.0
    %3858 = vmatpush1.xpose.msra.mxu0 0.0
    %3859 = vmatprep.subr.mxu0 0.0
    %3860 = vmatpush1.xpose.msra.mxu0 0.0
    %3861 = vmatprep.subr.mxu0 0.0
    %3862 = vmatpush1.xpose.msra.mxu0 0.0
    %3863 = vmatprep.subr.mxu0 0.0
    %3864 = vmatpush1.xpose.msra.mxu0 0.0
    %3865 = vmatprep.subr.mxu0 0.0
    %3866 = vmatpush1.xpose.msra.mxu0 0.0
    %3867 = vmatprep.subr.mxu0 0.0
    %3868 = vmatpush1.xpose.msra.mxu0 0.0
    %3869 = vmatprep.subr.mxu0 0.0
    %3870 = vmatpush1.xpose.msra.mxu0 0.0
    %3871 = vmatprep.subr.mxu0 0.0
    %3872 = vmatpush1.xpose.msra.mxu0 0.0
    %3873 = vmatprep.subr.mxu0 0.0
    %3874 = vmatpush1.xpose.msra.mxu0 0.0
    %3875 = vmatprep.subr.mxu0 0.0
    %3876 = vmatpush1.xpose.msra.mxu0 0.0
    %3877 = vmatprep.subr.mxu0 0.0
    %3878 = vmatpush1.xpose.msra.mxu0 0.0
    %3879 = vmatprep.subr.mxu0 0.0
    %3880 = vmatpush1.xpose.msra.mxu0 0.0
    %3881 = vmatprep.subr.mxu0 0.0
    %3882 = vmatpush1.xpose.msra.mxu0 0.0
    %3883 = vmatprep.subr.mxu0 0.0
    %3884 = vmatpush1.xpose.msra.mxu0 0.0
    %3885 = vmatprep.subr.mxu0 0.0
    %3886 = vmatpush1.xpose.msra.mxu0 0.0
    %3887 = vmatprep.mubr.f32.mxu0 0.0
    %3888 = vmatmul.mubr.f32.gmra.mrb[0].mxu0 %v3815
    %v3889 = vpop.f32.mrb[0].mxu0
    %v3890 = vadd.f32 0.0, %v3889
    %v3891 = vpop.f32.mrb[0].mxu0
    %3892 = vmatprep.mubr.f32.mxu0 0.0
    %3893 = vmatmul.mubr.f32.gmra.mrb[0].mxu0 %v3817
    %v3894 = vpop.f32.mrb[0].mxu0
    %v3895 = vadd.f32 0.0, %v3894
    %v3896 = vpop.f32.mrb[0].mxu0
    %3897 = vdwg.mxu0
    %v3898 = vsel %vm342, %v3890, -inf
    %3899 = vmax.xlane.f32.xlu0 %v3898
    %v3900 = vpop.xlane.xlu0 %3899
    %v3901 = vsel %vm342, %v3895, -inf
    %3902 = vmax.xlane.f32.xlu0 %v3901
    %v3903 = vpop.xlane.xlu0 %3902
    %v3904 = vsub.f32 %v3890, %v3900
    %v3905 = vsub.f32 %v3895, %v3903
    %v3906 = vmul.f32 %v3904, 1.442695
    %v3907 = vpow.pop %v3906
    %v3908 = vmul.f32 %v3905, 1.442695
    %v3909 = vpow.pop %v3908
    %v3910 = vsel %vm342, %v3907, 0.0
    %3911 = vadd.xlane.f32.xlu0 %v3910
    %v3912 = vpop.xlane.xlu0 %3911
    %v3913 = vsel %vm342, %v3909, 0.0
    %3914 = vadd.xlane.f32.xlu0 %v3913
    %v3915 = vpop.xlane.xlu0 %3914
    %v3916 = vrcp.pop %v3912
    %v3917 = vrcp.pop %v3915
    %v3918 = vmul.f32 %v3907, %v3916
    %v3919 = vmul.f32 %v3909, %v3917
    %3920 = vrot.lane.b32.xlu0 %v2571, 48
    %v3921 = vpop.permute.xlu0 %3920
    %3922 = vrot.lane.b32.xlu0 %v2572, 48
    %v3923 = vpop.permute.xlu0 %3922
    %v3927 = vsel %vm342, %v3918, 0
    %v3930 = vsel %vm342, %v3919, 0
    %3932 = vmatprep.subr.mxu0 0.0
    %3933 = vmatpush1.msra.mxu0 %v3921
    %3934 = vmatprep.subr.mxu0 0.0
    %3935 = vmatpush1.msra.mxu0 %v3923
    %3936 = vmatprep.subr.mxu0 0.0
    %3937 = vmatpush1.msra.mxu0 0.0
    %3938 = vmatprep.subr.mxu0 0.0
    %3939 = vmatpush1.msra.mxu0 0.0
    %3940 = vmatprep.subr.mxu0 0.0
    %3941 = vmatpush1.msra.mxu0 0.0
    %3942 = vmatprep.subr.mxu0 0.0
    %3943 = vmatpush1.msra.mxu0 0.0
    %3944 = vmatprep.subr.mxu0 0.0
    %3945 = vmatpush1.msra.mxu0 0.0
    %3946 = vmatprep.subr.mxu0 0.0
    %3947 = vmatpush1.msra.mxu0 0.0
    %3948 = vmatprep.subr.mxu0 0.0
    %3949 = vmatpush1.msra.mxu0 0.0
    %3950 = vmatprep.subr.mxu0 0.0
    %3951 = vmatpush1.msra.mxu0 0.0
    %3952 = vmatprep.subr.mxu0 0.0
    %3953 = vmatpush1.msra.mxu0 0.0
    %3954 = vmatprep.subr.mxu0 0.0
    %3955 = vmatpush1.msra.mxu0 0.0
    %3956 = vmatprep.subr.mxu0 0.0
    %3957 = vmatpush1.msra.mxu0 0.0
    %3958 = vmatprep.subr.mxu0 0.0
    %3959 = vmatpush1.msra.mxu0 0.0
    %3960 = vmatprep.subr.mxu0 0.0
    %3961 = vmatpush1.msra.mxu0 0.0
    %3962 = vmatprep.subr.mxu0 0.0
    %3963 = vmatpush1.msra.mxu0 0.0
    %3964 = vmatprep.subr.mxu0 0.0
    %3965 = vmatpush1.msra.mxu0 0.0
    %3966 = vmatprep.subr.mxu0 0.0
    %3967 = vmatpush1.msra.mxu0 0.0
    %3968 = vmatprep.subr.mxu0 0.0
    %3969 = vmatpush1.msra.mxu0 0.0
    %3970 = vmatprep.subr.mxu0 0.0
    %3971 = vmatpush1.msra.mxu0 0.0
    %3972 = vmatprep.subr.mxu0 0.0
    %3973 = vmatpush1.msra.mxu0 0.0
    %3974 = vmatprep.subr.mxu0 0.0
    %3975 = vmatpush1.msra.mxu0 0.0
    %3976 = vmatprep.subr.mxu0 0.0
    %3977 = vmatpush1.msra.mxu0 0.0
    %3978 = vmatprep.subr.mxu0 0.0
    %3979 = vmatpush1.msra.mxu0 0.0
    %3980 = vmatprep.subr.mxu0 0.0
    %3981 = vmatpush1.msra.mxu0 0.0
    %3982 = vmatprep.subr.mxu0 0.0
    %3983 = vmatpush1.msra.mxu0 0.0
    %3984 = vmatprep.subr.mxu0 0.0
    %3985 = vmatpush1.msra.mxu0 0.0
    %3986 = vmatprep.subr.mxu0 0.0
    %3987 = vmatpush1.msra.mxu0 0.0
    %3988 = vmatprep.subr.mxu0 0.0
    %3989 = vmatpush1.msra.mxu0 0.0
    %3990 = vmatprep.subr.mxu0 0.0
    %3991 = vmatpush1.msra.mxu0 0.0
    %3992 = vmatprep.subr.mxu0 0.0
    %3993 = vmatpush1.msra.mxu0 0.0
    %3994 = vmatprep.subr.mxu0 0.0
    %3995 = vmatpush1.msra.mxu0 0.0
    %3996 = vmatprep.mubr.f32.mxu0 0.0
    %3997 = vmatmul.mubr.f32.gmra.mrb[0].mxu0 %v3927
    %v3998 = vpop.f32.mrb[0].mxu0
    %v3999 = vadd.f32 0.0, %v3998
    %v4000 = vpop.f32.mrb[0].mxu0
    %4001 = vmatprep.mubr.f32.mxu0 0.0
    %4002 = vmatmul.mubr.f32.gmra.mrb[0].mxu0 %v3930
    %v4003 = vpop.f32.mrb[0].mxu0
    %v4004 = vadd.f32 0.0, %v4003
    %v4005 = vpop.f32.mrb[0].mxu0
    %4006 = vdwg.mxu0
    %4007 = vrot.lane.b32.xlu0 %v2522, 104
    %v4008 = vpop.permute.xlu0 %4007
    %4009 = vrot.lane.b32.xlu0 %v2523, 104
    %v4010 = vpop.permute.xlu0 %4009
    %4011 = vrot.lane.b32.xlu0 %v2534, 72
    %v4012 = vpop.permute.xlu0 %4011
    %4013 = vrot.lane.b32.xlu0 %v2535, 72
    %v4014 = vpop.permute.xlu0 %4013
    %v4015 = vsel %vm256, %v4008, 0
    %v4017 = vsel %vm256, %v4010, 0
    %v4019 = vsel %vm256, %v4012, 0
    %v4021 = vsel %vm256, %v4014, 0
    %4023 = vmatprep.subr.mxu0 0.0
    %4024 = vmatpush1.xpose.msra.mxu0 %v4019
    %4025 = vmatprep.subr.mxu0 0.0
    %4026 = vmatpush1.xpose.msra.mxu0 %v4021
    %4027 = vmatprep.subr.mxu0 0.0
    %4028 = vmatpush1.xpose.msra.mxu0 0.0
    %4029 = vmatprep.subr.mxu0 0.0
    %4030 = vmatpush1.xpose.msra.mxu0 0.0
    %4031 = vmatprep.subr.mxu0 0.0
    %4032 = vmatpush1.xpose.msra.mxu0 0.0
    %4033 = vmatprep.subr.mxu0 0.0
    %4034 = vmatpush1.xpose.msra.mxu0 0.0
    %4035 = vmatprep.subr.mxu0 0.0
    %4036 = vmatpush1.xpose.msra.mxu0 0.0
    %4037 = vmatprep.subr.mxu0 0.0
    %4038 = vmatpush1.xpose.msra.mxu0 0.0
    %4039 = vmatprep.subr.mxu0 0.0
    %4040 = vmatpush1.xpose.msra.mxu0 0.0
    %4041 = vmatprep.subr.mxu0 0.0
    %4042 = vmatpush1.xpose.msra.mxu0 0.0
    %4043 = vmatprep.subr.mxu0 0.0
    %4044 = vmatpush1.xpose.msra.mxu0 0.0
    %4045 = vmatprep.subr.mxu0 0.0
    %4046 = vmatpush1.xpose.msra.mxu0 0.0
    %4047 = vmatprep.subr.mxu0 0.0
    %4048 = vmatpush1.xpose.msra.mxu0 0.0
    %4049 = vmatprep.subr.mxu0 0.0
    %4050 = vmatpush1.xpose.msra.mxu0 0.0
    %4051 = vmatprep.subr.mxu0 0.0
    %4052 = vmatpush1.xpose.msra.mxu0 0.0
    %4053 = vmatprep.subr.mxu0 0.0
    %4054 = vmatpush1.xpose.msra.mxu0 0.0
    %4055 = vmatprep.subr.mxu0 0.0
    %4056 = vmatpush1.xpose.msra.mxu0 0.0
    %4057 = vmatprep.subr.mxu0 0.0
    %4058 = vmatpush1.xpose.msra.mxu0 0.0
    %4059 = vmatprep.subr.mxu0 0.0
    %4060 = vmatpush1.xpose.msra.mxu0 0.0
    %4061 = vmatprep.subr.mxu0 0.0
    %4062 = vmatpush1.xpose.msra.mxu0 0.0
    %4063 = vmatprep.subr.mxu0 0.0
    %4064 = vmatpush1.xpose.msra.mxu0 0.0
    %4065 = vmatprep.subr.mxu0 0.0
    %4066 = vmatpush1.xpose.msra.mxu0 0.0
    %4067 = vmatprep.subr.mxu0 0.0
    %4068 = vmatpush1.xpose.msra.mxu0 0.0
    %4069 = vmatprep.subr.mxu0 0.0
    %4070 = vmatpush1.xpose.msra.mxu0 0.0
    %4071 = vmatprep.subr.mxu0 0.0
    %4072 = vmatpush1.xpose.msra.mxu0 0.0
    %4073 = vmatprep.subr.mxu0 0.0
    %4074 = vmatpush1.xpose.msra.mxu0 0.0
    %4075 = vmatprep.subr.mxu0 0.0
    %4076 = vmatpush1.xpose.msra.mxu0 0.0
    %4077 = vmatprep.subr.mxu0 0.0
    %4078 = vmatpush1.xpose.msra.mxu0 0.0
    %4079 = vmatprep.subr.mxu0 0.0
    %4080 = vmatpush1.xpose.msra.mxu0 0.0
    %4081 = vmatprep.subr.mxu0 0.0
    %4082 = vmatpush1.xpose.msra.mxu0 0.0
    %4083 = vmatprep.subr.mxu0 0.0
    %4084 = vmatpush1.xpose.msra.mxu0 0.0
    %4085 = vmatprep.subr.mxu0 0.0
    %4086 = vmatpush1.xpose.msra.mxu0 0.0
    %4087 = vmatprep.mubr.f32.mxu0 0.0
    %4088 = vmatmul.mubr.f32.gmra.mrb[0].mxu0 %v4015
    %v4089 = vpop.f32.mrb[0].mxu0
    %v4090 = vadd.f32 0.0, %v4089
    %v4091 = vpop.f32.mrb[0].mxu0
    %4092 = vmatprep.mubr.f32.mxu0 0.0
    %4093 = vmatmul.mubr.f32.gmra.mrb[0].mxu0 %v4017
    %v4094 = vpop.f32.mrb[0].mxu0
    %v4095 = vadd.f32 0.0, %v4094
    %v4096 = vpop.f32.mrb[0].mxu0
    %4097 = vdwg.mxu0
    %v4098 = vsel %vm342, %v4090, -inf
    %4099 = vmax.xlane.f32.xlu0 %v4098
    %v4100 = vpop.xlane.xlu0 %4099
    %v4101 = vsel %vm342, %v4095, -inf
    %4102 = vmax.xlane.f32.xlu0 %v4101
    %v4103 = vpop.xlane.xlu0 %4102
    %v4104 = vsub.f32 %v4090, %v4100
    %v4105 = vsub.f32 %v4095, %v4103
    %v4106 = vmul.f32 %v4104, 1.442695
    %v4107 = vpow.pop %v4106
    %v4108 = vmul.f32 %v4105, 1.442695
    %v4109 = vpow.pop %v4108
    %v4110 = vsel %vm342, %v4107, 0.0
    %4111 = vadd.xlane.f32.xlu0 %v4110
    %v4112 = vpop.xlane.xlu0 %4111
    %v4113 = vsel %vm342, %v4109, 0.0
    %4114 = vadd.xlane.f32.xlu0 %v4113
    %v4115 = vpop.xlane.xlu0 %4114
    %v4116 = vrcp.pop %v4112
    %v4117 = vrcp.pop %v4115
    %v4118 = vmul.f32 %v4107, %v4116
    %v4119 = vmul.f32 %v4109, %v4117
    %4120 = vrot.lane.b32.xlu0 %v2571, 40
    %v4121 = vpop.permute.xlu0 %4120
    %4122 = vrot.lane.b32.xlu0 %v2572, 40
    %v4123 = vpop.permute.xlu0 %4122
    %v4127 = vsel %vm342, %v4118, 0
    %v4130 = vsel %vm342, %v4119, 0
    %4132 = vmatprep.subr.mxu0 0.0
    %4133 = vmatpush1.msra.mxu0 %v4121
    %4134 = vmatprep.subr.mxu0 0.0
    %4135 = vmatpush1.msra.mxu0 %v4123
    %4136 = vmatprep.subr.mxu0 0.0
    %4137 = vmatpush1.msra.mxu0 0.0
    %4138 = vmatprep.subr.mxu0 0.0
    %4139 = vmatpush1.msra.mxu0 0.0
    %4140 = vmatprep.subr.mxu0 0.0
    %4141 = vmatpush1.msra.mxu0 0.0
    %4142 = vmatprep.subr.mxu0 0.0
    %4143 = vmatpush1.msra.mxu0 0.0
    %4144 = vmatprep.subr.mxu0 0.0
    %4145 = vmatpush1.msra.mxu0 0.0
    %4146 = vmatprep.subr.mxu0 0.0
    %4147 = vmatpush1.msra.mxu0 0.0
    %4148 = vmatprep.subr.mxu0 0.0
    %4149 = vmatpush1.msra.mxu0 0.0
    %4150 = vmatprep.subr.mxu0 0.0
    %4151 = vmatpush1.msra.mxu0 0.0
    %4152 = vmatprep.subr.mxu0 0.0
    %4153 = vmatpush1.msra.mxu0 0.0
    %4154 = vmatprep.subr.mxu0 0.0
    %4155 = vmatpush1.msra.mxu0 0.0
    %4156 = vmatprep.subr.mxu0 0.0
    %4157 = vmatpush1.msra.mxu0 0.0
    %4158 = vmatprep.subr.mxu0 0.0
    %4159 = vmatpush1.msra.mxu0 0.0
    %4160 = vmatprep.subr.mxu0 0.0
    %4161 = vmatpush1.msra.mxu0 0.0
    %4162 = vmatprep.subr.mxu0 0.0
    %4163 = vmatpush1.msra.mxu0 0.0
    %4164 = vmatprep.subr.mxu0 0.0
    %4165 = vmatpush1.msra.mxu0 0.0
    %4166 = vmatprep.subr.mxu0 0.0
    %4167 = vmatpush1.msra.mxu0 0.0
    %4168 = vmatprep.subr.mxu0 0.0
    %4169 = vmatpush1.msra.mxu0 0.0
    %4170 = vmatprep.subr.mxu0 0.0
    %4171 = vmatpush1.msra.mxu0 0.0
    %4172 = vmatprep.subr.mxu0 0.0
    %4173 = vmatpush1.msra.mxu0 0.0
    %4174 = vmatprep.subr.mxu0 0.0
    %4175 = vmatpush1.msra.mxu0 0.0
    %4176 = vmatprep.subr.mxu0 0.0
    %4177 = vmatpush1.msra.mxu0 0.0
    %4178 = vmatprep.subr.mxu0 0.0
    %4179 = vmatpush1.msra.mxu0 0.0
    %4180 = vmatprep.subr.mxu0 0.0
    %4181 = vmatpush1.msra.mxu0 0.0
    %4182 = vmatprep.subr.mxu0 0.0
    %4183 = vmatpush1.msra.mxu0 0.0
    %4184 = vmatprep.subr.mxu0 0.0
    %4185 = vmatpush1.msra.mxu0 0.0
    %4186 = vmatprep.subr.mxu0 0.0
    %4187 = vmatpush1.msra.mxu0 0.0
    %4188 = vmatprep.subr.mxu0 0.0
    %4189 = vmatpush1.msra.mxu0 0.0
    %4190 = vmatprep.subr.mxu0 0.0
    %4191 = vmatpush1.msra.mxu0 0.0
    %4192 = vmatprep.subr.mxu0 0.0
    %4193 = vmatpush1.msra.mxu0 0.0
    %4194 = vmatprep.subr.mxu0 0.0
    %4195 = vmatpush1.msra.mxu0 0.0
    %4196 = vmatprep.mubr.f32.mxu0 0.0
    %4197 = vmatmul.mubr.f32.gmra.mrb[0].mxu0 %v4127
    %v4198 = vpop.f32.mrb[0].mxu0
    %v4199 = vadd.f32 0.0, %v4198
    %v4200 = vpop.f32.mrb[0].mxu0
    %4201 = vmatprep.mubr.f32.mxu0 0.0
    %4202 = vmatmul.mubr.f32.gmra.mrb[0].mxu0 %v4130
    %v4203 = vpop.f32.mrb[0].mxu0
    %v4204 = vadd.f32 0.0, %v4203
    %v4205 = vpop.f32.mrb[0].mxu0
    %4206 = vdwg.mxu0
    %4209 = vrot.lane.b32.xlu0 %v3799, 8
    %v4210 = vpop.permute.xlu0 %4209
    %4211 = vrot.lane.b32.xlu0 %v3804, 8
    %v4212 = vpop.permute.xlu0 %4211
    %4217 = vrot.lane.b32.xlu0 %v3999, 16
    %v4218 = vpop.permute.xlu0 %4217
    %4219 = vrot.lane.b32.xlu0 %v4004, 16
    %v4220 = vpop.permute.xlu0 %4219
    %4225 = vrot.lane.b32.xlu0 %v4199, 24
    %v4226 = vpop.permute.xlu0 %4225
    %4227 = vrot.lane.b32.xlu0 %v4204, 24
    %v4228 = vpop.permute.xlu0 %4227
    %v4231 = vsel %vm256, %v3599, %v4210
    %v4232 = vsel %vm256, %v3604, %v4212
    %v4233 = vsel %vm342, %v4231, %v4218
    %v4234 = vsel %vm342, %v4232, %v4220
    %v4235 = vsel %vm1082, %v4233, %v4226
    %v4236 = vsel %vm1082, %v4234, %v4228
    %v4237 = vlaneseq
    %v4238 = vshrl.u32 %v4237, 7
    %v4239 = vsub.s32 0, %v4238
    %v4240 = vrot.slane %v2404, %v4239
    %4245 = vrot.lane.b32.xlu0 %v2411, 32
    %v4246 = vpop.permute.xlu0 %4245
    %4247 = vrot.lane.b32.xlu0 %v2412, 32
    %v4248 = vpop.permute.xlu0 %4247
    %4249 = vrot.lane.b32.xlu0 %v2413, 32
    %v4250 = vpop.permute.xlu0 %4249
    %4251 = vrot.lane.b32.xlu0 %v2414, 32
    %v4252 = vpop.permute.xlu0 %4251
    %v4258 = vsel %vm96, %v3403, 0
    %v4261 = vsel %vm96, %v3404, 0
    %v4264 = vsel %vm96, %v4235, 0
    %v4267 = vsel %vm96, %v4236, 0
    %4269 = vmatprep.subr.mxu0 0.0
    %4270 = vmatpush1.msra.mxu0 %v4246
    %4271 = vmatprep.subr.mxu0 0.0
    %4272 = vmatpush1.msra.mxu0 %v4248
    %4273 = vmatprep.subr.mxu0 0.0
    %4274 = vmatpush1.msra.mxu0 %v4250
    %4275 = vmatprep.subr.mxu0 0.0
    %4276 = vmatpush1.msra.mxu0 %v4252
    %4277 = vmatprep.subr.mxu0 0.0
    %4278 = vmatpush1.msra.mxu0 0.0
    %4279 = vmatprep.subr.mxu0 0.0
    %4280 = vmatpush1.msra.mxu0 0.0
    %4281 = vmatprep.subr.mxu0 0.0
    %4282 = vmatpush1.msra.mxu0 0.0
    %4283 = vmatprep.subr.mxu0 0.0
    %4284 = vmatpush1.msra.mxu0 0.0
    %4285 = vmatprep.subr.mxu0 0.0
    %4286 = vmatpush1.msra.mxu0 0.0
    %4287 = vmatprep.subr.mxu0 0.0
    %4288 = vmatpush1.msra.mxu0 0.0
    %4289 = vmatprep.subr.mxu0 0.0
    %4290 = vmatpush1.msra.mxu0 0.0
    %4291 = vmatprep.subr.mxu0 0.0
    %4292 = vmatpush1.msra.mxu0 0.0
    %4293 = vmatprep.subr.mxu0 0.0
    %4294 = vmatpush1.msra.mxu0 0.0
    %4295 = vmatprep.subr.mxu0 0.0
    %4296 = vmatpush1.msra.mxu0 0.0
    %4297 = vmatprep.subr.mxu0 0.0
    %4298 = vmatpush1.msra.mxu0 0.0
    %4299 = vmatprep.subr.mxu0 0.0
    %4300 = vmatpush1.msra.mxu0 0.0
    %4301 = vmatprep.subr.mxu0 0.0
    %4302 = vmatpush1.msra.mxu0 0.0
    %4303 = vmatprep.subr.mxu0 0.0
    %4304 = vmatpush1.msra.mxu0 0.0
    %4305 = vmatprep.subr.mxu0 0.0
    %4306 = vmatpush1.msra.mxu0 0.0
    %4307 = vmatprep.subr.mxu0 0.0
    %4308 = vmatpush1.msra.mxu0 0.0
    %4309 = vmatprep.subr.mxu0 0.0
    %4310 = vmatpush1.msra.mxu0 0.0
    %4311 = vmatprep.subr.mxu0 0.0
    %4312 = vmatpush1.msra.mxu0 0.0
    %4313 = vmatprep.subr.mxu0 0.0
    %4314 = vmatpush1.msra.mxu0 0.0
    %4315 = vmatprep.subr.mxu0 0.0
    %4316 = vmatpush1.msra.mxu0 0.0
    %4317 = vmatprep.subr.mxu0 0.0
    %4318 = vmatpush1.msra.mxu0 0.0
    %4319 = vmatprep.subr.mxu0 0.0
    %4320 = vmatpush1.msra.mxu0 0.0
    %4321 = vmatprep.subr.mxu0 0.0
    %4322 = vmatpush1.msra.mxu0 0.0
    %4323 = vmatprep.subr.mxu0 0.0
    %4324 = vmatpush1.msra.mxu0 0.0
    %4325 = vmatprep.subr.mxu0 0.0
    %4326 = vmatpush1.msra.mxu0 0.0
    %4327 = vmatprep.subr.mxu0 0.0
    %4328 = vmatpush1.msra.mxu0 0.0
    %4329 = vmatprep.subr.mxu0 0.0
    %4330 = vmatpush1.msra.mxu0 0.0
    %4331 = vmatprep.subr.mxu0 0.0
    %4332 = vmatpush1.msra.mxu0 0.0
    %4333 = vmatprep.mubr.f32.mxu0 0.0
    %4334 = vmatmul.mubr.f32.gmra.mrb[0].mxu0 %v4258
    %v4335 = vpop.f32.mrb[0].mxu0
    %v4336 = vadd.f32 %v4240, %v4335
    %v4337 = vpop.f32.mrb[0].mxu0
    %4338 = vmatprep.mubr.f32.mxu0 0.0
    %4339 = vmatmul.mubr.f32.gmra.mrb[0].mxu0 %v4261
    %v4340 = vpop.f32.mrb[0].mxu0
    %v4341 = vadd.f32 %v4240, %v4340
    %v4342 = vpop.f32.mrb[0].mxu0
    %4343 = vmatprep.mubr.f32.mxu0 0.0
    %4344 = vmatmul.mubr.f32.gmra.mrb[0].mxu0 %v4264
    %v4345 = vpop.f32.mrb[0].mxu0
    %v4346 = vadd.f32 %v4240, %v4345
    %v4347 = vpop.f32.mrb[0].mxu0
    %4348 = vmatprep.mubr.f32.mxu0 0.0
    %4349 = vmatmul.mubr.f32.gmra.mrb[0].mxu0 %v4267
    %v4350 = vpop.f32.mrb[0].mxu0
    %v4351 = vadd.f32 %v4240, %v4350
    %v4352 = vpop.f32.mrb[0].mxu0
    %4353 = vdwg.mxu0
    %v4354 = vadd.f32 %v2397, %v4336
    %v4355 = vadd.f32 %v2398, %v4341
    %v4356 = vadd.f32 %v2399, %v4346
    %v4357 = vadd.f32 %v2400, %v4351
    %v4358 = vsel %vm96, %v4354, 0.0
    %4359 = vadd.xlane.f32.xlu0 %v4358
    %v4360 = vpop.xlane.xlu0 %4359
    %v4361 = vsel %vm96, %v4355, 0.0
    %4362 = vadd.xlane.f32.xlu0 %v4361
    %v4363 = vpop.xlane.xlu0 %4362
    %v4364 = vsel %vm96, %v4356, 0.0
    %4365 = vadd.xlane.f32.xlu0 %v4364
    %v4366 = vpop.xlane.xlu0 %4365
    %v4367 = vsel %vm96, %v4357, 0.0
    %4368 = vadd.xlane.f32.xlu0 %v4367
    %v4369 = vpop.xlane.xlu0 %4368
    %v4370 = vmul.f32 %v4360, %v2050
    %v4371 = vmul.f32 %v4363, %v2050
    %v4372 = vmul.f32 %v4366, %v2050
    %v4373 = vmul.f32 %v4369, %v2050
    %v4374 = vsub.f32 %v4354, %v4370
    %v4375 = vsub.f32 %v4355, %v4371
    %v4376 = vsub.f32 %v4356, %v4372
    %v4377 = vsub.f32 %v4357, %v4373
    %v4378 = vmul.f32 %v4374, %v4374
    %v4379 = vmul.f32 %v4375, %v4375
    %v4380 = vmul.f32 %v4376, %v4376
    %v4381 = vmul.f32 %v4377, %v4377
    %v4382 = vsel %vm96, %v4378, 0.0
    %4383 = vadd.xlane.f32.xlu0 %v4382
    %v4384 = vpop.xlane.xlu0 %4383
    %v4385 = vsel %vm96, %v4379, 0.0
    %4386 = vadd.xlane.f32.xlu0 %v4385
    %v4387 = vpop.xlane.xlu0 %4386
    %v4388 = vsel %vm96, %v4380, 0.0
    %4389 = vadd.xlane.f32.xlu0 %v4388
    %v4390 = vpop.xlane.xlu0 %4389
    %v4391 = vsel %vm96, %v4381, 0.0
    %4392 = vadd.xlane.f32.xlu0 %v4391
    %v4393 = vpop.xlane.xlu0 %4392
    %v4394 = vmul.f32 %v4384, %v2050
    %v4395 = vmul.f32 %v4387, %v2050
    %v4396 = vmul.f32 %v4390, %v2050
    %v4397 = vmul.f32 %v4393, %v2050
    %v4398 = vadd.f32 %v4394, 1e-05
    %v4399 = vadd.f32 %v4395, 1e-05
    %v4400 = vadd.f32 %v4396, 1e-05
    %v4401 = vadd.f32 %v4397, 1e-05
    %v4402 = vrsqrt.pop %v4398
    %v4403 = vrsqrt.pop %v4399
    %v4404 = vrsqrt.pop %v4400
    %v4405 = vrsqrt.pop %v4401
    %v4406 = vmul.f32 %v4374, %v4402
    %v4407 = vmul.f32 %v4375, %v4403
    %v4408 = vmul.f32 %v4376, %v4404
    %v4409 = vmul.f32 %v4377, %v4405
    %v4410 = vlaneseq
    %v4411 = vshrl.u32 %v4410, 7
    %v4412 = vsub.s32 0, %v4411
    %v4413 = vrot.slane %v2405, %v4412
    %v4414 = vmul.f32 %v4406, %v4413
    %v4415 = vmul.f32 %v4407, %v4413
    %v4416 = vmul.f32 %v4408, %v4413
    %v4417 = vmul.f32 %v4409, %v4413
    %v4418 = vlaneseq
    %v4419 = vshrl.u32 %v4418, 7
    %v4420 = vsub.s32 0, %v4419
    %v4421 = vrot.slane %v2406, %v4420
    %v4422 = vadd.f32 %v4414, %v4421
    %v4423 = vadd.f32 %v4415, %v4421
    %v4424 = vadd.f32 %v4416, %v4421
    %v4425 = vadd.f32 %v4417, %v4421
    %s4426 = scalar_lea.vmem %s4, 32
    %v4427 = vld [vmem:[%s4426] sm:$0xff]
    %v4428 = vld [vmem:[%s4426 + $0x8] sm:$0xff]
    %v4429 = vld [vmem:[%s4426 + $0x10] sm:$0xff]
    %v4430 = vld [vmem:[%s4426 + $0x18] sm:$0xff]
    %s4431 = scalar_lea.vmem %s7, 1
    %v4432 = vld [vmem:[%s4431] sm:$0x1]
    %v4434 = vlaneseq
    %v4435 = vshrl.u32 %v4434, 7
    %v4436 = vsub.s32 0, %v4435
    %v4437 = vrot.slane %v4432, %v4436
    %v4440 = vsel %vm96, %v4422, 0
    %v4443 = vsel %vm96, %v4423, 0
    %v4446 = vsel %vm96, %v4424, 0
    %v4449 = vsel %vm96, %v4425, 0
    %4451 = vmatprep.subr.mxu0 0.0
    %4452 = vmatpush1.msra.mxu0 %v4427
    %4453 = vmatprep.subr.mxu0 0.0
    %4454 = vmatpush1.msra.mxu0 %v4428
    %4455 = vmatprep.subr.mxu0 0.0
    %4456 = vmatpush1.msra.mxu0 %v4429
    %4457 = vmatprep.subr.mxu0 0.0
    %4458 = vmatpush1.msra.mxu0 %v4430
    %4459 = vmatprep.subr.mxu0 0.0
    %4460 = vmatpush1.msra.mxu0 0.0
    %4461 = vmatprep.subr.mxu0 0.0
    %4462 = vmatpush1.msra.mxu0 0.0
    %4463 = vmatprep.subr.mxu0 0.0
    %4464 = vmatpush1.msra.mxu0 0.0
    %4465 = vmatprep.subr.mxu0 0.0
    %4466 = vmatpush1.msra.mxu0 0.0
    %4467 = vmatprep.subr.mxu0 0.0
    %4468 = vmatpush1.msra.mxu0 0.0
    %4469 = vmatprep.subr.mxu0 0.0
    %4470 = vmatpush1.msra.mxu0 0.0
    %4471 = vmatprep.subr.mxu0 0.0
    %4472 = vmatpush1.msra.mxu0 0.0
    %4473 = vmatprep.subr.mxu0 0.0
    %4474 = vmatpush1.msra.mxu0 0.0
    %4475 = vmatprep.subr.mxu0 0.0
    %4476 = vmatpush1.msra.mxu0 0.0
    %4477 = vmatprep.subr.mxu0 0.0
    %4478 = vmatpush1.msra.mxu0 0.0
    %4479 = vmatprep.subr.mxu0 0.0
    %4480 = vmatpush1.msra.mxu0 0.0
    %4481 = vmatprep.subr.mxu0 0.0
    %4482 = vmatpush1.msra.mxu0 0.0
    %4483 = vmatprep.subr.mxu0 0.0
    %4484 = vmatpush1.msra.mxu0 0.0
    %4485 = vmatprep.subr.mxu0 0.0
    %4486 = vmatpush1.msra.mxu0 0.0
    %4487 = vmatprep.subr.mxu0 0.0
    %4488 = vmatpush1.msra.mxu0 0.0
    %4489 = vmatprep.subr.mxu0 0.0
    %4490 = vmatpush1.msra.mxu0 0.0
    %4491 = vmatprep.subr.mxu0 0.0
    %4492 = vmatpush1.msra.mxu0 0.0
    %4493 = vmatprep.subr.mxu0 0.0
    %4494 = vmatpush1.msra.mxu0 0.0
    %4495 = vmatprep.subr.mxu0 0.0
    %4496 = vmatpush1.msra.mxu0 0.0
    %4497 = vmatprep.subr.mxu0 0.0
    %4498 = vmatpush1.msra.mxu0 0.0
    %4499 = vmatprep.subr.mxu0 0.0
    %4500 = vmatpush1.msra.mxu0 0.0
    %4501 = vmatprep.subr.mxu0 0.0
    %4502 = vmatpush1.msra.mxu0 0.0
    %4503 = vmatprep.subr.mxu0 0.0
    %4504 = vmatpush1.msra.mxu0 0.0
    %4505 = vmatprep.subr.mxu0 0.0
    %4506 = vmatpush1.msra.mxu0 0.0
    %4507 = vmatprep.subr.mxu0 0.0
    %4508 = vmatpush1.msra.mxu0 0.0
    %4509 = vmatprep.subr.mxu0 0.0
    %4510 = vmatpush1.msra.mxu0 0.0
    %4511 = vmatprep.subr.mxu0 0.0
    %4512 = vmatpush1.msra.mxu0 0.0
    %4513 = vmatprep.subr.mxu0 0.0
    %4514 = vmatpush1.msra.mxu0 0.0
    %4515 = vmatprep.mubr.f32.mxu0 0.0
    %4516 = vmatmul.mubr.f32.gmra.mrb[0].mxu0 %v4440
    %v4517 = vpop.f32.mrb[0].mxu0
    %v4518 = vadd.f32 %v4437, %v4517
    %v4519 = vpop.f32.mrb[0].mxu0
    %4520 = vmatprep.mubr.f32.mxu0 0.0
    %4521 = vmatmul.mubr.f32.gmra.mrb[0].mxu0 %v4443
    %v4522 = vpop.f32.mrb[0].mxu0
    %v4523 = vadd.f32 %v4437, %v4522
    %v4524 = vpop.f32.mrb[0].mxu0
    %4525 = vmatprep.mubr.f32.mxu0 0.0
    %4526 = vmatmul.mubr.f32.gmra.mrb[0].mxu0 %v4446
    %v4527 = vpop.f32.mrb[0].mxu0
    %v4528 = vadd.f32 %v4437, %v4527
    %v4529 = vpop.f32.mrb[0].mxu0
    %4530 = vmatprep.mubr.f32.mxu0 0.0
    %4531 = vmatmul.mubr.f32.gmra.mrb[0].mxu0 %v4449
    %v4532 = vpop.f32.mrb[0].mxu0
    %v4533 = vadd.f32 %v4437, %v4532
    %v4534 = vpop.f32.mrb[0].mxu0
    %4535 = vdwg.mxu0
    %v4536 = vmax.f32 %v4518, 0.0
    %v4537 = vmax.f32 %v4523, 0.0
    %v4538 = vmax.f32 %v4528, 0.0
    %v4539 = vmax.f32 %v4533, 0.0
    %s4540 = scalar_lea.vmem %s5, 64
    %v4541 = vld [vmem:[%s4540] sm:$0xff]
    %v4542 = vld [vmem:[%s4540 + $0x8] sm:$0xff]
    %v4543 = vld [vmem:[%s4540 + $0x10] sm:$0xff]
    %v4544 = vld [vmem:[%s4540 + $0x18] sm:$0xff]
    %v4545 = vld [vmem:[%s4540 + $0x20] sm:$0xff]
    %v4546 = vld [vmem:[%s4540 + $0x28] sm:$0xff]
    %v4547 = vld [vmem:[%s4540 + $0x30] sm:$0xff]
    %v4548 = vld [vmem:[%s4540 + $0x38] sm:$0xff]
    %v4549 = vlaneseq
    %v4550 = vshrl.u32 %v4549, 7
    %v4551 = vsub.s32 0, %v4550
    %v4552 = vrot.slane %v2407, %v4551
    %v4554 = vsel %vm2231, %v4536, 0
    %v4557 = vsel %vm2231, %v4537, 0
    %v4560 = vsel %vm2231, %v4538, 0
    %v4563 = vsel %vm2231, %v4539, 0
    %4565 = vmatprep.subr.mxu0 0.0
    %4566 = vmatpush1.msra.mxu0 %v4541
    %4567 = vmatprep.subr.mxu0 0.0
    %4568 = vmatpush1.msra.mxu0 %v4542
    %4569 = vmatprep.subr.mxu0 0.0
    %4570 = vmatpush1.msra.mxu0 %v4543
    %4571 = vmatprep.subr.mxu0 0.0
    %4572 = vmatpush1.msra.mxu0 %v4544
    %4573 = vmatprep.subr.mxu0 0.0
    %4574 = vmatpush1.msra.mxu0 %v4545
    %4575 = vmatprep.subr.mxu0 0.0
    %4576 = vmatpush1.msra.mxu0 %v4546
    %4577 = vmatprep.subr.mxu0 0.0
    %4578 = vmatpush1.msra.mxu0 %v4547
    %4579 = vmatprep.subr.mxu0 0.0
    %4580 = vmatpush1.msra.mxu0 %v4548
    %4581 = vmatprep.subr.mxu0 0.0
    %4582 = vmatpush1.msra.mxu0 0.0
    %4583 = vmatprep.subr.mxu0 0.0
    %4584 = vmatpush1.msra.mxu0 0.0
    %4585 = vmatprep.subr.mxu0 0.0
    %4586 = vmatpush1.msra.mxu0 0.0
    %4587 = vmatprep.subr.mxu0 0.0
    %4588 = vmatpush1.msra.mxu0 0.0
    %4589 = vmatprep.subr.mxu0 0.0
    %4590 = vmatpush1.msra.mxu0 0.0
    %4591 = vmatprep.subr.mxu0 0.0
    %4592 = vmatpush1.msra.mxu0 0.0
    %4593 = vmatprep.subr.mxu0 0.0
    %4594 = vmatpush1.msra.mxu0 0.0
    %4595 = vmatprep.subr.mxu0 0.0
    %4596 = vmatpush1.msra.mxu0 0.0
    %4597 = vmatprep.subr.mxu0 0.0
    %4598 = vmatpush1.msra.mxu0 0.0
    %4599 = vmatprep.subr.mxu0 0.0
    %4600 = vmatpush1.msra.mxu0 0.0
    %4601 = vmatprep.subr.mxu0 0.0
    %4602 = vmatpush1.msra.mxu0 0.0
    %4603 = vmatprep.subr.mxu0 0.0
    %4604 = vmatpush1.msra.mxu0 0.0
    %4605 = vmatprep.subr.mxu0 0.0
    %4606 = vmatpush1.msra.mxu0 0.0
    %4607 = vmatprep.subr.mxu0 0.0
    %4608 = vmatpush1.msra.mxu0 0.0
    %4609 = vmatprep.subr.mxu0 0.0
    %4610 = vmatpush1.msra.mxu0 0.0
    %4611 = vmatprep.subr.mxu0 0.0
    %4612 = vmatpush1.msra.mxu0 0.0
    %4613 = vmatprep.subr.mxu0 0.0
    %4614 = vmatpush1.msra.mxu0 0.0
    %4615 = vmatprep.subr.mxu0 0.0
    %4616 = vmatpush1.msra.mxu0 0.0
    %4617 = vmatprep.subr.mxu0 0.0
    %4618 = vmatpush1.msra.mxu0 0.0
    %4619 = vmatprep.subr.mxu0 0.0
    %4620 = vmatpush1.msra.mxu0 0.0
    %4621 = vmatprep.subr.mxu0 0.0
    %4622 = vmatpush1.msra.mxu0 0.0
    %4623 = vmatprep.subr.mxu0 0.0
    %4624 = vmatpush1.msra.mxu0 0.0
    %4625 = vmatprep.subr.mxu0 0.0
    %4626 = vmatpush1.msra.mxu0 0.0
    %4627 = vmatprep.subr.mxu0 0.0
    %4628 = vmatpush1.msra.mxu0 0.0
    %4629 = vmatprep.mubr.f32.mxu0 0.0
    %4630 = vmatmul.mubr.f32.gmra.mrb[0].mxu0 %v4554
    %v4631 = vpop.f32.mrb[0].mxu0
    %v4632 = vadd.f32 %v4552, %v4631
    %v4633 = vpop.f32.mrb[0].mxu0
    %4634 = vmatprep.mubr.f32.mxu0 0.0
    %4635 = vmatmul.mubr.f32.gmra.mrb[0].mxu0 %v4557
    %v4636 = vpop.f32.mrb[0].mxu0
    %v4637 = vadd.f32 %v4552, %v4636
    %v4638 = vpop.f32.mrb[0].mxu0
    %4639 = vmatprep.mubr.f32.mxu0 0.0
    %4640 = vmatmul.mubr.f32.gmra.mrb[0].mxu0 %v4560
    %v4641 = vpop.f32.mrb[0].mxu0
    %v4642 = vadd.f32 %v4552, %v4641
    %v4643 = vpop.f32.mrb[0].mxu0
    %4644 = vmatprep.mubr.f32.mxu0 0.0
    %4645 = vmatmul.mubr.f32.gmra.mrb[0].mxu0 %v4563
    %v4646 = vpop.f32.mrb[0].mxu0
    %v4647 = vadd.f32 %v4552, %v4646
    %v4648 = vpop.f32.mrb[0].mxu0
    %4649 = vdwg.mxu0
    %v4650 = vadd.f32 %v4422, %v4632
    %v4651 = vadd.f32 %v4423, %v4637
    %v4652 = vadd.f32 %v4424, %v4642
    %v4653 = vadd.f32 %v4425, %v4647
    %v4654 = vsel %vm96, %v4650, 0.0
    %4655 = vadd.xlane.f32.xlu0 %v4654
    %v4656 = vpop.xlane.xlu0 %4655
    %v4657 = vsel %vm96, %v4651, 0.0
    %4658 = vadd.xlane.f32.xlu0 %v4657
    %v4659 = vpop.xlane.xlu0 %4658
    %v4660 = vsel %vm96, %v4652, 0.0
    %4661 = vadd.xlane.f32.xlu0 %v4660
    %v4662 = vpop.xlane.xlu0 %4661
    %v4663 = vsel %vm96, %v4653, 0.0
    %4664 = vadd.xlane.f32.xlu0 %v4663
    %v4665 = vpop.xlane.xlu0 %4664
    %v4666 = vmul.f32 %v4656, %v2050
    %v4667 = vmul.f32 %v4659, %v2050
    %v4668 = vmul.f32 %v4662, %v2050
    %v4669 = vmul.f32 %v4665, %v2050
    %v4670 = vsub.f32 %v4650, %v4666
    %v4671 = vsub.f32 %v4651, %v4667
    %v4672 = vsub.f32 %v4652, %v4668
    %v4673 = vsub.f32 %v4653, %v4669
    %v4674 = vmul.f32 %v4670, %v4670
    %v4675 = vmul.f32 %v4671, %v4671
    %v4676 = vmul.f32 %v4672, %v4672
    %v4677 = vmul.f32 %v4673, %v4673
    %v4678 = vsel %vm96, %v4674, 0.0
    %4679 = vadd.xlane.f32.xlu0 %v4678
    %v4680 = vpop.xlane.xlu0 %4679
    %v4681 = vsel %vm96, %v4675, 0.0
    %4682 = vadd.xlane.f32.xlu0 %v4681
    %v4683 = vpop.xlane.xlu0 %4682
    %v4684 = vsel %vm96, %v4676, 0.0
    %4685 = vadd.xlane.f32.xlu0 %v4684
    %v4686 = vpop.xlane.xlu0 %4685
    %v4687 = vsel %vm96, %v4677, 0.0
    %4688 = vadd.xlane.f32.xlu0 %v4687
    %v4689 = vpop.xlane.xlu0 %4688
    %v4690 = vmul.f32 %v4680, %v2050
    %v4691 = vmul.f32 %v4683, %v2050
    %v4692 = vmul.f32 %v4686, %v2050
    %v4693 = vmul.f32 %v4689, %v2050
    %v4694 = vadd.f32 %v4690, 1e-05
    %v4695 = vadd.f32 %v4691, 1e-05
    %v4696 = vadd.f32 %v4692, 1e-05
    %v4697 = vadd.f32 %v4693, 1e-05
    %v4698 = vrsqrt.pop %v4694
    %v4699 = vrsqrt.pop %v4695
    %v4700 = vrsqrt.pop %v4696
    %v4701 = vrsqrt.pop %v4697
    %v4702 = vmul.f32 %v4670, %v4698
    %v4703 = vmul.f32 %v4671, %v4699
    %v4704 = vmul.f32 %v4672, %v4700
    %v4705 = vmul.f32 %v4673, %v4701
    %v4706 = vlaneseq
    %v4707 = vshrl.u32 %v4706, 7
    %v4708 = vsub.s32 0, %v4707
    %v4709 = vrot.slane %v2408, %v4708
    %v4710 = vmul.f32 %v4702, %v4709
    %v4711 = vmul.f32 %v4703, %v4709
    %v4712 = vmul.f32 %v4704, %v4709
    %v4713 = vmul.f32 %v4705, %v4709
    %v4714 = vlaneseq
    %v4715 = vshrl.u32 %v4714, 7
    %v4716 = vsub.s32 0, %v4715
    %v4717 = vrot.slane %v2409, %v4716
    %v4718 = vadd.f32 %v4710, %v4717
    %v4719 = vadd.f32 %v4711, %v4717
    %v4720 = vadd.f32 %v4712, %v4717
    %v4721 = vadd.f32 %v4713, %v4717
    %v4722 = vld [vmem:[#allocation7 + $0x12] sm:$0x1]
    %v4723 = vld [vmem:[#allocation7 + $0x13] sm:$0x1]
    %v4724 = vsel %vm96, %v4718, 0.0
    %4725 = vadd.xlane.f32.xlu0 %v4724
    %v4726 = vpop.xlane.xlu0 %4725
    %v4727 = vsel %vm96, %v4719, 0.0
    %4728 = vadd.xlane.f32.xlu0 %v4727
    %v4729 = vpop.xlane.xlu0 %4728
    %v4730 = vsel %vm96, %v4720, 0.0
    %4731 = vadd.xlane.f32.xlu0 %v4730
    %v4732 = vpop.xlane.xlu0 %4731
    %v4733 = vsel %vm96, %v4721, 0.0
    %4734 = vadd.xlane.f32.xlu0 %v4733
    %v4735 = vpop.xlane.xlu0 %4734
    %v4736 = vmul.f32 %v4726, %v2050
    %v4737 = vmul.f32 %v4729, %v2050
    %v4738 = vmul.f32 %v4732, %v2050
    %v4739 = vmul.f32 %v4735, %v2050
    %v4740 = vsub.f32 %v4718, %v4736
    %v4741 = vsub.f32 %v4719, %v4737
    %v4742 = vsub.f32 %v4720, %v4738
    %v4743 = vsub.f32 %v4721, %v4739
    %v4744 = vmul.f32 %v4740, %v4740
    %v4745 = vmul.f32 %v4741, %v4741
    %v4746 = vmul.f32 %v4742, %v4742
    %v4747 = vmul.f32 %v4743, %v4743
    %v4748 = vsel %vm96, %v4744, 0.0
    %4749 = vadd.xlane.f32.xlu0 %v4748
    %v4750 = vpop.xlane.xlu0 %4749
    %v4751 = vsel %vm96, %v4745, 0.0
    %4752 = vadd.xlane.f32.xlu0 %v4751
    %v4753 = vpop.xlane.xlu0 %4752
    %v4754 = vsel %vm96, %v4746, 0.0
    %4755 = vadd.xlane.f32.xlu0 %v4754
    %v4756 = vpop.xlane.xlu0 %4755
    %v4757 = vsel %vm96, %v4747, 0.0
    %4758 = vadd.xlane.f32.xlu0 %v4757
    %v4759 = vpop.xlane.xlu0 %4758
    %v4760 = vmul.f32 %v4750, %v2050
    %v4761 = vmul.f32 %v4753, %v2050
    %v4762 = vmul.f32 %v4756, %v2050
    %v4763 = vmul.f32 %v4759, %v2050
    %v4764 = vadd.f32 %v4760, 1e-05
    %v4765 = vadd.f32 %v4761, 1e-05
    %v4766 = vadd.f32 %v4762, 1e-05
    %v4767 = vadd.f32 %v4763, 1e-05
    %v4768 = vrsqrt.pop %v4764
    %v4769 = vrsqrt.pop %v4765
    %v4770 = vrsqrt.pop %v4766
    %v4771 = vrsqrt.pop %v4767
    %v4772 = vmul.f32 %v4740, %v4768
    %v4773 = vmul.f32 %v4741, %v4769
    %v4774 = vmul.f32 %v4742, %v4770
    %v4775 = vmul.f32 %v4743, %v4771
    %v4776 = vlaneseq
    %v4777 = vshrl.u32 %v4776, 7
    %v4778 = vsub.s32 0, %v4777
    %v4779 = vrot.slane %v4722, %v4778
    %v4780 = vmul.f32 %v4772, %v4779
    %v4781 = vmul.f32 %v4773, %v4779
    %v4782 = vmul.f32 %v4774, %v4779
    %v4783 = vmul.f32 %v4775, %v4779
    %v4784 = vlaneseq
    %v4785 = vshrl.u32 %v4784, 7
    %v4786 = vsub.s32 0, %v4785
    %v4787 = vrot.slane %v4723, %v4786
    %v4788 = vadd.f32 %v4780, %v4787
    %v4789 = vadd.f32 %v4781, %v4787
    %v4790 = vadd.f32 %v4782, %v4787
    %v4791 = vadd.f32 %v4783, %v4787
    %4792 = vst.msk [vmem:[#allocation8] sm:$0xff] %vm96, %v4788
    %4793 = vst.msk [vmem:[#allocation8 + $0x8] sm:$0xff] %vm96, %v4789
    %4794 = vst.msk [vmem:[#allocation8 + $0x10] sm:$0xff] %vm96, %v4790
    %4795 = vst.msk [vmem:[#allocation8 + $0x18] sm:$0xff] %vm96, %v4791
    // Predicated region
    $region46: #{tpu_custom_call.1} parent=1 // pred_check
      _
    $region47: #{tpu_custom_call.1} parent=1 // pred_check_branch
      %4797 = sbr.rel (0) target = $region49
    $region48: #{tpu_custom_call.1} parent=1 // pred_region
      %s4799 = ssub.s32 512, 512
      %4800 = vsyncadd [#allocation4], %s4799
      %s4801 = sshll.u32 [#allocation8], 4
      %s4802 = int_to_ptr.vmem [resolvable:$true] %s4801
      %4807 = dma.vmem_to_hbm [thread:$0]  %s4802, 512, %s8, [#allocation4], 128, 128, 8
    $region49: #{tpu_custom_call.1} parent=1 // pred_fallthru
      _
    // Predicated region
    $region50: #{tpu_custom_call.1} parent=1 // pred_check
      _
    $region51: #{tpu_custom_call.1} parent=1 // pred_check_branch
      %4809 = sbr.rel (0) target = $region53
    $region52: #{tpu_custom_call.1} parent=1 // pred_region
      %4810 = dma.done [#allocation4], 512
    $region53: #{tpu_custom_call.1} parent=1 // pred_fallthru
      _
    %4811 = vsyncpa [#allocation3], 1
    %4812 = vsyncpa [#allocation6], 1
    %4813 = vsyncpa [#allocation4], 1

</llo_original>
